<compile_context>
chip_gen: v6e
topology: v6e:2x2x1
jax: 0.10.0
libtpu: 0.0.40
codegen_flags: <defaults>
</compile_context>

<pallas_src>
import functools
import numpy as np

import jax
import jax.numpy as jnp
from jax import lax
from jax.experimental import pallas as pl
from jax.experimental.pallas import tpu as pltpu

# ---------------- small, module-consistent config ----------------
DIM = 32                      # C (embedding dim)
NUM_HEADS = 4
HEAD_DIM = DIM // NUM_HEADS
H = W = 8                     # input_resolution
WINDOW = 4                    # window_size
SHIFT = 2                     # shift_size (SW-MSA)
MLP_RATIO = 4.0
HIDDEN = int(DIM * MLP_RATIO)
BATCH = 2
N = WINDOW * WINDOW           # tokens per window
NW = (H // WINDOW) * (W // WINDOW)   # windows per image
TOTAL_WIN = BATCH * NW        # total windows
EPS = 1e-5                    # LayerNorm eps (PyTorch default)
SCALE = HEAD_DIM ** (-0.5)
NEG = -1e5                    # cross-window mask value (f32; exp underflows to 0)

# 1 => whole block in a single grid step (overhead-bound at this size, per review).
# 2 => split windows across two "parallel" grid steps (v7x megacore) once larger.
GRID_BLOCKS = 1
assert TOTAL_WIN % GRID_BLOCKS == 0
assert HIDDEN <= 128 and 3 * DIM <= 128   # packed small-param table fits (8, 128)


# ---------------- glue: window helpers / shift mask / rel-pos index ----------------
def window_partition(x, ws):
    B, Hh, Ww, C = x.shape
    x = x.reshape(B, Hh // ws, ws, Ww // ws, ws, C)
    return x.transpose(0, 1, 3, 2, 4, 5).reshape(-1, ws, ws, C)


def window_reverse(windows, ws, Hh, Ww):
    B = windows.shape[0] // (Hh * Ww // ws // ws)
    x = windows.reshape(B, Hh // ws, Ww // ws, ws, ws, -1)
    return x.transpose(0, 1, 3, 2, 4, 5).reshape(B, Hh, Ww, -1)


def calculate_mask(Hh, Ww, ws, ss):
    """Replicates SwinTransformerBlock.calculate_mask. Returns (nW, N, N)."""
    img_mask = np.zeros((1, Hh, Ww, 1), np.float32)
    h_slices = (slice(0, -ws), slice(-ws, -ss), slice(-ss, None))
    w_slices = (slice(0, -ws), slice(-ws, -ss), slice(-ss, None))
    cnt = 0
    for hsl in h_slices:
        for wsl in w_slices:
            img_mask[:, hsl, wsl, :] = cnt
            cnt += 1
    mw = img_mask.reshape(1, Hh // ws, ws, Ww // ws, ws, 1)
    mw = mw.transpose(0, 1, 3, 2, 4, 5).reshape(-1, ws * ws)
    am = mw[:, None, :] - mw[:, :, None]
    am = np.where(am != 0, -100.0, 0.0).astype(np.float32)
    return jnp.asarray(am)


def relative_position_index(ws):
    coords = np.stack(np.meshgrid(np.arange(ws), np.arange(ws), indexing="ij"))
    cf = coords.reshape(2, -1)                         # (2, N)
    rel = cf[:, :, None] - cf[:, None, :]              # (2, N, N)
    rel = rel.transpose(1, 2, 0).astype(np.int64)      # (N, N, 2)
    rel[:, :, 0] += ws - 1
    rel[:, :, 1] += ws - 1
    rel[:, :, 0] *= 2 * ws - 1
    return rel.sum(-1)                                 # (N, N)


def build_dense_biasmask(rel_bias, attn_mask):
    """Dense (GRID_BLOCKS*heads, Rb, Rb) additive term: rel-pos bias + shift mask on
    the within-window diagonal blocks, NEG on every cross-window block."""
    wpb = TOTAL_WIN // GRID_BLOCKS
    rb = wpb * N
    rel = np.asarray(rel_bias, np.float32)             # (heads, N, N)
    am = np.asarray(attn_mask, np.float32)             # (NW, N, N)
    bm = np.full((GRID_BLOCKS, NUM_HEADS, rb, rb), NEG, np.float32)
    for g in range(GRID_BLOCKS):
        for wloc in range(wpb):
            wglob = g * wpb + wloc
            r0 = wloc * N
            bm[g, :, r0:r0 + N, r0:r0 + N] = rel + am[wglob % NW][None]
    return jnp.asarray(bm.reshape(GRID_BLOCKS * NUM_HEADS, rb, rb))


# ---------------- fused Pallas kernel: whole Swin block (window order) ----------------
# Packed small-param table layout (rows of an (8, 128) f32 array):
#   0: norm1 gamma  1: norm1 beta  2: norm2 gamma  3: norm2 beta
#   4: proj bias    5: fc2 bias    6: fc1 bias     7: qkv bias (q-part pre-scaled)
def _swin_block_kernel(x_ref, bm_ref, pk_ref, wqkv_ref, wproj_ref, w1_ref, w2_ref,
                       o_ref, *, num_heads, head_dim, hidden):
    C = num_heads * head_dim
    x = x_ref[...]                                    # (R, C) f32 window-ordered tokens

    pk = pk_ref[...]                                  # (8, 128) packed small params
    g1 = pk[0:1, :C]
    b1 = pk[1:2, :C]
    g2 = pk[2:3, :C]
    b2 = pk[3:4, :C]
    bproj = pk[4:5, :C]
    b2m = pk[5:6, :C]
    b1m = pk[6:7, :hidden]
    bqkv = pk[7:8, :3 * C]

    # ---- LayerNorm1 (var = E[x^2] - mu^2: one elementwise pass, indep. reduces) ----
    mu = jnp.mean(x, axis=-1, keepdims=True)
    var = jnp.mean(x * x, axis=-1, keepdims=True) - mu * mu
    xn = (x - mu) * lax.rsqrt(var + EPS) * g1 + b1

    # ---- QKV projection (bf16 operands, f32 accumulation); qk scale folded into Q ----
    qkv = jnp.dot(xn.astype(jnp.bfloat16), wqkv_ref[...],
                  preferred_element_type=jnp.float32) + bqkv
    qb = qkv[:, 0:C].astype(jnp.bfloat16)
    kb = qkv[:, C:2 * C].astype(jnp.bfloat16)
    vb = qkv[:, 2 * C:3 * C].astype(jnp.bfloat16)

    # ---- dense block-diagonal attention: one (R, R) score matmul per head ----
    head_outs = []
    for h in range(num_heads):                        # static unroll (4 heads)
        sl = slice(h * head_dim, (h + 1) * head_dim)
        s = jnp.einsum("qd,kd->qk", qb[:, sl], kb[:, sl],
                       preferred_element_type=jnp.float32)          # (R, R)
        s = s + bm_ref[h]          # rel-pos bias + shift mask; NEG on cross-window
        s = s - jnp.max(s, axis=-1, keepdims=True)
        e = jnp.exp(s)
        p = e * pl.reciprocal(jnp.sum(e, axis=-1, keepdims=True), approx=True)
        head_outs.append(jnp.dot(p.astype(jnp.bfloat16), vb[:, sl],
                                 preferred_element_type=jnp.float32))  # (R, hd)

    # ---- single K=C output projection over the lane-concatenated head slab ----
    o_cat = jnp.concatenate(head_outs, axis=-1)                      # (R, C)
    attn_out = jnp.dot(o_cat.astype(jnp.bfloat16), wproj_ref[...],
                       preferred_element_type=jnp.float32) + bproj

    x1 = x + attn_out                                 # attention residual (per-token)

    # ---- LayerNorm2 + MLP + residual ----
    mu2 = jnp.mean(x1, axis=-1, keepdims=True)
    var2 = jnp.mean(x1 * x1, axis=-1, keepdims=True) - mu2 * mu2
    x1n = (x1 - mu2) * lax.rsqrt(var2 + EPS) * g2 + b2
    hmid = jnp.dot(x1n.astype(jnp.bfloat16), w1_ref[...],
                   preferred_element_type=jnp.float32) + b1m
    # tanh-form GELU (EUP tanh slot).
    # TODO(synk): nn.GELU default is the erf form; tanh approx deviates <~1e-3 abs.
    hmid = 0.5 * hmid * (1.0 + jnp.tanh(0.7978845608028654 *
                                        (hmid + 0.044715 * hmid * hmid * hmid)))
    y = jnp.dot(hmid.astype(jnp.bfloat16), w2_ref[...],
                preferred_element_type=jnp.float32) + b2m

    o_ref[...] = (x1 + y).astype(o_ref.dtype)


def fused_swin_block(xw_flat, biasmask, kp):
    """xw_flat: (TOTAL_WIN*N, C) window-ordered tokens.
    biasmask: (GRID_BLOCKS*heads, Rb, Rb) dense additive attention term."""
    wpb = TOTAL_WIN // GRID_BLOCKS
    rb = wpb * N
    kernel = functools.partial(_swin_block_kernel, num_heads=NUM_HEADS,
                               head_dim=HEAD_DIM, hidden=HIDDEN)

    def rep(shape):                                   # grid-invariant (replicated) operand
        return pl.BlockSpec(shape, lambda g, _n=len(shape): (0,) * _n)

    return pl.pallas_call(
        kernel,
        out_shape=jax.ShapeDtypeStruct(xw_flat.shape, xw_flat.dtype),
        grid=(GRID_BLOCKS,),
        in_specs=[
            pl.BlockSpec((rb, DIM), lambda g: (g, 0)),               # tokens
            pl.BlockSpec((NUM_HEADS, rb, rb), lambda g: (g, 0, 0)),  # dense bias+mask
            rep((8, 128)),                                           # packed small params
            rep((DIM, 3 * DIM)),                                     # qkv W (bf16, Q scaled)
            rep((DIM, DIM)),                                         # proj W (bf16)
            rep((DIM, HIDDEN)),                                      # fc1 W (bf16)
            rep((HIDDEN, DIM)),                                      # fc2 W (bf16)
        ],
        out_specs=pl.BlockSpec((rb, DIM), lambda g: (g, 0)),
        compiler_params=pltpu.CompilerParams(dimension_semantics=("parallel",)),
    )(xw_flat, biasmask, kp["packed"], kp["w_qkv"], kp["w_proj"], kp["w1"], kp["w2"])


# ---------------- full block forward (wrapper-side permutation glue only) ----------------
def swin_block_forward(x, kp, biasmask):
    B, L, C = x.shape
    xi = x.reshape(B, H, W, C)
    if SHIFT > 0:
        xi = jnp.roll(xi, shift=(-SHIFT, -SHIFT), axis=(1, 2))
    # TODO(synk): at real resolutions fold this roll + window-partition permutation
    # (and its inverse) into the kernel via index_map / scalar-prefetched row table;
    # negligible at this toy size per review.
    xw = window_partition(xi, WINDOW).reshape(-1, C)         # (B*nW*N, C) window order
    out = fused_swin_block(xw, biasmask, kp)                 # whole block, fused
    out = out.reshape(-1, WINDOW, WINDOW, C)
    xo = window_reverse(out, WINDOW, H, W)
    if SHIFT > 0:
        xo = jnp.roll(xo, shift=(SHIFT, SHIFT), axis=(1, 2))
    return xo.reshape(B, L, C)


# ---------------- pure-JAX reference (raw f32 params, erf GELU, exact softmax) ----------------
def reference_forward(x, p, attn_mask, rel_bias):
    B, L, C = x.shape

    def ln(z, g, b):
        mu = jnp.mean(z, -1, keepdims=True)
        var = jnp.mean((z - mu) ** 2, -1, keepdims=True)
        return (z - mu) / jnp.sqrt(var + EPS) * g + b

    shortcut = x
    xn = ln(x, p["g1"][0], p["b1"][0])
    xi = xn.reshape(B, H, W, C)
    if SHIFT > 0:
        xi = jnp.roll(xi, shift=(-SHIFT, -SHIFT), axis=(1, 2))
    xw = window_partition(xi, WINDOW).reshape(-1, N, C)
    qkv = xw @ p["w_qkv"] + p["b_qkv"][0]
    qkv = qkv.reshape(-1, N, 3, NUM_HEADS, HEAD_DIM).transpose(2, 0, 3, 1, 4)
    q, k, v = qkv[0] * SCALE, qkv[1], qkv[2]
    attn = jnp.einsum("bhnd,bhmd->bhnm", q, k)
    attn = attn + rel_bias[None]
    attn = attn + jnp.tile(attn_mask, (B, 1, 1))[:, None]
    attn = jax.nn.softmax(attn, axis=-1)
    o = jnp.einsum("bhnm,bhmd->bhnd", attn, v).transpose(0, 2, 1, 3).reshape(-1, N, C)
    o = o @ p["w_proj"] + p["b_proj"][0]
    o = o.reshape(-1, WINDOW, WINDOW, C)
    xi = window_reverse(o, WINDOW, H, W)
    if SHIFT > 0:
        xi = jnp.roll(xi, shift=(SHIFT, SHIFT), axis=(1, 2))
    x1 = shortcut + xi.reshape(B, L, C)
    h = ln(x1, p["g2"][0], p["b2n"][0]) @ p["w1"] + p["b1m"][0]
    h = 0.5 * h * (1.0 + lax.erf(h * 0.7071067811865476))     # nn.GELU (erf form)
    return x1 + h @ p["w2"] + p["b2m"][0]


# ---------------- params ----------------
def init_params(key):
    ks = jax.random.split(key, 8)
    nrm = lambda k, s: (0.02 * jax.random.normal(k, s)).astype(jnp.float32)
    return {
        "g1": jnp.ones((1, DIM), jnp.float32),
        "b1": jnp.zeros((1, DIM), jnp.float32),
        "w_qkv": nrm(ks[0], (DIM, 3 * DIM)),
        "b_qkv": nrm(ks[1], (1, 3 * DIM)),
        "w_proj": nrm(ks[2], (DIM, DIM)),
        "b_proj": nrm(ks[3], (1, DIM)),
        "g2": jnp.ones((1, DIM), jnp.float32),
        "b2n": jnp.zeros((1, DIM), jnp.float32),
        "w1": nrm(ks[4], (DIM, HIDDEN)),
        "b1m": nrm(ks[5], (1, HIDDEN)),
        "w2": nrm(ks[6], (HIDDEN, DIM)),
        "b2m": nrm(ks[7], (1, DIM)),
        "bias_table": nrm(jax.random.fold_in(key, 99),
                          ((2 * WINDOW - 1) * (2 * WINDOW - 1), NUM_HEADS)),
    }


def prepare_kernel_params(p):
    """Fold qk scale into Q weights/bias, cast weights to bf16, pack small params."""
    scale_row = jnp.concatenate([jnp.full((DIM,), SCALE, jnp.float32),
                                 jnp.ones((2 * DIM,), jnp.float32)])
    w_qkv_s = p["w_qkv"] * scale_row[None, :]
    b_qkv_s = p["b_qkv"][0] * scale_row

    packed = jnp.zeros((8, 128), jnp.float32)
    packed = packed.at[0, :DIM].set(p["g1"][0])
    packed = packed.at[1, :DIM].set(p["b1"][0])
    packed = packed.at[2, :DIM].set(p["g2"][0])
    packed = packed.at[3, :DIM].set(p["b2n"][0])
    packed = packed.at[4, :DIM].set(p["b_proj"][0])
    packed = packed.at[5, :DIM].set(p["b2m"][0])
    packed = packed.at[6, :HIDDEN].set(p["b1m"][0])
    packed = packed.at[7, :3 * DIM].set(b_qkv_s)

    return {
        "packed": packed,
        "w_qkv": w_qkv_s.astype(jnp.bfloat16),
        "w_proj": p["w_proj"].astype(jnp.bfloat16),
        "w1": p["w1"].astype(jnp.bfloat16),
        "w2": p["w2"].astype(jnp.bfloat16),
    }


if __name__ == "__main__":
    key = jax.random.PRNGKey(0)
    params = init_params(key)

    # relative position bias (heads, N, N)
    rpi = relative_position_index(WINDOW)
    rel_bias = params["bias_table"][rpi.reshape(-1)].reshape(N, N, NUM_HEADS)
    rel_bias = jnp.transpose(rel_bias, (2, 0, 1)).astype(jnp.float32)

    # shift mask (nW, N, N); zeros if no shift
    if SHIFT > 0:
        attn_mask = calculate_mask(H, W, WINDOW, SHIFT)
    else:
        attn_mask = jnp.zeros((NW, N, N), jnp.float32)

    # dense block-diagonal bias+mask (GRID_BLOCKS*heads, Rb, Rb)
    biasmask = build_dense_biasmask(rel_bias, attn_mask)

    kp = prepare_kernel_params(params)
    x = jax.random.normal(jax.random.fold_in(key, 1), (BATCH, H * W, DIM), jnp.float32)

    fwd = jax.jit(swin_block_forward)
    out = jax.block_until_ready(fwd(x, kp, biasmask))

    ref = jax.block_until_ready(reference_forward(x, params, attn_mask, rel_bias))
    # bf16 MXU operands + approx reciprocal + tanh GELU => loosened tolerance.
    np.testing.assert_allclose(np.asarray(out), np.asarray(ref), atol=1e-2, rtol=1e-2)

    print("KERNEL_OK")
</pallas_src>

<mosaic_0001>
module attributes {stable_mosaic.version = 11 : i64} {
  func.func @_swin_block_kernel(%arg0: i32, %arg1: memref<128x32xf32, #tpu.memory_space<vmem>>, %arg2: memref<4x128x128xf32, #tpu.memory_space<vmem>>, %arg3: memref<8x128xf32, #tpu.memory_space<vmem>>, %arg4: memref<32x96xbf16, #tpu.memory_space<vmem>>, %arg5: memref<32x32xbf16, #tpu.memory_space<vmem>>, %arg6: memref<32x128xbf16, #tpu.memory_space<vmem>>, %arg7: memref<128x32xbf16, #tpu.memory_space<vmem>>, %arg8: memref<128x32xf32, #tpu.memory_space<vmem>>) attributes {dimension_semantics = [#tpu.dimension_semantics<parallel>], iteration_bounds = array<i64: 1>, scalar_prefetch = 0 : i64, scratch_operands = 0 : i64, tpu.core_type = #tpu.core_type<tc>, window_params = [{transform_indices = @transform_0, window_bounds = array<i64: 128, 32>}, {transform_indices = @transform_1, window_bounds = array<i64: 4, 128, 128>}, {pipeline_mode = #tpu.pipeline_mode<synchronous>, transform_indices = @transform_2, window_bounds = array<i64: 8, 128>}, {pipeline_mode = #tpu.pipeline_mode<synchronous>, transform_indices = @transform_3, window_bounds = array<i64: 32, 96>}, {pipeline_mode = #tpu.pipeline_mode<synchronous>, transform_indices = @transform_4, window_bounds = array<i64: 32, 32>}, {pipeline_mode = #tpu.pipeline_mode<synchronous>, transform_indices = @transform_5, window_bounds = array<i64: 32, 128>}, {pipeline_mode = #tpu.pipeline_mode<synchronous>, transform_indices = @transform_6, window_bounds = array<i64: 128, 32>}, {transform_indices = @transform_7, window_bounds = array<i64: 128, 32>}]} {
    %c0 = arith.constant 0 : index
    %c0_0 = arith.constant 0 : index
    %0 = vector.load %arg1[%c0, %c0_0] : memref<128x32xf32, #tpu.memory_space<vmem>>, vector<128x32xf32>
    %c0_1 = arith.constant 0 : index
    %c0_2 = arith.constant 0 : index
    %1 = vector.load %arg3[%c0_1, %c0_2] : memref<8x128xf32, #tpu.memory_space<vmem>>, vector<8x128xf32>
    %2 = vector.extract_strided_slice %1 {offsets = [0, 0], sizes = [1, 32], strides = [1, 1]} : vector<8x128xf32> to vector<1x32xf32>
    %3 = vector.extract_strided_slice %1 {offsets = [1, 0], sizes = [1, 32], strides = [1, 1]} : vector<8x128xf32> to vector<1x32xf32>
    %4 = vector.extract_strided_slice %1 {offsets = [2, 0], sizes = [1, 32], strides = [1, 1]} : vector<8x128xf32> to vector<1x32xf32>
    %5 = vector.extract_strided_slice %1 {offsets = [3, 0], sizes = [1, 32], strides = [1, 1]} : vector<8x128xf32> to vector<1x32xf32>
    %6 = vector.extract_strided_slice %1 {offsets = [4, 0], sizes = [1, 32], strides = [1, 1]} : vector<8x128xf32> to vector<1x32xf32>
    %7 = vector.extract_strided_slice %1 {offsets = [5, 0], sizes = [1, 32], strides = [1, 1]} : vector<8x128xf32> to vector<1x32xf32>
    %8 = vector.extract_strided_slice %1 {offsets = [6, 0], sizes = [1, 128], strides = [1, 1]} : vector<8x128xf32> to vector<1x128xf32>
    %9 = vector.extract_strided_slice %1 {offsets = [7, 0], sizes = [1, 96], strides = [1, 1]} : vector<8x128xf32> to vector<1x96xf32>
    %cst = arith.constant dense<0.000000e+00> : vector<128xf32>
    %10 = vector.multi_reduction <add>, %0, %cst [1] : vector<128x32xf32> to vector<128xf32>
    %11 = vector.shape_cast %10 : vector<128xf32> to vector<128x1xf32>
    %cst_3 = arith.constant 3.200000e+01 : f32
    %12 = vector.broadcast %cst_3 : f32 to vector<128x1xf32>
    %13 = arith.divf %11, %12 : vector<128x1xf32>
    %14 = arith.mulf %0, %0 : vector<128x32xf32>
    %cst_4 = arith.constant dense<0.000000e+00> : vector<128xf32>
    %15 = vector.multi_reduction <add>, %14, %cst_4 [1] : vector<128x32xf32> to vector<128xf32>
    %16 = vector.shape_cast %15 : vector<128xf32> to vector<128x1xf32>
    %cst_5 = arith.constant 3.200000e+01 : f32
    %17 = vector.broadcast %cst_5 : f32 to vector<128x1xf32>
    %18 = arith.divf %16, %17 : vector<128x1xf32>
    %19 = arith.mulf %13, %13 : vector<128x1xf32>
    %20 = arith.subf %18, %19 : vector<128x1xf32>
    %21 = vector.broadcast %13 : vector<128x1xf32> to vector<128x32xf32>
    %22 = arith.subf %0, %21 : vector<128x32xf32>
    %cst_6 = arith.constant 9.99999974E-6 : f32
    %23 = vector.broadcast %cst_6 : f32 to vector<128x1xf32>
    %24 = arith.addf %20, %23 : vector<128x1xf32>
    %25 = math.rsqrt %24 : vector<128x1xf32>
    %26 = vector.broadcast %25 : vector<128x1xf32> to vector<128x32xf32>
    %27 = arith.mulf %22, %26 : vector<128x32xf32>
    %28 = vector.broadcast %2 : vector<1x32xf32> to vector<128x32xf32>
    %29 = arith.mulf %27, %28 : vector<128x32xf32>
    %30 = vector.broadcast %3 : vector<1x32xf32> to vector<128x32xf32>
    %31 = arith.addf %29, %30 : vector<128x32xf32>
    %32 = arith.truncf %31 : vector<128x32xf32> to vector<128x32xbf16>
    %c0_7 = arith.constant 0 : index
    %c0_8 = arith.constant 0 : index
    %33 = vector.load %arg4[%c0_7, %c0_8] : memref<32x96xbf16, #tpu.memory_space<vmem>>, vector<32x96xbf16>
    %cst_9 = arith.constant dense<0.000000e+00> : vector<128x96xf32>
    %34 = tpu.matmul %32, %33, %cst_9 {dimension_numbers = #tpu.dot_dimension_numbers<[1], [0], [0], [1], [0, 0, 1, 1], [], []>} : vector<128x32xbf16>, vector<32x96xbf16>, vector<128x96xf32> -> vector<128x96xf32>
    %35 = vector.broadcast %9 : vector<1x96xf32> to vector<128x96xf32>
    %36 = arith.addf %34, %35 : vector<128x96xf32>
    %37 = vector.extract_strided_slice %36 {offsets = [0, 0], sizes = [128, 32], strides = [1, 1]} : vector<128x96xf32> to vector<128x32xf32>
    %38 = arith.truncf %37 : vector<128x32xf32> to vector<128x32xbf16>
    %39 = vector.extract_strided_slice %36 {offsets = [0, 32], sizes = [128, 32], strides = [1, 1]} : vector<128x96xf32> to vector<128x32xf32>
    %40 = arith.truncf %39 : vector<128x32xf32> to vector<128x32xbf16>
    %41 = vector.extract_strided_slice %36 {offsets = [0, 64], sizes = [128, 32], strides = [1, 1]} : vector<128x96xf32> to vector<128x32xf32>
    %42 = arith.truncf %41 : vector<128x32xf32> to vector<128x32xbf16>
    %43 = vector.extract_strided_slice %38 {offsets = [0, 0], sizes = [128, 8], strides = [1, 1]} : vector<128x32xbf16> to vector<128x8xbf16>
    %44 = vector.extract_strided_slice %40 {offsets = [0, 0], sizes = [128, 8], strides = [1, 1]} : vector<128x32xbf16> to vector<128x8xbf16>
    "tpu.trace_start"() <{level = 10 : i32, message = "qd,kd->qk"}> : () -> ()
    %cst_10 = arith.constant dense<0.000000e+00> : vector<128x128xf32>
    %45 = tpu.matmul %43, %44, %cst_10 {dimension_numbers = #tpu.dot_dimension_numbers<[1], [1], [0], [0], [0, 0, 1, 0], [], []>} : vector<128x8xbf16>, vector<128x8xbf16>, vector<128x128xf32> -> vector<128x128xf32>
    "tpu.trace_stop"() : () -> ()
    %c0_11 = arith.constant 0 : index
    %c0_12 = arith.constant 0 : index
    %c0_13 = arith.constant 0 : index
    %46 = vector.load %arg2[%c0_11, %c0_12, %c0_13] : memref<4x128x128xf32, #tpu.memory_space<vmem>>, vector<1x128x128xf32>
    %47 = vector.shape_cast %46 : vector<1x128x128xf32> to vector<128x128xf32>
    %48 = arith.addf %45, %47 : vector<128x128xf32>
    %cst_14 = arith.constant dense<0xFF800000> : vector<128xf32>
    %49 = vector.multi_reduction <maximumf>, %48, %cst_14 [1] : vector<128x128xf32> to vector<128xf32>
    %50 = vector.shape_cast %49 : vector<128xf32> to vector<128x1xf32>
    %51 = vector.broadcast %50 : vector<128x1xf32> to vector<128x128xf32>
    %52 = arith.subf %48, %51 : vector<128x128xf32>
    %53 = math.exp %52 : vector<128x128xf32>
    %cst_15 = arith.constant dense<0.000000e+00> : vector<128xf32>
    %54 = vector.multi_reduction <add>, %53, %cst_15 [1] : vector<128x128xf32> to vector<128xf32>
    %55 = vector.shape_cast %54 : vector<128xf32> to vector<128x1xf32>
    %56 = tpu.reciprocal %55 {approx = true} : vector<128x1xf32> -> vector<128x1xf32>
    %57 = vector.broadcast %56 : vector<128x1xf32> to vector<128x128xf32>
    %58 = arith.mulf %53, %57 : vector<128x128xf32>
    %59 = arith.truncf %58 : vector<128x128xf32> to vector<128x128xbf16>
    %60 = vector.extract_strided_slice %42 {offsets = [0, 0], sizes = [128, 8], strides = [1, 1]} : vector<128x32xbf16> to vector<128x8xbf16>
    %cst_16 = arith.constant dense<0.000000e+00> : vector<128x8xf32>
    %61 = tpu.matmul %59, %60, %cst_16 {dimension_numbers = #tpu.dot_dimension_numbers<[1], [0], [0], [1], [0, 0, 1, 1], [], []>} : vector<128x128xbf16>, vector<128x8xbf16>, vector<128x8xf32> -> vector<128x8xf32>
    %62 = vector.extract_strided_slice %38 {offsets = [0, 8], sizes = [128, 8], strides = [1, 1]} : vector<128x32xbf16> to vector<128x8xbf16>
    %63 = vector.extract_strided_slice %40 {offsets = [0, 8], sizes = [128, 8], strides = [1, 1]} : vector<128x32xbf16> to vector<128x8xbf16>
    "tpu.trace_start"() <{level = 10 : i32, message = "qd,kd->qk"}> : () -> ()
    %cst_17 = arith.constant dense<0.000000e+00> : vector<128x128xf32>
    %64 = tpu.matmul %62, %63, %cst_17 {dimension_numbers = #tpu.dot_dimension_numbers<[1], [1], [0], [0], [0, 0, 1, 0], [], []>} : vector<128x8xbf16>, vector<128x8xbf16>, vector<128x128xf32> -> vector<128x128xf32>
    "tpu.trace_stop"() : () -> ()
    %c1 = arith.constant 1 : index
    %c0_18 = arith.constant 0 : index
    %c0_19 = arith.constant 0 : index
    %65 = vector.load %arg2[%c1, %c0_18, %c0_19] : memref<4x128x128xf32, #tpu.memory_space<vmem>>, vector<1x128x128xf32>
    %66 = vector.shape_cast %65 : vector<1x128x128xf32> to vector<128x128xf32>
    %67 = arith.addf %64, %66 : vector<128x128xf32>
    %cst_20 = arith.constant dense<0xFF800000> : vector<128xf32>
    %68 = vector.multi_reduction <maximumf>, %67, %cst_20 [1] : vector<128x128xf32> to vector<128xf32>
    %69 = vector.shape_cast %68 : vector<128xf32> to vector<128x1xf32>
    %70 = vector.broadcast %69 : vector<128x1xf32> to vector<128x128xf32>
    %71 = arith.subf %67, %70 : vector<128x128xf32>
    %72 = math.exp %71 : vector<128x128xf32>
    %cst_21 = arith.constant dense<0.000000e+00> : vector<128xf32>
    %73 = vector.multi_reduction <add>, %72, %cst_21 [1] : vector<128x128xf32> to vector<128xf32>
    %74 = vector.shape_cast %73 : vector<128xf32> to vector<128x1xf32>
    %75 = tpu.reciprocal %74 {approx = true} : vector<128x1xf32> -> vector<128x1xf32>
    %76 = vector.broadcast %75 : vector<128x1xf32> to vector<128x128xf32>
    %77 = arith.mulf %72, %76 : vector<128x128xf32>
    %78 = arith.truncf %77 : vector<128x128xf32> to vector<128x128xbf16>
    %79 = vector.extract_strided_slice %42 {offsets = [0, 8], sizes = [128, 8], strides = [1, 1]} : vector<128x32xbf16> to vector<128x8xbf16>
    %cst_22 = arith.constant dense<0.000000e+00> : vector<128x8xf32>
    %80 = tpu.matmul %78, %79, %cst_22 {dimension_numbers = #tpu.dot_dimension_numbers<[1], [0], [0], [1], [0, 0, 1, 1], [], []>} : vector<128x128xbf16>, vector<128x8xbf16>, vector<128x8xf32> -> vector<128x8xf32>
    %81 = vector.extract_strided_slice %38 {offsets = [0, 16], sizes = [128, 8], strides = [1, 1]} : vector<128x32xbf16> to vector<128x8xbf16>
    %82 = vector.extract_strided_slice %40 {offsets = [0, 16], sizes = [128, 8], strides = [1, 1]} : vector<128x32xbf16> to vector<128x8xbf16>
    "tpu.trace_start"() <{level = 10 : i32, message = "qd,kd->qk"}> : () -> ()
    %cst_23 = arith.constant dense<0.000000e+00> : vector<128x128xf32>
    %83 = tpu.matmul %81, %82, %cst_23 {dimension_numbers = #tpu.dot_dimension_numbers<[1], [1], [0], [0], [0, 0, 1, 0], [], []>} : vector<128x8xbf16>, vector<128x8xbf16>, vector<128x128xf32> -> vector<128x128xf32>
    "tpu.trace_stop"() : () -> ()
    %c2 = arith.constant 2 : index
    %c0_24 = arith.constant 0 : index
    %c0_25 = arith.constant 0 : index
    %84 = vector.load %arg2[%c2, %c0_24, %c0_25] : memref<4x128x128xf32, #tpu.memory_space<vmem>>, vector<1x128x128xf32>
    %85 = vector.shape_cast %84 : vector<1x128x128xf32> to vector<128x128xf32>
    %86 = arith.addf %83, %85 : vector<128x128xf32>
    %cst_26 = arith.constant dense<0xFF800000> : vector<128xf32>
    %87 = vector.multi_reduction <maximumf>, %86, %cst_26 [1] : vector<128x128xf32> to vector<128xf32>
    %88 = vector.shape_cast %87 : vector<128xf32> to vector<128x1xf32>
    %89 = vector.broadcast %88 : vector<128x1xf32> to vector<128x128xf32>
    %90 = arith.subf %86, %89 : vector<128x128xf32>
    %91 = math.exp %90 : vector<128x128xf32>
    %cst_27 = arith.constant dense<0.000000e+00> : vector<128xf32>
    %92 = vector.multi_reduction <add>, %91, %cst_27 [1] : vector<128x128xf32> to vector<128xf32>
    %93 = vector.shape_cast %92 : vector<128xf32> to vector<128x1xf32>
    %94 = tpu.reciprocal %93 {approx = true} : vector<128x1xf32> -> vector<128x1xf32>
    %95 = vector.broadcast %94 : vector<128x1xf32> to vector<128x128xf32>
    %96 = arith.mulf %91, %95 : vector<128x128xf32>
    %97 = arith.truncf %96 : vector<128x128xf32> to vector<128x128xbf16>
    %98 = vector.extract_strided_slice %42 {offsets = [0, 16], sizes = [128, 8], strides = [1, 1]} : vector<128x32xbf16> to vector<128x8xbf16>
    %cst_28 = arith.constant dense<0.000000e+00> : vector<128x8xf32>
    %99 = tpu.matmul %97, %98, %cst_28 {dimension_numbers = #tpu.dot_dimension_numbers<[1], [0], [0], [1], [0, 0, 1, 1], [], []>} : vector<128x128xbf16>, vector<128x8xbf16>, vector<128x8xf32> -> vector<128x8xf32>
    %100 = vector.extract_strided_slice %38 {offsets = [0, 24], sizes = [128, 8], strides = [1, 1]} : vector<128x32xbf16> to vector<128x8xbf16>
    %101 = vector.extract_strided_slice %40 {offsets = [0, 24], sizes = [128, 8], strides = [1, 1]} : vector<128x32xbf16> to vector<128x8xbf16>
    "tpu.trace_start"() <{level = 10 : i32, message = "qd,kd->qk"}> : () -> ()
    %cst_29 = arith.constant dense<0.000000e+00> : vector<128x128xf32>
    %102 = tpu.matmul %100, %101, %cst_29 {dimension_numbers = #tpu.dot_dimension_numbers<[1], [1], [0], [0], [0, 0, 1, 0], [], []>} : vector<128x8xbf16>, vector<128x8xbf16>, vector<128x128xf32> -> vector<128x128xf32>
    "tpu.trace_stop"() : () -> ()
    %c3 = arith.constant 3 : index
    %c0_30 = arith.constant 0 : index
    %c0_31 = arith.constant 0 : index
    %103 = vector.load %arg2[%c3, %c0_30, %c0_31] : memref<4x128x128xf32, #tpu.memory_space<vmem>>, vector<1x128x128xf32>
    %104 = vector.shape_cast %103 : vector<1x128x128xf32> to vector<128x128xf32>
    %105 = arith.addf %102, %104 : vector<128x128xf32>
    %cst_32 = arith.constant dense<0xFF800000> : vector<128xf32>
    %106 = vector.multi_reduction <maximumf>, %105, %cst_32 [1] : vector<128x128xf32> to vector<128xf32>
    %107 = vector.shape_cast %106 : vector<128xf32> to vector<128x1xf32>
    %108 = vector.broadcast %107 : vector<128x1xf32> to vector<128x128xf32>
    %109 = arith.subf %105, %108 : vector<128x128xf32>
    %110 = math.exp %109 : vector<128x128xf32>
    %cst_33 = arith.constant dense<0.000000e+00> : vector<128xf32>
    %111 = vector.multi_reduction <add>, %110, %cst_33 [1] : vector<128x128xf32> to vector<128xf32>
    %112 = vector.shape_cast %111 : vector<128xf32> to vector<128x1xf32>
    %113 = tpu.reciprocal %112 {approx = true} : vector<128x1xf32> -> vector<128x1xf32>
    %114 = vector.broadcast %113 : vector<128x1xf32> to vector<128x128xf32>
    %115 = arith.mulf %110, %114 : vector<128x128xf32>
    %116 = arith.truncf %115 : vector<128x128xf32> to vector<128x128xbf16>
    %117 = vector.extract_strided_slice %42 {offsets = [0, 24], sizes = [128, 8], strides = [1, 1]} : vector<128x32xbf16> to vector<128x8xbf16>
    %cst_34 = arith.constant dense<0.000000e+00> : vector<128x8xf32>
    %118 = tpu.matmul %116, %117, %cst_34 {dimension_numbers = #tpu.dot_dimension_numbers<[1], [0], [0], [1], [0, 0, 1, 1], [], []>} : vector<128x128xbf16>, vector<128x8xbf16>, vector<128x8xf32> -> vector<128x8xf32>
    %119 = tpu.concatenate %61, %80, %99, %118 in 1 : vector<128x8xf32>, vector<128x8xf32>, vector<128x8xf32>, vector<128x8xf32> -> vector<128x32xf32>
    %120 = arith.truncf %119 : vector<128x32xf32> to vector<128x32xbf16>
    %c0_35 = arith.constant 0 : index
    %c0_36 = arith.constant 0 : index
    %121 = vector.load %arg5[%c0_35, %c0_36] : memref<32x32xbf16, #tpu.memory_space<vmem>>, vector<32x32xbf16>
    %cst_37 = arith.constant dense<0.000000e+00> : vector<128x32xf32>
    %122 = tpu.matmul %120, %121, %cst_37 {dimension_numbers = #tpu.dot_dimension_numbers<[1], [0], [0], [1], [0, 0, 1, 1], [], []>} : vector<128x32xbf16>, vector<32x32xbf16>, vector<128x32xf32> -> vector<128x32xf32>
    %123 = vector.broadcast %6 : vector<1x32xf32> to vector<128x32xf32>
    %124 = arith.addf %122, %123 : vector<128x32xf32>
    %125 = arith.addf %0, %124 : vector<128x32xf32>
    %cst_38 = arith.constant dense<0.000000e+00> : vector<128xf32>
    %126 = vector.multi_reduction <add>, %125, %cst_38 [1] : vector<128x32xf32> to vector<128xf32>
    %127 = vector.shape_cast %126 : vector<128xf32> to vector<128x1xf32>
    %cst_39 = arith.constant 3.200000e+01 : f32
    %128 = vector.broadcast %cst_39 : f32 to vector<128x1xf32>
    %129 = arith.divf %127, %128 : vector<128x1xf32>
    %130 = arith.mulf %125, %125 : vector<128x32xf32>
    %cst_40 = arith.constant dense<0.000000e+00> : vector<128xf32>
    %131 = vector.multi_reduction <add>, %130, %cst_40 [1] : vector<128x32xf32> to vector<128xf32>
    %132 = vector.shape_cast %131 : vector<128xf32> to vector<128x1xf32>
    %cst_41 = arith.constant 3.200000e+01 : f32
    %133 = vector.broadcast %cst_41 : f32 to vector<128x1xf32>
    %134 = arith.divf %132, %133 : vector<128x1xf32>
    %135 = arith.mulf %129, %129 : vector<128x1xf32>
    %136 = arith.subf %134, %135 : vector<128x1xf32>
    %137 = vector.broadcast %129 : vector<128x1xf32> to vector<128x32xf32>
    %138 = arith.subf %125, %137 : vector<128x32xf32>
    %cst_42 = arith.constant 9.99999974E-6 : f32
    %139 = vector.broadcast %cst_42 : f32 to vector<128x1xf32>
    %140 = arith.addf %136, %139 : vector<128x1xf32>
    %141 = math.rsqrt %140 : vector<128x1xf32>
    %142 = vector.broadcast %141 : vector<128x1xf32> to vector<128x32xf32>
    %143 = arith.mulf %138, %142 : vector<128x32xf32>
    %144 = vector.broadcast %4 : vector<1x32xf32> to vector<128x32xf32>
    %145 = arith.mulf %143, %144 : vector<128x32xf32>
    %146 = vector.broadcast %5 : vector<1x32xf32> to vector<128x32xf32>
    %147 = arith.addf %145, %146 : vector<128x32xf32>
    %148 = arith.truncf %147 : vector<128x32xf32> to vector<128x32xbf16>
    %c0_43 = arith.constant 0 : index
    %c0_44 = arith.constant 0 : index
    %149 = vector.load %arg6[%c0_43, %c0_44] : memref<32x128xbf16, #tpu.memory_space<vmem>>, vector<32x128xbf16>
    %cst_45 = arith.constant dense<0.000000e+00> : vector<128x128xf32>
    %150 = tpu.matmul %148, %149, %cst_45 {dimension_numbers = #tpu.dot_dimension_numbers<[1], [0], [0], [1], [0, 0, 1, 1], [], []>} : vector<128x32xbf16>, vector<32x128xbf16>, vector<128x128xf32> -> vector<128x128xf32>
    %151 = vector.broadcast %8 : vector<1x128xf32> to vector<128x128xf32>
    %152 = arith.addf %150, %151 : vector<128x128xf32>
    %cst_46 = arith.constant 5.000000e-01 : f32
    %153 = vector.broadcast %cst_46 : f32 to vector<128x128xf32>
    %154 = arith.mulf %153, %152 : vector<128x128xf32>
    %cst_47 = arith.constant 4.471500e-02 : f32
    %155 = vector.broadcast %cst_47 : f32 to vector<128x128xf32>
    %156 = arith.mulf %155, %152 : vector<128x128xf32>
    %157 = arith.mulf %156, %152 : vector<128x128xf32>
    %158 = arith.mulf %157, %152 : vector<128x128xf32>
    %159 = arith.addf %152, %158 : vector<128x128xf32>
    %cst_48 = arith.constant 0.797884583 : f32
    %160 = vector.broadcast %cst_48 : f32 to vector<128x128xf32>
    %161 = arith.mulf %160, %159 : vector<128x128xf32>
    %162 = math.tanh %161 : vector<128x128xf32>
    %cst_49 = arith.constant 1.000000e+00 : f32
    %163 = vector.broadcast %cst_49 : f32 to vector<128x128xf32>
    %164 = arith.addf %163, %162 : vector<128x128xf32>
    %165 = arith.mulf %154, %164 : vector<128x128xf32>
    %166 = arith.truncf %165 : vector<128x128xf32> to vector<128x128xbf16>
    %c0_50 = arith.constant 0 : index
    %c0_51 = arith.constant 0 : index
    %167 = vector.load %arg7[%c0_50, %c0_51] : memref<128x32xbf16, #tpu.memory_space<vmem>>, vector<128x32xbf16>
    %cst_52 = arith.constant dense<0.000000e+00> : vector<128x32xf32>
    %168 = tpu.matmul %166, %167, %cst_52 {dimension_numbers = #tpu.dot_dimension_numbers<[1], [0], [0], [1], [0, 0, 1, 1], [], []>} : vector<128x128xbf16>, vector<128x32xbf16>, vector<128x32xf32> -> vector<128x32xf32>
    %169 = vector.broadcast %7 : vector<1x32xf32> to vector<128x32xf32>
    %170 = arith.addf %168, %169 : vector<128x32xf32>
    %171 = arith.addf %125, %170 : vector<128x32xf32>
    %c0_53 = arith.constant 0 : index
    %c0_54 = arith.constant 0 : index
    %172 = vector.load %arg8[%c0_53, %c0_54] : memref<128x32xf32, #tpu.memory_space<vmem>>, vector<128x32xf32>
    tpu.vector_store %arg8[%c0_53, %c0_54], %171 {strides = array<i32>} : memref<128x32xf32, #tpu.memory_space<vmem>>, vector<128x32xf32>,
    return
  }
  func.func @transform_0(%arg0: i32) -> (i32, i32) {
    %c0_i32 = arith.constant 0 : i32
    %c0_i32_0 = arith.constant 0 : i32
    return %arg0, %c0_i32 : i32, i32
  }
  func.func @transform_1(%arg0: i32) -> (i32, i32, i32) {
    %c0_i32 = arith.constant 0 : i32
    %c0_i32_0 = arith.constant 0 : i32
    %c0_i32_1 = arith.constant 0 : i32
    return %arg0, %c0_i32, %c0_i32_0 : i32, i32, i32
  }
  func.func @transform_2(%arg0: i32) -> (i32, i32) {
    %c0_i32 = arith.constant 0 : i32
    %c0_i32_0 = arith.constant 0 : i32
    %c0_i32_1 = arith.constant 0 : i32
    return %c0_i32, %c0_i32_0 : i32, i32
  }
  func.func @transform_3(%arg0: i32) -> (i32, i32) {
    %c0_i32 = arith.constant 0 : i32
    %c0_i32_0 = arith.constant 0 : i32
    %c0_i32_1 = arith.constant 0 : i32
    return %c0_i32, %c0_i32_0 : i32, i32
  }
  func.func @transform_4(%arg0: i32) -> (i32, i32) {
    %c0_i32 = arith.constant 0 : i32
    %c0_i32_0 = arith.constant 0 : i32
    %c0_i32_1 = arith.constant 0 : i32
    return %c0_i32, %c0_i32_0 : i32, i32
  }
  func.func @transform_5(%arg0: i32) -> (i32, i32) {
    %c0_i32 = arith.constant 0 : i32
    %c0_i32_0 = arith.constant 0 : i32
    %c0_i32_1 = arith.constant 0 : i32
    return %c0_i32, %c0_i32_0 : i32, i32
  }
  func.func @transform_6(%arg0: i32) -> (i32, i32) {
    %c0_i32 = arith.constant 0 : i32
    %c0_i32_0 = arith.constant 0 : i32
    %c0_i32_1 = arith.constant 0 : i32
    return %c0_i32, %c0_i32_0 : i32, i32
  }
  func.func @transform_7(%arg0: i32) -> (i32, i32) {
    %c0_i32 = arith.constant 0 : i32
    %c0_i32_0 = arith.constant 0 : i32
    return %arg0, %c0_i32 : i32, i32
  }
}

</mosaic_0001>

<llo_original>
// kernel: swin_block_forward.1
$region0: #{swin_block_forward.1}
  #allocation0 [shape = 'u32[]', space=smem, size = 0x4, offset = 0x4, fixed_abs, tag = 'smem constant byte address 0x4 - core index']
  #allocation1 [shape = 'u32[144,128]{1,0:T(1,128)}', space=vmem, size = 0x12000, scoped, tag = 'internal scratch']
  %s0 = inlined_call_operand.vmem [shape: f32[128,32], index: 0, kind: input, shape index: {}]
  %s1 = inlined_call_operand.vmem [shape: f32[4,128,128], index: 1, kind: input, shape index: {}]
  %s2 = inlined_call_operand.vmem [shape: f32[8,128], index: 2, kind: input, shape index: {}]
  %s3 = inlined_call_operand.vmem [shape: bf16[32,96], index: 3, kind: input, shape index: {}]
  %s4 = inlined_call_operand.vmem [shape: bf16[32,32], index: 4, kind: input, shape index: {}]
  %s5 = inlined_call_operand.vmem [shape: bf16[32,128], index: 5, kind: input, shape index: {}]
  %s6 = inlined_call_operand.vmem [shape: bf16[128,32], index: 6, kind: input, shape index: {}]
  %s7 = inlined_call_operand.vmem [shape: f32[128,32], index: 7, kind: output, shape index: {}]
  %s8 = sld [smem:[#allocation0]]
  $region38: #{swin_block_forward.1} parent=0
    _
  %s10 = ssub.s32 1, %s8
  %s11 = scalar_select 0, %s10, %s8
  // Predicated region
  $region2: #{swin_block_forward.1} parent=0 // pred_check
    _
  $region3: #{swin_block_forward.1} parent=0 // pred_check_branch
    %13 = sbr.rel (0) target = $region5
  $region4: #{swin_block_forward.1} parent=0 // pred_region
    _
  $region5: #{swin_block_forward.1} parent=0 // pred_fallthru
    _
  // Predicated region
  $region6: #{swin_block_forward.1} parent=0 // pred_check
    _
  $region7: #{swin_block_forward.1} parent=0 // pred_check_branch
    %15 = sbr.rel (0) target = $region9
  $region8: #{swin_block_forward.1} parent=0 // pred_region
    _
  $region9: #{swin_block_forward.1} parent=0 // pred_fallthru
    _
  // Predicated region
  $region10: #{swin_block_forward.1} parent=0 // pred_check
    _
  $region11: #{swin_block_forward.1} parent=0 // pred_check_branch
    %17 = sbr.rel (0) target = $region13
  $region12: #{swin_block_forward.1} parent=0 // pred_region
    _
  $region13: #{swin_block_forward.1} parent=0 // pred_fallthru
    _
  // Predicated region
  $region14: #{swin_block_forward.1} parent=0 // pred_check
    _
  $region15: #{swin_block_forward.1} parent=0 // pred_check_branch
    %19 = sbr.rel (0) target = $region17
  $region16: #{swin_block_forward.1} parent=0 // pred_region
    _
  $region17: #{swin_block_forward.1} parent=0 // pred_fallthru
    _
  // Predicated region
  $region18: #{swin_block_forward.1} parent=0 // pred_check
    _
  $region19: #{swin_block_forward.1} parent=0 // pred_check_branch
    %21 = sbr.rel (0) target = $region21
  $region20: #{swin_block_forward.1} parent=0 // pred_region
    _
  $region21: #{swin_block_forward.1} parent=0 // pred_fallthru
    _
  // Predicated region
  $region22: #{swin_block_forward.1} parent=0 // pred_check
    _
  $region23: #{swin_block_forward.1} parent=0 // pred_check_branch
    %23 = sbr.rel (0) target = $region25
  $region24: #{swin_block_forward.1} parent=0 // pred_region
    _
  $region25: #{swin_block_forward.1} parent=0 // pred_fallthru
    _
  // Predicated region
  $region26: #{swin_block_forward.1} parent=0 // pred_check
    _
  $region27: #{swin_block_forward.1} parent=0 // pred_check_branch
    %25 = sbr.rel (0) target = $region29
  $region28: #{swin_block_forward.1} parent=0 // pred_region
    _
  $region29: #{swin_block_forward.1} parent=0 // pred_fallthru
    _
  %v27 = vld [vmem:[%s0] sm:$0xff]
  %v28 = vld [vmem:[%s0 + $0x8] sm:$0xff]
  %v29 = vld [vmem:[%s0 + $0x10] sm:$0xff]
  %v30 = vld [vmem:[%s0 + $0x18] sm:$0xff]
  %v31 = vld [vmem:[%s0 + $0x20] sm:$0xff]
  %v32 = vld [vmem:[%s0 + $0x28] sm:$0xff]
  %v33 = vld [vmem:[%s0 + $0x30] sm:$0xff]
  %v34 = vld [vmem:[%s0 + $0x38] sm:$0xff]
  %v35 = vld [vmem:[%s0 + $0x40] sm:$0xff]
  %v36 = vld [vmem:[%s0 + $0x48] sm:$0xff]
  %v37 = vld [vmem:[%s0 + $0x50] sm:$0xff]
  %v38 = vld [vmem:[%s0 + $0x58] sm:$0xff]
  %v39 = vld [vmem:[%s0 + $0x60] sm:$0xff]
  %v40 = vld [vmem:[%s0 + $0x68] sm:$0xff]
  %v41 = vld [vmem:[%s0 + $0x70] sm:$0xff]
  %v42 = vld [vmem:[%s0 + $0x78] sm:$0xff]
  %v43 = vld [vmem:[%s2] sm:$0xff]
  %vm44 = vcmask 261120
  %v45 = vsel %vm44, %v27, 0.0
  %46 = vadd.xlane.f32.xlu0 %v45
  %v47 = vpop.xlane.xlu0 %46
  %v48 = vsel %vm44, %v28, 0.0
  %49 = vadd.xlane.f32.xlu0 %v48
  %v50 = vpop.xlane.xlu0 %49
  %v51 = vsel %vm44, %v29, 0.0
  %52 = vadd.xlane.f32.xlu0 %v51
  %v53 = vpop.xlane.xlu0 %52
  %v54 = vsel %vm44, %v30, 0.0
  %55 = vadd.xlane.f32.xlu0 %v54
  %v56 = vpop.xlane.xlu0 %55
  %v57 = vsel %vm44, %v31, 0.0
  %58 = vadd.xlane.f32.xlu0 %v57
  %v59 = vpop.xlane.xlu0 %58
  %v60 = vsel %vm44, %v32, 0.0
  %61 = vadd.xlane.f32.xlu0 %v60
  %v62 = vpop.xlane.xlu0 %61
  %v63 = vsel %vm44, %v33, 0.0
  %64 = vadd.xlane.f32.xlu0 %v63
  %v65 = vpop.xlane.xlu0 %64
  %v66 = vsel %vm44, %v34, 0.0
  %67 = vadd.xlane.f32.xlu0 %v66
  %v68 = vpop.xlane.xlu0 %67
  %v69 = vsel %vm44, %v35, 0.0
  %70 = vadd.xlane.f32.xlu0 %v69
  %v71 = vpop.xlane.xlu0 %70
  %v72 = vsel %vm44, %v36, 0.0
  %73 = vadd.xlane.f32.xlu0 %v72
  %v74 = vpop.xlane.xlu0 %73
  %v75 = vsel %vm44, %v37, 0.0
  %76 = vadd.xlane.f32.xlu0 %v75
  %v77 = vpop.xlane.xlu0 %76
  %v78 = vsel %vm44, %v38, 0.0
  %79 = vadd.xlane.f32.xlu0 %v78
  %v80 = vpop.xlane.xlu0 %79
  %v81 = vsel %vm44, %v39, 0.0
  %82 = vadd.xlane.f32.xlu0 %v81
  %v83 = vpop.xlane.xlu0 %82
  %v84 = vsel %vm44, %v40, 0.0
  %85 = vadd.xlane.f32.xlu0 %v84
  %v86 = vpop.xlane.xlu0 %85
  %v87 = vsel %vm44, %v41, 0.0
  %88 = vadd.xlane.f32.xlu0 %v87
  %v89 = vpop.xlane.xlu0 %88
  %v90 = vsel %vm44, %v42, 0.0
  %91 = vadd.xlane.f32.xlu0 %v90
  %v92 = vpop.xlane.xlu0 %91
  %v93 = vrcp.pop 32.0
  %v94 = vmul.f32 %v47, %v93
  %v95 = vmul.f32 %v50, %v93
  %v96 = vmul.f32 %v53, %v93
  %v97 = vmul.f32 %v56, %v93
  %v98 = vmul.f32 %v59, %v93
  %v99 = vmul.f32 %v62, %v93
  %v100 = vmul.f32 %v65, %v93
  %v101 = vmul.f32 %v68, %v93
  %v102 = vmul.f32 %v71, %v93
  %v103 = vmul.f32 %v74, %v93
  %v104 = vmul.f32 %v77, %v93
  %v105 = vmul.f32 %v80, %v93
  %v106 = vmul.f32 %v83, %v93
  %v107 = vmul.f32 %v86, %v93
  %v108 = vmul.f32 %v89, %v93
  %v109 = vmul.f32 %v92, %v93
  %v110 = vmul.f32 %v27, %v27
  %v111 = vmul.f32 %v28, %v28
  %v112 = vmul.f32 %v29, %v29
  %v113 = vmul.f32 %v30, %v30
  %v114 = vmul.f32 %v31, %v31
  %v115 = vmul.f32 %v32, %v32
  %v116 = vmul.f32 %v33, %v33
  %v117 = vmul.f32 %v34, %v34
  %v118 = vmul.f32 %v35, %v35
  %v119 = vmul.f32 %v36, %v36
  %v120 = vmul.f32 %v37, %v37
  %v121 = vmul.f32 %v38, %v38
  %v122 = vmul.f32 %v39, %v39
  %v123 = vmul.f32 %v40, %v40
  %v124 = vmul.f32 %v41, %v41
  %v125 = vmul.f32 %v42, %v42
  %v126 = vsel %vm44, %v110, 0.0
  %127 = vadd.xlane.f32.xlu0 %v126
  %v128 = vpop.xlane.xlu0 %127
  %v129 = vsel %vm44, %v111, 0.0
  %130 = vadd.xlane.f32.xlu0 %v129
  %v131 = vpop.xlane.xlu0 %130
  %v132 = vsel %vm44, %v112, 0.0
  %133 = vadd.xlane.f32.xlu0 %v132
  %v134 = vpop.xlane.xlu0 %133
  %v135 = vsel %vm44, %v113, 0.0
  %136 = vadd.xlane.f32.xlu0 %v135
  %v137 = vpop.xlane.xlu0 %136
  %v138 = vsel %vm44, %v114, 0.0
  %139 = vadd.xlane.f32.xlu0 %v138
  %v140 = vpop.xlane.xlu0 %139
  %v141 = vsel %vm44, %v115, 0.0
  %142 = vadd.xlane.f32.xlu0 %v141
  %v143 = vpop.xlane.xlu0 %142
  %v144 = vsel %vm44, %v116, 0.0
  %145 = vadd.xlane.f32.xlu0 %v144
  %v146 = vpop.xlane.xlu0 %145
  %v147 = vsel %vm44, %v117, 0.0
  %148 = vadd.xlane.f32.xlu0 %v147
  %v149 = vpop.xlane.xlu0 %148
  %v150 = vsel %vm44, %v118, 0.0
  %151 = vadd.xlane.f32.xlu0 %v150
  %v152 = vpop.xlane.xlu0 %151
  %v153 = vsel %vm44, %v119, 0.0
  %154 = vadd.xlane.f32.xlu0 %v153
  %v155 = vpop.xlane.xlu0 %154
  %v156 = vsel %vm44, %v120, 0.0
  %157 = vadd.xlane.f32.xlu0 %v156
  %v158 = vpop.xlane.xlu0 %157
  %v159 = vsel %vm44, %v121, 0.0
  %160 = vadd.xlane.f32.xlu0 %v159
  %v161 = vpop.xlane.xlu0 %160
  %v162 = vsel %vm44, %v122, 0.0
  %163 = vadd.xlane.f32.xlu0 %v162
  %v164 = vpop.xlane.xlu0 %163
  %v165 = vsel %vm44, %v123, 0.0
  %166 = vadd.xlane.f32.xlu0 %v165
  %v167 = vpop.xlane.xlu0 %166
  %v168 = vsel %vm44, %v124, 0.0
  %169 = vadd.xlane.f32.xlu0 %v168
  %v170 = vpop.xlane.xlu0 %169
  %v171 = vsel %vm44, %v125, 0.0
  %172 = vadd.xlane.f32.xlu0 %v171
  %v173 = vpop.xlane.xlu0 %172
  %v174 = vmul.f32 %v128, %v93
  %v175 = vmul.f32 %v131, %v93
  %v176 = vmul.f32 %v134, %v93
  %v177 = vmul.f32 %v137, %v93
  %v178 = vmul.f32 %v140, %v93
  %v179 = vmul.f32 %v143, %v93
  %v180 = vmul.f32 %v146, %v93
  %v181 = vmul.f32 %v149, %v93
  %v182 = vmul.f32 %v152, %v93
  %v183 = vmul.f32 %v155, %v93
  %v184 = vmul.f32 %v158, %v93
  %v185 = vmul.f32 %v161, %v93
  %v186 = vmul.f32 %v164, %v93
  %v187 = vmul.f32 %v167, %v93
  %v188 = vmul.f32 %v170, %v93
  %v189 = vmul.f32 %v173, %v93
  %v190 = vmul.f32 %v94, %v94
  %v191 = vmul.f32 %v95, %v95
  %v192 = vmul.f32 %v96, %v96
  %v193 = vmul.f32 %v97, %v97
  %v194 = vmul.f32 %v98, %v98
  %v195 = vmul.f32 %v99, %v99
  %v196 = vmul.f32 %v100, %v100
  %v197 = vmul.f32 %v101, %v101
  %v198 = vmul.f32 %v102, %v102
  %v199 = vmul.f32 %v103, %v103
  %v200 = vmul.f32 %v104, %v104
  %v201 = vmul.f32 %v105, %v105
  %v202 = vmul.f32 %v106, %v106
  %v203 = vmul.f32 %v107, %v107
  %v204 = vmul.f32 %v108, %v108
  %v205 = vmul.f32 %v109, %v109
  %v206 = vsub.f32 %v174, %v190
  %v207 = vsub.f32 %v175, %v191
  %v208 = vsub.f32 %v176, %v192
  %v209 = vsub.f32 %v177, %v193
  %v210 = vsub.f32 %v178, %v194
  %v211 = vsub.f32 %v179, %v195
  %v212 = vsub.f32 %v180, %v196
  %v213 = vsub.f32 %v181, %v197
  %v214 = vsub.f32 %v182, %v198
  %v215 = vsub.f32 %v183, %v199
  %v216 = vsub.f32 %v184, %v200
  %v217 = vsub.f32 %v185, %v201
  %v218 = vsub.f32 %v186, %v202
  %v219 = vsub.f32 %v187, %v203
  %v220 = vsub.f32 %v188, %v204
  %v221 = vsub.f32 %v189, %v205
  %v222 = vsub.f32 %v27, %v94
  %v223 = vsub.f32 %v28, %v95
  %v224 = vsub.f32 %v29, %v96
  %v225 = vsub.f32 %v30, %v97
  %v226 = vsub.f32 %v31, %v98
  %v227 = vsub.f32 %v32, %v99
  %v228 = vsub.f32 %v33, %v100
  %v229 = vsub.f32 %v34, %v101
  %v230 = vsub.f32 %v35, %v102
  %v231 = vsub.f32 %v36, %v103
  %v232 = vsub.f32 %v37, %v104
  %v233 = vsub.f32 %v38, %v105
  %v234 = vsub.f32 %v39, %v106
  %v235 = vsub.f32 %v40, %v107
  %v236 = vsub.f32 %v41, %v108
  %v237 = vsub.f32 %v42, %v109
  %v238 = vadd.f32 %v206, 1e-05
  %v239 = vadd.f32 %v207, 1e-05
  %v240 = vadd.f32 %v208, 1e-05
  %v241 = vadd.f32 %v209, 1e-05
  %v242 = vadd.f32 %v210, 1e-05
  %v243 = vadd.f32 %v211, 1e-05
  %v244 = vadd.f32 %v212, 1e-05
  %v245 = vadd.f32 %v213, 1e-05
  %v246 = vadd.f32 %v214, 1e-05
  %v247 = vadd.f32 %v215, 1e-05
  %v248 = vadd.f32 %v216, 1e-05
  %v249 = vadd.f32 %v217, 1e-05
  %v250 = vadd.f32 %v218, 1e-05
  %v251 = vadd.f32 %v219, 1e-05
  %v252 = vadd.f32 %v220, 1e-05
  %v253 = vadd.f32 %v221, 1e-05
  %v254 = vrsqrt.pop %v238
  %v255 = vrsqrt.pop %v239
  %v256 = vrsqrt.pop %v240
  %v257 = vrsqrt.pop %v241
  %v258 = vrsqrt.pop %v242
  %v259 = vrsqrt.pop %v243
  %v260 = vrsqrt.pop %v244
  %v261 = vrsqrt.pop %v245
  %v262 = vrsqrt.pop %v246
  %v263 = vrsqrt.pop %v247
  %v264 = vrsqrt.pop %v248
  %v265 = vrsqrt.pop %v249
  %v266 = vrsqrt.pop %v250
  %v267 = vrsqrt.pop %v251
  %v268 = vrsqrt.pop %v252
  %v269 = vrsqrt.pop %v253
  %v270 = vmul.f32 %v222, %v254
  %v271 = vmul.f32 %v223, %v255
  %v272 = vmul.f32 %v224, %v256
  %v273 = vmul.f32 %v225, %v257
  %v274 = vmul.f32 %v226, %v258
  %v275 = vmul.f32 %v227, %v259
  %v276 = vmul.f32 %v228, %v260
  %v277 = vmul.f32 %v229, %v261
  %v278 = vmul.f32 %v230, %v262
  %v279 = vmul.f32 %v231, %v263
  %v280 = vmul.f32 %v232, %v264
  %v281 = vmul.f32 %v233, %v265
  %v282 = vmul.f32 %v234, %v266
  %v283 = vmul.f32 %v235, %v267
  %v284 = vmul.f32 %v236, %v268
  %v285 = vmul.f32 %v237, %v269
  %v286 = vlaneseq
  %v287 = vshrl.u32 %v286, 7
  %v288 = vsub.s32 0, %v287
  %v289 = vrot.slane %v43, %v288
  %v290 = vmul.f32 %v270, %v289
  %v291 = vmul.f32 %v271, %v289
  %v292 = vmul.f32 %v272, %v289
  %v293 = vmul.f32 %v273, %v289
  %v294 = vmul.f32 %v274, %v289
  %v295 = vmul.f32 %v275, %v289
  %v296 = vmul.f32 %v276, %v289
  %v297 = vmul.f32 %v277, %v289
  %v298 = vmul.f32 %v278, %v289
  %v299 = vmul.f32 %v279, %v289
  %v300 = vmul.f32 %v280, %v289
  %v301 = vmul.f32 %v281, %v289
  %v302 = vmul.f32 %v282, %v289
  %v303 = vmul.f32 %v283, %v289
  %v304 = vmul.f32 %v284, %v289
  %v305 = vmul.f32 %v285, %v289
  %v306 = vlaneseq
  %v307 = vshrl.u32 %v306, 7
  %v308 = vsub.s32 1, %v307
  %v309 = vrot.slane %v43, %v308
  %v310 = vadd.f32 %v290, %v309
  %v311 = vadd.f32 %v291, %v309
  %v312 = vadd.f32 %v292, %v309
  %v313 = vadd.f32 %v293, %v309
  %v314 = vadd.f32 %v294, %v309
  %v315 = vadd.f32 %v295, %v309
  %v316 = vadd.f32 %v296, %v309
  %v317 = vadd.f32 %v297, %v309
  %v318 = vadd.f32 %v298, %v309
  %v319 = vadd.f32 %v299, %v309
  %v320 = vadd.f32 %v300, %v309
  %v321 = vadd.f32 %v301, %v309
  %v322 = vadd.f32 %v302, %v309
  %v323 = vadd.f32 %v303, %v309
  %v324 = vadd.f32 %v304, %v309
  %v325 = vadd.f32 %v305, %v309
  %v326 = vpack.c.bf16 %v311, %v310
  %v327 = vpack.c.bf16 %v313, %v312
  %v328 = vpack.c.bf16 %v315, %v314
  %v329 = vpack.c.bf16 %v317, %v316
  %v330 = vpack.c.bf16 %v319, %v318
  %v331 = vpack.c.bf16 %v321, %v320
  %v332 = vpack.c.bf16 %v323, %v322
  %v333 = vpack.c.bf16 %v325, %v324
  %v334 = vld [vmem:[%s3] sm:$0xf]
  %v335 = vld [vmem:[%s3 + $0x4] sm:$0xf]
  %v336 = vld [vmem:[%s3 + $0x8] sm:$0xf]
  %v337 = vld [vmem:[%s3 + $0xc] sm:$0xf]
  %v338 = vlaneseq
  %v339 = vshrl.u32 %v338, 7
  %v340 = vsub.s32 7, %v339
  %v341 = vrot.slane %v43, %v340
  %v346 = vunpack.c.l.b16 %v334
  %v347 = vunpack.c.l.b16 %v335
  %v348 = vunpack.c.l.b16 %v336
  %v349 = vunpack.c.l.b16 %v337
  %v350 = vpack.c.b16 %v347, %v346
  %v351 = vpack.c.b16 %v349, %v348
  %v355 = vsel %vm44, %v326, 0
  %v358 = vsel %vm44, %v327, 0
  %v361 = vsel %vm44, %v328, 0
  %v364 = vsel %vm44, %v329, 0
  %v367 = vsel %vm44, %v330, 0
  %v370 = vsel %vm44, %v331, 0
  %v373 = vsel %vm44, %v332, 0
  %v376 = vsel %vm44, %v333, 0
  %378 = vmatprep.subr.bf16.mxu0 0
  %379 = vmatpush1.bf16.msra.mxu0 0
  %380 = vmatprep.subr.bf16.mxu0 0
  %381 = vmatpush1.bf16.msra.mxu0 0
  %382 = vmatprep.subr.bf16.mxu0 0
  %383 = vmatpush1.bf16.msra.mxu0 0
  %384 = vmatprep.subr.bf16.mxu0 0
  %385 = vmatpush1.bf16.msra.mxu0 0
  %386 = vmatprep.subr.bf16.mxu0 0
  %387 = vmatpush1.bf16.msra.mxu0 0
  %388 = vmatprep.subr.bf16.mxu0 0
  %389 = vmatpush1.bf16.msra.mxu0 0
  %390 = vmatprep.subr.bf16.mxu0 0
  %391 = vmatpush1.bf16.msra.mxu0 %v351
  %392 = vmatprep.subr.bf16.mxu0 0
  %393 = vmatpush1.bf16.msra.mxu0 %v350
  %394 = vmatprep.subr.bf16.mxu0 0
  %395 = vmatpush2.bf16.msra.mxu0 0
  %396 = vmatprep.subr.bf16.mxu0 0
  %397 = vmatpush2.bf16.msra.mxu0 0
  %398 = vmatprep.subr.bf16.mxu0 0
  %399 = vmatpush2.bf16.msra.mxu0 0
  %400 = vmatprep.subr.bf16.mxu0 0
  %401 = vmatpush2.bf16.msra.mxu0 0
  %402 = vmatprep.subr.bf16.mxu0 0
  %403 = vmatpush2.bf16.msra.mxu0 0
  %404 = vmatprep.subr.bf16.mxu0 0
  %405 = vmatpush2.bf16.msra.mxu0 0
  %406 = vmatprep.subr.bf16.mxu0 0
  %407 = vmatpush2.bf16.msra.mxu0 0
  %408 = vmatprep.subr.bf16.mxu0 0
  %409 = vmatpush2.bf16.msra.mxu0 0
  %410 = vmatprep.mubr.bf16.mxu0 0
  %411 = vmatmul.mubr.bf16.gmra.mxu0 %v355
  %v412 = vpop.f32.mrf.mxu0
  %v413 = vadd.f32 %v341, %v412
  %v414 = vpop.f32.mrf.mxu0
  %v415 = vpop.f32.mrf.mxu0
  %v416 = vadd.f32 %v341, %v415
  %v417 = vpop.f32.mrf.mxu0
  %418 = vmatprep.mubr.bf16.mxu0 0
  %419 = vmatmul.mubr.bf16.gmra.mxu0 %v358
  %v420 = vpop.f32.mrf.mxu0
  %v421 = vadd.f32 %v341, %v420
  %v422 = vpop.f32.mrf.mxu0
  %v423 = vpop.f32.mrf.mxu0
  %v424 = vadd.f32 %v341, %v423
  %v425 = vpop.f32.mrf.mxu0
  %426 = vmatprep.mubr.bf16.mxu0 0
  %427 = vmatmul.mubr.bf16.gmra.mxu0 %v361
  %v428 = vpop.f32.mrf.mxu0
  %v429 = vadd.f32 %v341, %v428
  %v430 = vpop.f32.mrf.mxu0
  %v431 = vpop.f32.mrf.mxu0
  %v432 = vadd.f32 %v341, %v431
  %v433 = vpop.f32.mrf.mxu0
  %434 = vmatprep.mubr.bf16.mxu0 0
  %435 = vmatmul.mubr.bf16.gmra.mxu0 %v364
  %v436 = vpop.f32.mrf.mxu0
  %v437 = vadd.f32 %v341, %v436
  %v438 = vpop.f32.mrf.mxu0
  %v439 = vpop.f32.mrf.mxu0
  %v440 = vadd.f32 %v341, %v439
  %v441 = vpop.f32.mrf.mxu0
  %442 = vmatprep.mubr.bf16.mxu0 0
  %443 = vmatmul.mubr.bf16.gmra.mxu0 %v367
  %v444 = vpop.f32.mrf.mxu0
  %v445 = vadd.f32 %v341, %v444
  %v446 = vpop.f32.mrf.mxu0
  %v447 = vpop.f32.mrf.mxu0
  %v448 = vadd.f32 %v341, %v447
  %v449 = vpop.f32.mrf.mxu0
  %450 = vmatprep.mubr.bf16.mxu0 0
  %451 = vmatmul.mubr.bf16.gmra.mxu0 %v370
  %v452 = vpop.f32.mrf.mxu0
  %v453 = vadd.f32 %v341, %v452
  %v454 = vpop.f32.mrf.mxu0
  %v455 = vpop.f32.mrf.mxu0
  %v456 = vadd.f32 %v341, %v455
  %v457 = vpop.f32.mrf.mxu0
  %458 = vmatprep.mubr.bf16.mxu0 0
  %459 = vmatmul.mubr.bf16.gmra.mxu0 %v373
  %v460 = vpop.f32.mrf.mxu0
  %v461 = vadd.f32 %v341, %v460
  %v462 = vpop.f32.mrf.mxu0
  %v463 = vpop.f32.mrf.mxu0
  %v464 = vadd.f32 %v341, %v463
  %v465 = vpop.f32.mrf.mxu0
  %466 = vmatprep.mubr.bf16.mxu0 0
  %467 = vmatmul.mubr.bf16.gmra.mxu0 %v376
  %v468 = vpop.f32.mrf.mxu0
  %v469 = vadd.f32 %v341, %v468
  %v470 = vpop.f32.mrf.mxu0
  %v471 = vpop.f32.mrf.mxu0
  %v472 = vadd.f32 %v341, %v471
  %v473 = vpop.f32.mrf.mxu0
  %474 = vdwg.mxu0
  %v475 = vpack.c.bf16 %v416, %v413
  %v476 = vpack.c.bf16 %v424, %v421
  %v477 = vpack.c.bf16 %v432, %v429
  %v478 = vpack.c.bf16 %v440, %v437
  %v479 = vpack.c.bf16 %v448, %v445
  %v480 = vpack.c.bf16 %v456, %v453
  %v481 = vpack.c.bf16 %v464, %v461
  %v482 = vpack.c.bf16 %v472, %v469
  %v483 = vld [vmem:[%s1] sm:$0xff]
  %v484 = vld [vmem:[%s1 + $0x8] sm:$0xff]
  %v485 = vld [vmem:[%s1 + $0x10] sm:$0xff]
  %v486 = vld [vmem:[%s1 + $0x18] sm:$0xff]
  %v487 = vld [vmem:[%s1 + $0x20] sm:$0xff]
  %v488 = vld [vmem:[%s1 + $0x28] sm:$0xff]
  %v489 = vld [vmem:[%s1 + $0x30] sm:$0xff]
  %v490 = vld [vmem:[%s1 + $0x38] sm:$0xff]
  %v491 = vld [vmem:[%s1 + $0x40] sm:$0xff]
  %v492 = vld [vmem:[%s1 + $0x48] sm:$0xff]
  %v493 = vld [vmem:[%s1 + $0x50] sm:$0xff]
  %v494 = vld [vmem:[%s1 + $0x58] sm:$0xff]
  %v495 = vld [vmem:[%s1 + $0x60] sm:$0xff]
  %v496 = vld [vmem:[%s1 + $0x68] sm:$0xff]
  %v497 = vld [vmem:[%s1 + $0x70] sm:$0xff]
  %v498 = vld [vmem:[%s1 + $0x78] sm:$0xff]
  %507 = vrot.lane.b32.xlu0 %v475, 96
  %v508 = vpop.permute.xlu0 %507
  %509 = vrot.lane.b32.xlu0 %v476, 96
  %v510 = vpop.permute.xlu0 %509
  %511 = vrot.lane.b32.xlu0 %v477, 96
  %v512 = vpop.permute.xlu0 %511
  %513 = vrot.lane.b32.xlu0 %v478, 96
  %v514 = vpop.permute.xlu0 %513
  %515 = vrot.lane.b32.xlu0 %v479, 96
  %v516 = vpop.permute.xlu0 %515
  %517 = vrot.lane.b32.xlu0 %v480, 96
  %v518 = vpop.permute.xlu0 %517
  %519 = vrot.lane.b32.xlu0 %v481, 96
  %v520 = vpop.permute.xlu0 %519
  %521 = vrot.lane.b32.xlu0 %v482, 96
  %v522 = vpop.permute.xlu0 %521
  %vm523 = vcmask 64512
  %v525 = vsel %vm523, %v475, 0
  %v528 = vsel %vm523, %v476, 0
  %v531 = vsel %vm523, %v477, 0
  %v534 = vsel %vm523, %v478, 0
  %v537 = vsel %vm523, %v479, 0
  %v540 = vsel %vm523, %v480, 0
  %v543 = vsel %vm523, %v481, 0
  %v546 = vsel %vm523, %v482, 0
  %v549 = vsel %vm523, %v508, 0
  %v552 = vsel %vm523, %v510, 0
  %v555 = vsel %vm523, %v512, 0
  %v558 = vsel %vm523, %v514, 0
  %v561 = vsel %vm523, %v516, 0
  %v564 = vsel %vm523, %v518, 0
  %v567 = vsel %vm523, %v520, 0
  %v570 = vsel %vm523, %v522, 0
  %572 = vmatprep.subr.bf16.mxu0 0
  %573 = vmatpush1.bf16.xpose.msra.mxu0 %v570
  %574 = vmatprep.subr.bf16.mxu0 0
  %575 = vmatpush1.bf16.xpose.msra.mxu0 %v567
  %576 = vmatprep.subr.bf16.mxu0 0
  %577 = vmatpush1.bf16.xpose.msra.mxu0 %v564
  %578 = vmatprep.subr.bf16.mxu0 0
  %579 = vmatpush1.bf16.xpose.msra.mxu0 %v561
  %580 = vmatprep.subr.bf16.mxu0 0
  %581 = vmatpush1.bf16.xpose.msra.mxu0 %v558
  %582 = vmatprep.subr.bf16.mxu0 0
  %583 = vmatpush1.bf16.xpose.msra.mxu0 %v555
  %584 = vmatprep.subr.bf16.mxu0 0
  %585 = vmatpush1.bf16.xpose.msra.mxu0 %v552
  %586 = vmatprep.subr.bf16.mxu0 0
  %587 = vmatpush1.bf16.xpose.msra.mxu0 %v549
  %588 = vmatprep.subr.bf16.mxu0 0
  %589 = vmatpush2.bf16.xpose.msra.mxu0 0
  %590 = vmatprep.subr.bf16.mxu0 0
  %591 = vmatpush2.bf16.xpose.msra.mxu0 0
  %592 = vmatprep.subr.bf16.mxu0 0
  %593 = vmatpush2.bf16.xpose.msra.mxu0 0
  %594 = vmatprep.subr.bf16.mxu0 0
  %595 = vmatpush2.bf16.xpose.msra.mxu0 0
  %596 = vmatprep.subr.bf16.mxu0 0
  %597 = vmatpush2.bf16.xpose.msra.mxu0 0
  %598 = vmatprep.subr.bf16.mxu0 0
  %599 = vmatpush2.bf16.xpose.msra.mxu0 0
  %600 = vmatprep.subr.bf16.mxu0 0
  %601 = vmatpush2.bf16.xpose.msra.mxu0 0
  %602 = vmatprep.subr.bf16.mxu0 0
  %603 = vmatpush2.bf16.xpose.msra.mxu0 0
  %604 = vmatprep.mubr.bf16.mxu0 0
  %605 = vmatmul.mubr.bf16.gmra.mxu0 %v525
  %v606 = vpop.f32.mrf.mxu0
  %v607 = vadd.f32 %v483, %v606
  %v608 = vpop.f32.mrf.mxu0
  %v609 = vpop.f32.mrf.mxu0
  %v610 = vadd.f32 %v484, %v609
  %v611 = vpop.f32.mrf.mxu0
  %612 = vmatprep.mubr.bf16.mxu0 0
  %613 = vmatmul.mubr.bf16.gmra.mxu0 %v528
  %v614 = vpop.f32.mrf.mxu0
  %v615 = vadd.f32 %v485, %v614
  %v616 = vpop.f32.mrf.mxu0
  %v617 = vpop.f32.mrf.mxu0
  %v618 = vadd.f32 %v486, %v617
  %v619 = vpop.f32.mrf.mxu0
  %620 = vmatprep.mubr.bf16.mxu0 0
  %621 = vmatmul.mubr.bf16.gmra.mxu0 %v531
  %v622 = vpop.f32.mrf.mxu0
  %v623 = vadd.f32 %v487, %v622
  %v624 = vpop.f32.mrf.mxu0
  %v625 = vpop.f32.mrf.mxu0
  %v626 = vadd.f32 %v488, %v625
  %v627 = vpop.f32.mrf.mxu0
  %628 = vmatprep.mubr.bf16.mxu0 0
  %629 = vmatmul.mubr.bf16.gmra.mxu0 %v534
  %v630 = vpop.f32.mrf.mxu0
  %v631 = vadd.f32 %v489, %v630
  %v632 = vpop.f32.mrf.mxu0
  %v633 = vpop.f32.mrf.mxu0
  %v634 = vadd.f32 %v490, %v633
  %v635 = vpop.f32.mrf.mxu0
  %636 = vmatprep.mubr.bf16.mxu0 0
  %637 = vmatmul.mubr.bf16.gmra.mxu0 %v537
  %v638 = vpop.f32.mrf.mxu0
  %v639 = vadd.f32 %v491, %v638
  %v640 = vpop.f32.mrf.mxu0
  %v641 = vpop.f32.mrf.mxu0
  %v642 = vadd.f32 %v492, %v641
  %v643 = vpop.f32.mrf.mxu0
  %644 = vmatprep.mubr.bf16.mxu0 0
  %645 = vmatmul.mubr.bf16.gmra.mxu0 %v540
  %v646 = vpop.f32.mrf.mxu0
  %v647 = vadd.f32 %v493, %v646
  %v648 = vpop.f32.mrf.mxu0
  %v649 = vpop.f32.mrf.mxu0
  %v650 = vadd.f32 %v494, %v649
  %v651 = vpop.f32.mrf.mxu0
  %652 = vmatprep.mubr.bf16.mxu0 0
  %653 = vmatmul.mubr.bf16.gmra.mxu0 %v543
  %v654 = vpop.f32.mrf.mxu0
  %v655 = vadd.f32 %v495, %v654
  %v656 = vpop.f32.mrf.mxu0
  %v657 = vpop.f32.mrf.mxu0
  %v658 = vadd.f32 %v496, %v657
  %v659 = vpop.f32.mrf.mxu0
  %660 = vmatprep.mubr.bf16.mxu0 0
  %661 = vmatmul.mubr.bf16.gmra.mxu0 %v546
  %v662 = vpop.f32.mrf.mxu0
  %v663 = vadd.f32 %v497, %v662
  %v664 = vpop.f32.mrf.mxu0
  %v665 = vpop.f32.mrf.mxu0
  %v666 = vadd.f32 %v498, %v665
  %v667 = vpop.f32.mrf.mxu0
  %668 = vdwg.mxu0
  %669 = vmax.xlane.f32.xlu0 %v607
  %v670 = vpop.xlane.xlu0 %669
  %671 = vmax.xlane.f32.xlu0 %v610
  %v672 = vpop.xlane.xlu0 %671
  %673 = vmax.xlane.f32.xlu0 %v615
  %v674 = vpop.xlane.xlu0 %673
  %675 = vmax.xlane.f32.xlu0 %v618
  %v676 = vpop.xlane.xlu0 %675
  %677 = vmax.xlane.f32.xlu0 %v623
  %v678 = vpop.xlane.xlu0 %677
  %679 = vmax.xlane.f32.xlu0 %v626
  %v680 = vpop.xlane.xlu0 %679
  %681 = vmax.xlane.f32.xlu0 %v631
  %v682 = vpop.xlane.xlu0 %681
  %683 = vmax.xlane.f32.xlu0 %v634
  %v684 = vpop.xlane.xlu0 %683
  %685 = vmax.xlane.f32.xlu0 %v639
  %v686 = vpop.xlane.xlu0 %685
  %687 = vmax.xlane.f32.xlu0 %v642
  %v688 = vpop.xlane.xlu0 %687
  %689 = vmax.xlane.f32.xlu0 %v647
  %v690 = vpop.xlane.xlu0 %689
  %691 = vmax.xlane.f32.xlu0 %v650
  %v692 = vpop.xlane.xlu0 %691
  %693 = vmax.xlane.f32.xlu0 %v655
  %v694 = vpop.xlane.xlu0 %693
  %695 = vmax.xlane.f32.xlu0 %v658
  %v696 = vpop.xlane.xlu0 %695
  %697 = vmax.xlane.f32.xlu0 %v663
  %v698 = vpop.xlane.xlu0 %697
  %699 = vmax.xlane.f32.xlu0 %v666
  %v700 = vpop.xlane.xlu0 %699
  %v701 = vsub.f32 %v607, %v670
  %v702 = vsub.f32 %v610, %v672
  %v703 = vsub.f32 %v615, %v674
  %v704 = vsub.f32 %v618, %v676
  %v705 = vsub.f32 %v623, %v678
  %v706 = vsub.f32 %v626, %v680
  %v707 = vsub.f32 %v631, %v682
  %v708 = vsub.f32 %v634, %v684
  %v709 = vsub.f32 %v639, %v686
  %v710 = vsub.f32 %v642, %v688
  %v711 = vsub.f32 %v647, %v690
  %v712 = vsub.f32 %v650, %v692
  %v713 = vsub.f32 %v655, %v694
  %v714 = vsub.f32 %v658, %v696
  %v715 = vsub.f32 %v663, %v698
  %v716 = vsub.f32 %v666, %v700
  %v717 = vmul.f32 %v701, 1.442695
  %v718 = vpow.pop %v717
  %v719 = vmul.f32 %v702, 1.442695
  %v720 = vpow.pop %v719
  %v721 = vmul.f32 %v703, 1.442695
  %v722 = vpow.pop %v721
  %v723 = vmul.f32 %v704, 1.442695
  %v724 = vpow.pop %v723
  %v725 = vmul.f32 %v705, 1.442695
  %v726 = vpow.pop %v725
  %v727 = vmul.f32 %v706, 1.442695
  %v728 = vpow.pop %v727
  %v729 = vmul.f32 %v707, 1.442695
  %v730 = vpow.pop %v729
  %v731 = vmul.f32 %v708, 1.442695
  %v732 = vpow.pop %v731
  %v733 = vmul.f32 %v709, 1.442695
  %v734 = vpow.pop %v733
  %v735 = vmul.f32 %v710, 1.442695
  %v736 = vpow.pop %v735
  %v737 = vmul.f32 %v711, 1.442695
  %v738 = vpow.pop %v737
  %v739 = vmul.f32 %v712, 1.442695
  %v740 = vpow.pop %v739
  %v741 = vmul.f32 %v713, 1.442695
  %v742 = vpow.pop %v741
  %v743 = vmul.f32 %v714, 1.442695
  %v744 = vpow.pop %v743
  %v745 = vmul.f32 %v715, 1.442695
  %v746 = vpow.pop %v745
  %v747 = vmul.f32 %v716, 1.442695
  %v748 = vpow.pop %v747
  %749 = vadd.xlane.f32.xlu0 %v718
  %v750 = vpop.xlane.xlu0 %749
  %751 = vadd.xlane.f32.xlu0 %v720
  %v752 = vpop.xlane.xlu0 %751
  %753 = vadd.xlane.f32.xlu0 %v722
  %v754 = vpop.xlane.xlu0 %753
  %755 = vadd.xlane.f32.xlu0 %v724
  %v756 = vpop.xlane.xlu0 %755
  %757 = vadd.xlane.f32.xlu0 %v726
  %v758 = vpop.xlane.xlu0 %757
  %759 = vadd.xlane.f32.xlu0 %v728
  %v760 = vpop.xlane.xlu0 %759
  %761 = vadd.xlane.f32.xlu0 %v730
  %v762 = vpop.xlane.xlu0 %761
  %763 = vadd.xlane.f32.xlu0 %v732
  %v764 = vpop.xlane.xlu0 %763
  %765 = vadd.xlane.f32.xlu0 %v734
  %v766 = vpop.xlane.xlu0 %765
  %767 = vadd.xlane.f32.xlu0 %v736
  %v768 = vpop.xlane.xlu0 %767
  %769 = vadd.xlane.f32.xlu0 %v738
  %v770 = vpop.xlane.xlu0 %769
  %771 = vadd.xlane.f32.xlu0 %v740
  %v772 = vpop.xlane.xlu0 %771
  %773 = vadd.xlane.f32.xlu0 %v742
  %v774 = vpop.xlane.xlu0 %773
  %775 = vadd.xlane.f32.xlu0 %v744
  %v776 = vpop.xlane.xlu0 %775
  %777 = vadd.xlane.f32.xlu0 %v746
  %v778 = vpop.xlane.xlu0 %777
  %779 = vadd.xlane.f32.xlu0 %v748
  %v780 = vpop.xlane.xlu0 %779
  %v781 = vrcp.pop %v750
  %v782 = vrcp.pop %v752
  %v783 = vrcp.pop %v754
  %v784 = vrcp.pop %v756
  %v785 = vrcp.pop %v758
  %v786 = vrcp.pop %v760
  %v787 = vrcp.pop %v762
  %v788 = vrcp.pop %v764
  %v789 = vrcp.pop %v766
  %v790 = vrcp.pop %v768
  %v791 = vrcp.pop %v770
  %v792 = vrcp.pop %v772
  %v793 = vrcp.pop %v774
  %v794 = vrcp.pop %v776
  %v795 = vrcp.pop %v778
  %v796 = vrcp.pop %v780
  %v797 = vmul.f32 %v718, %v781
  %v798 = vmul.f32 %v720, %v782
  %v799 = vmul.f32 %v722, %v783
  %v800 = vmul.f32 %v724, %v784
  %v801 = vmul.f32 %v726, %v785
  %v802 = vmul.f32 %v728, %v786
  %v803 = vmul.f32 %v730, %v787
  %v804 = vmul.f32 %v732, %v788
  %v805 = vmul.f32 %v734, %v789
  %v806 = vmul.f32 %v736, %v790
  %v807 = vmul.f32 %v738, %v791
  %v808 = vmul.f32 %v740, %v792
  %v809 = vmul.f32 %v742, %v793
  %v810 = vmul.f32 %v744, %v794
  %v811 = vmul.f32 %v746, %v795
  %v812 = vmul.f32 %v748, %v796
  %v813 = vpack.c.bf16 %v798, %v797
  %v814 = vpack.c.bf16 %v800, %v799
  %v815 = vpack.c.bf16 %v802, %v801
  %v816 = vpack.c.bf16 %v804, %v803
  %v817 = vpack.c.bf16 %v806, %v805
  %v818 = vpack.c.bf16 %v808, %v807
  %v819 = vpack.c.bf16 %v810, %v809
  %v820 = vpack.c.bf16 %v812, %v811
  %821 = vrot.lane.b32.xlu0 %v475, 64
  %v822 = vpop.permute.xlu0 %821
  %823 = vrot.lane.b32.xlu0 %v476, 64
  %v824 = vpop.permute.xlu0 %823
  %825 = vrot.lane.b32.xlu0 %v477, 64
  %v826 = vpop.permute.xlu0 %825
  %827 = vrot.lane.b32.xlu0 %v478, 64
  %v828 = vpop.permute.xlu0 %827
  %829 = vrot.lane.b32.xlu0 %v479, 64
  %v830 = vpop.permute.xlu0 %829
  %831 = vrot.lane.b32.xlu0 %v480, 64
  %v832 = vpop.permute.xlu0 %831
  %833 = vrot.lane.b32.xlu0 %v481, 64
  %v834 = vpop.permute.xlu0 %833
  %835 = vrot.lane.b32.xlu0 %v482, 64
  %v836 = vpop.permute.xlu0 %835
  %845 = vmatprep.subr.bf16.mxu0 0
  %846 = vmatpush1.bf16.msra.mxu0 %v836
  %847 = vmatprep.subr.bf16.mxu0 0
  %848 = vmatpush1.bf16.msra.mxu0 %v834
  %849 = vmatprep.subr.bf16.mxu0 0
  %850 = vmatpush1.bf16.msra.mxu0 %v832
  %851 = vmatprep.subr.bf16.mxu0 0
  %852 = vmatpush1.bf16.msra.mxu0 %v830
  %853 = vmatprep.subr.bf16.mxu0 0
  %854 = vmatpush1.bf16.msra.mxu0 %v828
  %855 = vmatprep.subr.bf16.mxu0 0
  %856 = vmatpush1.bf16.msra.mxu0 %v826
  %857 = vmatprep.subr.bf16.mxu0 0
  %858 = vmatpush1.bf16.msra.mxu0 %v824
  %859 = vmatprep.subr.bf16.mxu0 0
  %860 = vmatpush1.bf16.msra.mxu0 %v822
  %861 = vmatprep.subr.bf16.mxu0 0
  %862 = vmatpush2.bf16.msra.mxu0 0
  %863 = vmatprep.subr.bf16.mxu0 0
  %864 = vmatpush2.bf16.msra.mxu0 0
  %865 = vmatprep.subr.bf16.mxu0 0
  %866 = vmatpush2.bf16.msra.mxu0 0
  %867 = vmatprep.subr.bf16.mxu0 0
  %868 = vmatpush2.bf16.msra.mxu0 0
  %869 = vmatprep.subr.bf16.mxu0 0
  %870 = vmatpush2.bf16.msra.mxu0 0
  %871 = vmatprep.subr.bf16.mxu0 0
  %872 = vmatpush2.bf16.msra.mxu0 0
  %873 = vmatprep.subr.bf16.mxu0 0
  %874 = vmatpush2.bf16.msra.mxu0 0
  %875 = vmatprep.subr.bf16.mxu0 0
  %876 = vmatpush2.bf16.msra.mxu0 0
  %877 = vmatprep.mubr.bf16.mxu0 0
  %878 = vmatmul.mubr.bf16.gmra.mxu0 %v813
  %v879 = vpop.f32.mrf.mxu0
  %v880 = vadd.f32 0.0, %v879
  %v881 = vpop.f32.mrf.mxu0
  %v882 = vpop.f32.mrf.mxu0
  %v883 = vadd.f32 0.0, %v882
  %v884 = vpop.f32.mrf.mxu0
  %885 = vmatprep.mubr.bf16.mxu0 0
  %886 = vmatmul.mubr.bf16.gmra.mxu0 %v814
  %v887 = vpop.f32.mrf.mxu0
  %v888 = vadd.f32 0.0, %v887
  %v889 = vpop.f32.mrf.mxu0
  %v890 = vpop.f32.mrf.mxu0
  %v891 = vadd.f32 0.0, %v890
  %v892 = vpop.f32.mrf.mxu0
  %893 = vmatprep.mubr.bf16.mxu0 0
  %894 = vmatmul.mubr.bf16.gmra.mxu0 %v815
  %v895 = vpop.f32.mrf.mxu0
  %v896 = vadd.f32 0.0, %v895
  %v897 = vpop.f32.mrf.mxu0
  %v898 = vpop.f32.mrf.mxu0
  %v899 = vadd.f32 0.0, %v898
  %v900 = vpop.f32.mrf.mxu0
  %901 = vmatprep.mubr.bf16.mxu0 0
  %902 = vmatmul.mubr.bf16.gmra.mxu0 %v816
  %v903 = vpop.f32.mrf.mxu0
  %v904 = vadd.f32 0.0, %v903
  %v905 = vpop.f32.mrf.mxu0
  %v906 = vpop.f32.mrf.mxu0
  %v907 = vadd.f32 0.0, %v906
  %v908 = vpop.f32.mrf.mxu0
  %909 = vmatprep.mubr.bf16.mxu0 0
  %910 = vmatmul.mubr.bf16.gmra.mxu0 %v817
  %v911 = vpop.f32.mrf.mxu0
  %v912 = vadd.f32 0.0, %v911
  %v913 = vpop.f32.mrf.mxu0
  %v914 = vpop.f32.mrf.mxu0
  %v915 = vadd.f32 0.0, %v914
  %v916 = vpop.f32.mrf.mxu0
  %917 = vmatprep.mubr.bf16.mxu0 0
  %918 = vmatmul.mubr.bf16.gmra.mxu0 %v818
  %v919 = vpop.f32.mrf.mxu0
  %v920 = vadd.f32 0.0, %v919
  %v921 = vpop.f32.mrf.mxu0
  %v922 = vpop.f32.mrf.mxu0
  %v923 = vadd.f32 0.0, %v922
  %v924 = vpop.f32.mrf.mxu0
  %925 = vmatprep.mubr.bf16.mxu0 0
  %926 = vmatmul.mubr.bf16.gmra.mxu0 %v819
  %v927 = vpop.f32.mrf.mxu0
  %v928 = vadd.f32 0.0, %v927
  %v929 = vpop.f32.mrf.mxu0
  %v930 = vpop.f32.mrf.mxu0
  %v931 = vadd.f32 0.0, %v930
  %v932 = vpop.f32.mrf.mxu0
  %933 = vmatprep.mubr.bf16.mxu0 0
  %934 = vmatmul.mubr.bf16.gmra.mxu0 %v820
  %v935 = vpop.f32.mrf.mxu0
  %v936 = vadd.f32 0.0, %v935
  %v937 = vpop.f32.mrf.mxu0
  %v938 = vpop.f32.mrf.mxu0
  %v939 = vadd.f32 0.0, %v938
  %v940 = vpop.f32.mrf.mxu0
  %941 = vdwg.mxu0
  %s942 = scalar_lea.vmem %s1, 128
  %v943 = vld [vmem:[%s942] sm:$0xff]
  %v944 = vld [vmem:[%s942 + $0x8] sm:$0xff]
  %v945 = vld [vmem:[%s942 + $0x10] sm:$0xff]
  %v946 = vld [vmem:[%s942 + $0x18] sm:$0xff]
  %v947 = vld [vmem:[%s942 + $0x20] sm:$0xff]
  %v948 = vld [vmem:[%s942 + $0x28] sm:$0xff]
  %v949 = vld [vmem:[%s942 + $0x30] sm:$0xff]
  %v950 = vld [vmem:[%s942 + $0x38] sm:$0xff]
  %v951 = vld [vmem:[%s942 + $0x40] sm:$0xff]
  %v952 = vld [vmem:[%s942 + $0x48] sm:$0xff]
  %v953 = vld [vmem:[%s942 + $0x50] sm:$0xff]
  %v954 = vld [vmem:[%s942 + $0x58] sm:$0xff]
  %v955 = vld [vmem:[%s942 + $0x60] sm:$0xff]
  %v956 = vld [vmem:[%s942 + $0x68] sm:$0xff]
  %v957 = vld [vmem:[%s942 + $0x70] sm:$0xff]
  %v958 = vld [vmem:[%s942 + $0x78] sm:$0xff]
  %959 = vrot.lane.b32.xlu0 %v475, 120
  %v960 = vpop.permute.xlu0 %959
  %961 = vrot.lane.b32.xlu0 %v476, 120
  %v962 = vpop.permute.xlu0 %961
  %963 = vrot.lane.b32.xlu0 %v477, 120
  %v964 = vpop.permute.xlu0 %963
  %965 = vrot.lane.b32.xlu0 %v478, 120
  %v966 = vpop.permute.xlu0 %965
  %967 = vrot.lane.b32.xlu0 %v479, 120
  %v968 = vpop.permute.xlu0 %967
  %969 = vrot.lane.b32.xlu0 %v480, 120
  %v970 = vpop.permute.xlu0 %969
  %971 = vrot.lane.b32.xlu0 %v481, 120
  %v972 = vpop.permute.xlu0 %971
  %973 = vrot.lane.b32.xlu0 %v482, 120
  %v974 = vpop.permute.xlu0 %973
  %975 = vrot.lane.b32.xlu0 %v475, 88
  %v976 = vpop.permute.xlu0 %975
  %977 = vrot.lane.b32.xlu0 %v476, 88
  %v978 = vpop.permute.xlu0 %977
  %979 = vrot.lane.b32.xlu0 %v477, 88
  %v980 = vpop.permute.xlu0 %979
  %981 = vrot.lane.b32.xlu0 %v478, 88
  %v982 = vpop.permute.xlu0 %981
  %983 = vrot.lane.b32.xlu0 %v479, 88
  %v984 = vpop.permute.xlu0 %983
  %985 = vrot.lane.b32.xlu0 %v480, 88
  %v986 = vpop.permute.xlu0 %985
  %987 = vrot.lane.b32.xlu0 %v481, 88
  %v988 = vpop.permute.xlu0 %987
  %989 = vrot.lane.b32.xlu0 %v482, 88
  %v990 = vpop.permute.xlu0 %989
  %v992 = vsel %vm523, %v960, 0
  %v995 = vsel %vm523, %v962, 0
  %v998 = vsel %vm523, %v964, 0
  %v1001 = vsel %vm523, %v966, 0
  %v1004 = vsel %vm523, %v968, 0
  %v1007 = vsel %vm523, %v970, 0
  %v1010 = vsel %vm523, %v972, 0
  %v1013 = vsel %vm523, %v974, 0
  %v1016 = vsel %vm523, %v976, 0
  %v1019 = vsel %vm523, %v978, 0
  %v1022 = vsel %vm523, %v980, 0
  %v1025 = vsel %vm523, %v982, 0
  %v1028 = vsel %vm523, %v984, 0
  %v1031 = vsel %vm523, %v986, 0
  %v1034 = vsel %vm523, %v988, 0
  %v1037 = vsel %vm523, %v990, 0
  %1039 = vmatprep.subr.bf16.mxu0 0
  %1040 = vmatpush1.bf16.xpose.msra.mxu0 %v1037
  %1041 = vmatprep.subr.bf16.mxu0 0
  %1042 = vmatpush1.bf16.xpose.msra.mxu0 %v1034
  %1043 = vmatprep.subr.bf16.mxu0 0
  %1044 = vmatpush1.bf16.xpose.msra.mxu0 %v1031
  %1045 = vmatprep.subr.bf16.mxu0 0
  %1046 = vmatpush1.bf16.xpose.msra.mxu0 %v1028
  %1047 = vmatprep.subr.bf16.mxu0 0
  %1048 = vmatpush1.bf16.xpose.msra.mxu0 %v1025
  %1049 = vmatprep.subr.bf16.mxu0 0
  %1050 = vmatpush1.bf16.xpose.msra.mxu0 %v1022
  %1051 = vmatprep.subr.bf16.mxu0 0
  %1052 = vmatpush1.bf16.xpose.msra.mxu0 %v1019
  %1053 = vmatprep.subr.bf16.mxu0 0
  %1054 = vmatpush1.bf16.xpose.msra.mxu0 %v1016
  %1055 = vmatprep.subr.bf16.mxu0 0
  %1056 = vmatpush2.bf16.xpose.msra.mxu0 0
  %1057 = vmatprep.subr.bf16.mxu0 0
  %1058 = vmatpush2.bf16.xpose.msra.mxu0 0
  %1059 = vmatprep.subr.bf16.mxu0 0
  %1060 = vmatpush2.bf16.xpose.msra.mxu0 0
  %1061 = vmatprep.subr.bf16.mxu0 0
  %1062 = vmatpush2.bf16.xpose.msra.mxu0 0
  %1063 = vmatprep.subr.bf16.mxu0 0
  %1064 = vmatpush2.bf16.xpose.msra.mxu0 0
  %1065 = vmatprep.subr.bf16.mxu0 0
  %1066 = vmatpush2.bf16.xpose.msra.mxu0 0
  %1067 = vmatprep.subr.bf16.mxu0 0
  %1068 = vmatpush2.bf16.xpose.msra.mxu0 0
  %1069 = vmatprep.subr.bf16.mxu0 0
  %1070 = vmatpush2.bf16.xpose.msra.mxu0 0
  %1071 = vmatprep.mubr.bf16.mxu0 0
  %1072 = vmatmul.mubr.bf16.gmra.mxu0 %v992
  %v1073 = vpop.f32.mrf.mxu0
  %v1074 = vadd.f32 %v943, %v1073
  %v1075 = vpop.f32.mrf.mxu0
  %v1076 = vpop.f32.mrf.mxu0
  %v1077 = vadd.f32 %v944, %v1076
  %v1078 = vpop.f32.mrf.mxu0
  %1079 = vmatprep.mubr.bf16.mxu0 0
  %1080 = vmatmul.mubr.bf16.gmra.mxu0 %v995
  %v1081 = vpop.f32.mrf.mxu0
  %v1082 = vadd.f32 %v945, %v1081
  %v1083 = vpop.f32.mrf.mxu0
  %v1084 = vpop.f32.mrf.mxu0
  %v1085 = vadd.f32 %v946, %v1084
  %v1086 = vpop.f32.mrf.mxu0
  %1087 = vmatprep.mubr.bf16.mxu0 0
  %1088 = vmatmul.mubr.bf16.gmra.mxu0 %v998
  %v1089 = vpop.f32.mrf.mxu0
  %v1090 = vadd.f32 %v947, %v1089
  %v1091 = vpop.f32.mrf.mxu0
  %v1092 = vpop.f32.mrf.mxu0
  %v1093 = vadd.f32 %v948, %v1092
  %v1094 = vpop.f32.mrf.mxu0
  %1095 = vmatprep.mubr.bf16.mxu0 0
  %1096 = vmatmul.mubr.bf16.gmra.mxu0 %v1001
  %v1097 = vpop.f32.mrf.mxu0
  %v1098 = vadd.f32 %v949, %v1097
  %v1099 = vpop.f32.mrf.mxu0
  %v1100 = vpop.f32.mrf.mxu0
  %v1101 = vadd.f32 %v950, %v1100
  %v1102 = vpop.f32.mrf.mxu0
  %1103 = vmatprep.mubr.bf16.mxu0 0
  %1104 = vmatmul.mubr.bf16.gmra.mxu0 %v1004
  %v1105 = vpop.f32.mrf.mxu0
  %v1106 = vadd.f32 %v951, %v1105
  %v1107 = vpop.f32.mrf.mxu0
  %v1108 = vpop.f32.mrf.mxu0
  %v1109 = vadd.f32 %v952, %v1108
  %v1110 = vpop.f32.mrf.mxu0
  %1111 = vmatprep.mubr.bf16.mxu0 0
  %1112 = vmatmul.mubr.bf16.gmra.mxu0 %v1007
  %v1113 = vpop.f32.mrf.mxu0
  %v1114 = vadd.f32 %v953, %v1113
  %v1115 = vpop.f32.mrf.mxu0
  %v1116 = vpop.f32.mrf.mxu0
  %v1117 = vadd.f32 %v954, %v1116
  %v1118 = vpop.f32.mrf.mxu0
  %1119 = vmatprep.mubr.bf16.mxu0 0
  %1120 = vmatmul.mubr.bf16.gmra.mxu0 %v1010
  %v1121 = vpop.f32.mrf.mxu0
  %v1122 = vadd.f32 %v955, %v1121
  %v1123 = vpop.f32.mrf.mxu0
  %v1124 = vpop.f32.mrf.mxu0
  %v1125 = vadd.f32 %v956, %v1124
  %v1126 = vpop.f32.mrf.mxu0
  %1127 = vmatprep.mubr.bf16.mxu0 0
  %1128 = vmatmul.mubr.bf16.gmra.mxu0 %v1013
  %v1129 = vpop.f32.mrf.mxu0
  %v1130 = vadd.f32 %v957, %v1129
  %v1131 = vpop.f32.mrf.mxu0
  %v1132 = vpop.f32.mrf.mxu0
  %v1133 = vadd.f32 %v958, %v1132
  %v1134 = vpop.f32.mrf.mxu0
  %1135 = vdwg.mxu0
  %1136 = vmax.xlane.f32.xlu0 %v1074
  %v1137 = vpop.xlane.xlu0 %1136
  %1138 = vmax.xlane.f32.xlu0 %v1077
  %v1139 = vpop.xlane.xlu0 %1138
  %1140 = vmax.xlane.f32.xlu0 %v1082
  %v1141 = vpop.xlane.xlu0 %1140
  %1142 = vmax.xlane.f32.xlu0 %v1085
  %v1143 = vpop.xlane.xlu0 %1142
  %1144 = vmax.xlane.f32.xlu0 %v1090
  %v1145 = vpop.xlane.xlu0 %1144
  %1146 = vmax.xlane.f32.xlu0 %v1093
  %v1147 = vpop.xlane.xlu0 %1146
  %1148 = vmax.xlane.f32.xlu0 %v1098
  %v1149 = vpop.xlane.xlu0 %1148
  %1150 = vmax.xlane.f32.xlu0 %v1101
  %v1151 = vpop.xlane.xlu0 %1150
  %1152 = vmax.xlane.f32.xlu0 %v1106
  %v1153 = vpop.xlane.xlu0 %1152
  %1154 = vmax.xlane.f32.xlu0 %v1109
  %v1155 = vpop.xlane.xlu0 %1154
  %1156 = vmax.xlane.f32.xlu0 %v1114
  %v1157 = vpop.xlane.xlu0 %1156
  %1158 = vmax.xlane.f32.xlu0 %v1117
  %v1159 = vpop.xlane.xlu0 %1158
  %1160 = vmax.xlane.f32.xlu0 %v1122
  %v1161 = vpop.xlane.xlu0 %1160
  %1162 = vmax.xlane.f32.xlu0 %v1125
  %v1163 = vpop.xlane.xlu0 %1162
  %1164 = vmax.xlane.f32.xlu0 %v1130
  %v1165 = vpop.xlane.xlu0 %1164
  %1166 = vmax.xlane.f32.xlu0 %v1133
  %v1167 = vpop.xlane.xlu0 %1166
  %v1168 = vsub.f32 %v1074, %v1137
  %v1169 = vsub.f32 %v1077, %v1139
  %v1170 = vsub.f32 %v1082, %v1141
  %v1171 = vsub.f32 %v1085, %v1143
  %v1172 = vsub.f32 %v1090, %v1145
  %v1173 = vsub.f32 %v1093, %v1147
  %v1174 = vsub.f32 %v1098, %v1149
  %v1175 = vsub.f32 %v1101, %v1151
  %v1176 = vsub.f32 %v1106, %v1153
  %v1177 = vsub.f32 %v1109, %v1155
  %v1178 = vsub.f32 %v1114, %v1157
  %v1179 = vsub.f32 %v1117, %v1159
  %v1180 = vsub.f32 %v1122, %v1161
  %v1181 = vsub.f32 %v1125, %v1163
  %v1182 = vsub.f32 %v1130, %v1165
  %v1183 = vsub.f32 %v1133, %v1167
  %v1184 = vmul.f32 %v1168, 1.442695
  %v1185 = vpow.pop %v1184
  %v1186 = vmul.f32 %v1169, 1.442695
  %v1187 = vpow.pop %v1186
  %v1188 = vmul.f32 %v1170, 1.442695
  %v1189 = vpow.pop %v1188
  %v1190 = vmul.f32 %v1171, 1.442695
  %v1191 = vpow.pop %v1190
  %v1192 = vmul.f32 %v1172, 1.442695
  %v1193 = vpow.pop %v1192
  %v1194 = vmul.f32 %v1173, 1.442695
  %v1195 = vpow.pop %v1194
  %v1196 = vmul.f32 %v1174, 1.442695
  %v1197 = vpow.pop %v1196
  %v1198 = vmul.f32 %v1175, 1.442695
  %v1199 = vpow.pop %v1198
  %v1200 = vmul.f32 %v1176, 1.442695
  %v1201 = vpow.pop %v1200
  %v1202 = vmul.f32 %v1177, 1.442695
  %v1203 = vpow.pop %v1202
  %v1204 = vmul.f32 %v1178, 1.442695
  %v1205 = vpow.pop %v1204
  %v1206 = vmul.f32 %v1179, 1.442695
  %v1207 = vpow.pop %v1206
  %v1208 = vmul.f32 %v1180, 1.442695
  %v1209 = vpow.pop %v1208
  %v1210 = vmul.f32 %v1181, 1.442695
  %v1211 = vpow.pop %v1210
  %v1212 = vmul.f32 %v1182, 1.442695
  %v1213 = vpow.pop %v1212
  %v1214 = vmul.f32 %v1183, 1.442695
  %v1215 = vpow.pop %v1214
  %1216 = vadd.xlane.f32.xlu0 %v1185
  %v1217 = vpop.xlane.xlu0 %1216
  %1218 = vadd.xlane.f32.xlu0 %v1187
  %v1219 = vpop.xlane.xlu0 %1218
  %1220 = vadd.xlane.f32.xlu0 %v1189
  %v1221 = vpop.xlane.xlu0 %1220
  %1222 = vadd.xlane.f32.xlu0 %v1191
  %v1223 = vpop.xlane.xlu0 %1222
  %1224 = vadd.xlane.f32.xlu0 %v1193
  %v1225 = vpop.xlane.xlu0 %1224
  %1226 = vadd.xlane.f32.xlu0 %v1195
  %v1227 = vpop.xlane.xlu0 %1226
  %1228 = vadd.xlane.f32.xlu0 %v1197
  %v1229 = vpop.xlane.xlu0 %1228
  %1230 = vadd.xlane.f32.xlu0 %v1199
  %v1231 = vpop.xlane.xlu0 %1230
  %1232 = vadd.xlane.f32.xlu0 %v1201
  %v1233 = vpop.xlane.xlu0 %1232
  %1234 = vadd.xlane.f32.xlu0 %v1203
  %v1235 = vpop.xlane.xlu0 %1234
  %1236 = vadd.xlane.f32.xlu0 %v1205
  %v1237 = vpop.xlane.xlu0 %1236
  %1238 = vadd.xlane.f32.xlu0 %v1207
  %v1239 = vpop.xlane.xlu0 %1238
  %1240 = vadd.xlane.f32.xlu0 %v1209
  %v1241 = vpop.xlane.xlu0 %1240
  %1242 = vadd.xlane.f32.xlu0 %v1211
  %v1243 = vpop.xlane.xlu0 %1242
  %1244 = vadd.xlane.f32.xlu0 %v1213
  %v1245 = vpop.xlane.xlu0 %1244
  %1246 = vadd.xlane.f32.xlu0 %v1215
  %v1247 = vpop.xlane.xlu0 %1246
  %v1248 = vrcp.pop %v1217
  %v1249 = vrcp.pop %v1219
  %v1250 = vrcp.pop %v1221
  %v1251 = vrcp.pop %v1223
  %v1252 = vrcp.pop %v1225
  %v1253 = vrcp.pop %v1227
  %v1254 = vrcp.pop %v1229
  %v1255 = vrcp.pop %v1231
  %v1256 = vrcp.pop %v1233
  %v1257 = vrcp.pop %v1235
  %v1258 = vrcp.pop %v1237
  %v1259 = vrcp.pop %v1239
  %v1260 = vrcp.pop %v1241
  %v1261 = vrcp.pop %v1243
  %v1262 = vrcp.pop %v1245
  %v1263 = vrcp.pop %v1247
  %v1264 = vmul.f32 %v1185, %v1248
  %v1265 = vmul.f32 %v1187, %v1249
  %v1266 = vmul.f32 %v1189, %v1250
  %v1267 = vmul.f32 %v1191, %v1251
  %v1268 = vmul.f32 %v1193, %v1252
  %v1269 = vmul.f32 %v1195, %v1253
  %v1270 = vmul.f32 %v1197, %v1254
  %v1271 = vmul.f32 %v1199, %v1255
  %v1272 = vmul.f32 %v1201, %v1256
  %v1273 = vmul.f32 %v1203, %v1257
  %v1274 = vmul.f32 %v1205, %v1258
  %v1275 = vmul.f32 %v1207, %v1259
  %v1276 = vmul.f32 %v1209, %v1260
  %v1277 = vmul.f32 %v1211, %v1261
  %v1278 = vmul.f32 %v1213, %v1262
  %v1279 = vmul.f32 %v1215, %v1263
  %v1280 = vpack.c.bf16 %v1265, %v1264
  %v1281 = vpack.c.bf16 %v1267, %v1266
  %v1282 = vpack.c.bf16 %v1269, %v1268
  %v1283 = vpack.c.bf16 %v1271, %v1270
  %v1284 = vpack.c.bf16 %v1273, %v1272
  %v1285 = vpack.c.bf16 %v1275, %v1274
  %v1286 = vpack.c.bf16 %v1277, %v1276
  %v1287 = vpack.c.bf16 %v1279, %v1278
  %1288 = vrot.lane.b32.xlu0 %v475, 56
  %v1289 = vpop.permute.xlu0 %1288
  %1290 = vrot.lane.b32.xlu0 %v476, 56
  %v1291 = vpop.permute.xlu0 %1290
  %1292 = vrot.lane.b32.xlu0 %v477, 56
  %v1293 = vpop.permute.xlu0 %1292
  %1294 = vrot.lane.b32.xlu0 %v478, 56
  %v1295 = vpop.permute.xlu0 %1294
  %1296 = vrot.lane.b32.xlu0 %v479, 56
  %v1297 = vpop.permute.xlu0 %1296
  %1298 = vrot.lane.b32.xlu0 %v480, 56
  %v1299 = vpop.permute.xlu0 %1298
  %1300 = vrot.lane.b32.xlu0 %v481, 56
  %v1301 = vpop.permute.xlu0 %1300
  %1302 = vrot.lane.b32.xlu0 %v482, 56
  %v1303 = vpop.permute.xlu0 %1302
  %1312 = vmatprep.subr.bf16.mxu0 0
  %1313 = vmatpush1.bf16.msra.mxu0 %v1303
  %1314 = vmatprep.subr.bf16.mxu0 0
  %1315 = vmatpush1.bf16.msra.mxu0 %v1301
  %1316 = vmatprep.subr.bf16.mxu0 0
  %1317 = vmatpush1.bf16.msra.mxu0 %v1299
  %1318 = vmatprep.subr.bf16.mxu0 0
  %1319 = vmatpush1.bf16.msra.mxu0 %v1297
  %1320 = vmatprep.subr.bf16.mxu0 0
  %1321 = vmatpush1.bf16.msra.mxu0 %v1295
  %1322 = vmatprep.subr.bf16.mxu0 0
  %1323 = vmatpush1.bf16.msra.mxu0 %v1293
  %1324 = vmatprep.subr.bf16.mxu0 0
  %1325 = vmatpush1.bf16.msra.mxu0 %v1291
  %1326 = vmatprep.subr.bf16.mxu0 0
  %1327 = vmatpush1.bf16.msra.mxu0 %v1289
  %1328 = vmatprep.subr.bf16.mxu0 0
  %1329 = vmatpush2.bf16.msra.mxu0 0
  %1330 = vmatprep.subr.bf16.mxu0 0
  %1331 = vmatpush2.bf16.msra.mxu0 0
  %1332 = vmatprep.subr.bf16.mxu0 0
  %1333 = vmatpush2.bf16.msra.mxu0 0
  %1334 = vmatprep.subr.bf16.mxu0 0
  %1335 = vmatpush2.bf16.msra.mxu0 0
  %1336 = vmatprep.subr.bf16.mxu0 0
  %1337 = vmatpush2.bf16.msra.mxu0 0
  %1338 = vmatprep.subr.bf16.mxu0 0
  %1339 = vmatpush2.bf16.msra.mxu0 0
  %1340 = vmatprep.subr.bf16.mxu0 0
  %1341 = vmatpush2.bf16.msra.mxu0 0
  %1342 = vmatprep.subr.bf16.mxu0 0
  %1343 = vmatpush2.bf16.msra.mxu0 0
  %1344 = vmatprep.mubr.bf16.mxu0 0
  %1345 = vmatmul.mubr.bf16.gmra.mxu0 %v1280
  %v1346 = vpop.f32.mrf.mxu0
  %v1347 = vadd.f32 0.0, %v1346
  %v1348 = vpop.f32.mrf.mxu0
  %v1349 = vpop.f32.mrf.mxu0
  %v1350 = vadd.f32 0.0, %v1349
  %v1351 = vpop.f32.mrf.mxu0
  %1352 = vmatprep.mubr.bf16.mxu0 0
  %1353 = vmatmul.mubr.bf16.gmra.mxu0 %v1281
  %v1354 = vpop.f32.mrf.mxu0
  %v1355 = vadd.f32 0.0, %v1354
  %v1356 = vpop.f32.mrf.mxu0
  %v1357 = vpop.f32.mrf.mxu0
  %v1358 = vadd.f32 0.0, %v1357
  %v1359 = vpop.f32.mrf.mxu0
  %1360 = vmatprep.mubr.bf16.mxu0 0
  %1361 = vmatmul.mubr.bf16.gmra.mxu0 %v1282
  %v1362 = vpop.f32.mrf.mxu0
  %v1363 = vadd.f32 0.0, %v1362
  %v1364 = vpop.f32.mrf.mxu0
  %v1365 = vpop.f32.mrf.mxu0
  %v1366 = vadd.f32 0.0, %v1365
  %v1367 = vpop.f32.mrf.mxu0
  %1368 = vmatprep.mubr.bf16.mxu0 0
  %1369 = vmatmul.mubr.bf16.gmra.mxu0 %v1283
  %v1370 = vpop.f32.mrf.mxu0
  %v1371 = vadd.f32 0.0, %v1370
  %v1372 = vpop.f32.mrf.mxu0
  %v1373 = vpop.f32.mrf.mxu0
  %v1374 = vadd.f32 0.0, %v1373
  %v1375 = vpop.f32.mrf.mxu0
  %1376 = vmatprep.mubr.bf16.mxu0 0
  %1377 = vmatmul.mubr.bf16.gmra.mxu0 %v1284
  %v1378 = vpop.f32.mrf.mxu0
  %v1379 = vadd.f32 0.0, %v1378
  %v1380 = vpop.f32.mrf.mxu0
  %v1381 = vpop.f32.mrf.mxu0
  %v1382 = vadd.f32 0.0, %v1381
  %v1383 = vpop.f32.mrf.mxu0
  %1384 = vmatprep.mubr.bf16.mxu0 0
  %1385 = vmatmul.mubr.bf16.gmra.mxu0 %v1285
  %v1386 = vpop.f32.mrf.mxu0
  %v1387 = vadd.f32 0.0, %v1386
  %v1388 = vpop.f32.mrf.mxu0
  %v1389 = vpop.f32.mrf.mxu0
  %v1390 = vadd.f32 0.0, %v1389
  %v1391 = vpop.f32.mrf.mxu0
  %1392 = vmatprep.mubr.bf16.mxu0 0
  %1393 = vmatmul.mubr.bf16.gmra.mxu0 %v1286
  %v1394 = vpop.f32.mrf.mxu0
  %v1395 = vadd.f32 0.0, %v1394
  %v1396 = vpop.f32.mrf.mxu0
  %v1397 = vpop.f32.mrf.mxu0
  %v1398 = vadd.f32 0.0, %v1397
  %v1399 = vpop.f32.mrf.mxu0
  %1400 = vmatprep.mubr.bf16.mxu0 0
  %1401 = vmatmul.mubr.bf16.gmra.mxu0 %v1287
  %v1402 = vpop.f32.mrf.mxu0
  %v1403 = vadd.f32 0.0, %v1402
  %v1404 = vpop.f32.mrf.mxu0
  %v1405 = vpop.f32.mrf.mxu0
  %v1406 = vadd.f32 0.0, %v1405
  %v1407 = vpop.f32.mrf.mxu0
  %1408 = vdwg.mxu0
  %s1409 = scalar_lea.vmem %s1, 256
  %v1410 = vld [vmem:[%s1409] sm:$0xff]
  %v1411 = vld [vmem:[%s1409 + $0x8] sm:$0xff]
  %v1412 = vld [vmem:[%s1409 + $0x10] sm:$0xff]
  %v1413 = vld [vmem:[%s1409 + $0x18] sm:$0xff]
  %v1414 = vld [vmem:[%s1409 + $0x20] sm:$0xff]
  %v1415 = vld [vmem:[%s1409 + $0x28] sm:$0xff]
  %v1416 = vld [vmem:[%s1409 + $0x30] sm:$0xff]
  %v1417 = vld [vmem:[%s1409 + $0x38] sm:$0xff]
  %v1418 = vld [vmem:[%s1409 + $0x40] sm:$0xff]
  %v1419 = vld [vmem:[%s1409 + $0x48] sm:$0xff]
  %v1420 = vld [vmem:[%s1409 + $0x50] sm:$0xff]
  %v1421 = vld [vmem:[%s1409 + $0x58] sm:$0xff]
  %v1422 = vld [vmem:[%s1409 + $0x60] sm:$0xff]
  %v1423 = vld [vmem:[%s1409 + $0x68] sm:$0xff]
  %v1424 = vld [vmem:[%s1409 + $0x70] sm:$0xff]
  %v1425 = vld [vmem:[%s1409 + $0x78] sm:$0xff]
  %1426 = vrot.lane.b32.xlu0 %v475, 112
  %v1427 = vpop.permute.xlu0 %1426
  %1428 = vrot.lane.b32.xlu0 %v476, 112
  %v1429 = vpop.permute.xlu0 %1428
  %1430 = vrot.lane.b32.xlu0 %v477, 112
  %v1431 = vpop.permute.xlu0 %1430
  %1432 = vrot.lane.b32.xlu0 %v478, 112
  %v1433 = vpop.permute.xlu0 %1432
  %1434 = vrot.lane.b32.xlu0 %v479, 112
  %v1435 = vpop.permute.xlu0 %1434
  %1436 = vrot.lane.b32.xlu0 %v480, 112
  %v1437 = vpop.permute.xlu0 %1436
  %1438 = vrot.lane.b32.xlu0 %v481, 112
  %v1439 = vpop.permute.xlu0 %1438
  %1440 = vrot.lane.b32.xlu0 %v482, 112
  %v1441 = vpop.permute.xlu0 %1440
  %1442 = vrot.lane.b32.xlu0 %v475, 80
  %v1443 = vpop.permute.xlu0 %1442
  %1444 = vrot.lane.b32.xlu0 %v476, 80
  %v1445 = vpop.permute.xlu0 %1444
  %1446 = vrot.lane.b32.xlu0 %v477, 80
  %v1447 = vpop.permute.xlu0 %1446
  %1448 = vrot.lane.b32.xlu0 %v478, 80
  %v1449 = vpop.permute.xlu0 %1448
  %1450 = vrot.lane.b32.xlu0 %v479, 80
  %v1451 = vpop.permute.xlu0 %1450
  %1452 = vrot.lane.b32.xlu0 %v480, 80
  %v1453 = vpop.permute.xlu0 %1452
  %1454 = vrot.lane.b32.xlu0 %v481, 80
  %v1455 = vpop.permute.xlu0 %1454
  %1456 = vrot.lane.b32.xlu0 %v482, 80
  %v1457 = vpop.permute.xlu0 %1456
  %v1459 = vsel %vm523, %v1427, 0
  %v1462 = vsel %vm523, %v1429, 0
  %v1465 = vsel %vm523, %v1431, 0
  %v1468 = vsel %vm523, %v1433, 0
  %v1471 = vsel %vm523, %v1435, 0
  %v1474 = vsel %vm523, %v1437, 0
  %v1477 = vsel %vm523, %v1439, 0
  %v1480 = vsel %vm523, %v1441, 0
  %v1483 = vsel %vm523, %v1443, 0
  %v1486 = vsel %vm523, %v1445, 0
  %v1489 = vsel %vm523, %v1447, 0
  %v1492 = vsel %vm523, %v1449, 0
  %v1495 = vsel %vm523, %v1451, 0
  %v1498 = vsel %vm523, %v1453, 0
  %v1501 = vsel %vm523, %v1455, 0
  %v1504 = vsel %vm523, %v1457, 0
  %1506 = vmatprep.subr.bf16.mxu0 0
  %1507 = vmatpush1.bf16.xpose.msra.mxu0 %v1504
  %1508 = vmatprep.subr.bf16.mxu0 0
  %1509 = vmatpush1.bf16.xpose.msra.mxu0 %v1501
  %1510 = vmatprep.subr.bf16.mxu0 0
  %1511 = vmatpush1.bf16.xpose.msra.mxu0 %v1498
  %1512 = vmatprep.subr.bf16.mxu0 0
  %1513 = vmatpush1.bf16.xpose.msra.mxu0 %v1495
  %1514 = vmatprep.subr.bf16.mxu0 0
  %1515 = vmatpush1.bf16.xpose.msra.mxu0 %v1492
  %1516 = vmatprep.subr.bf16.mxu0 0
  %1517 = vmatpush1.bf16.xpose.msra.mxu0 %v1489
  %1518 = vmatprep.subr.bf16.mxu0 0
  %1519 = vmatpush1.bf16.xpose.msra.mxu0 %v1486
  %1520 = vmatprep.subr.bf16.mxu0 0
  %1521 = vmatpush1.bf16.xpose.msra.mxu0 %v1483
  %1522 = vmatprep.subr.bf16.mxu0 0
  %1523 = vmatpush2.bf16.xpose.msra.mxu0 0
  %1524 = vmatprep.subr.bf16.mxu0 0
  %1525 = vmatpush2.bf16.xpose.msra.mxu0 0
  %1526 = vmatprep.subr.bf16.mxu0 0
  %1527 = vmatpush2.bf16.xpose.msra.mxu0 0
  %1528 = vmatprep.subr.bf16.mxu0 0
  %1529 = vmatpush2.bf16.xpose.msra.mxu0 0
  %1530 = vmatprep.subr.bf16.mxu0 0
  %1531 = vmatpush2.bf16.xpose.msra.mxu0 0
  %1532 = vmatprep.subr.bf16.mxu0 0
  %1533 = vmatpush2.bf16.xpose.msra.mxu0 0
  %1534 = vmatprep.subr.bf16.mxu0 0
  %1535 = vmatpush2.bf16.xpose.msra.mxu0 0
  %1536 = vmatprep.subr.bf16.mxu0 0
  %1537 = vmatpush2.bf16.xpose.msra.mxu0 0
  %1538 = vmatprep.mubr.bf16.mxu0 0
  %1539 = vmatmul.mubr.bf16.gmra.mxu0 %v1459
  %v1540 = vpop.f32.mrf.mxu0
  %v1541 = vadd.f32 %v1410, %v1540
  %v1542 = vpop.f32.mrf.mxu0
  %v1543 = vpop.f32.mrf.mxu0
  %v1544 = vadd.f32 %v1411, %v1543
  %v1545 = vpop.f32.mrf.mxu0
  %1546 = vmatprep.mubr.bf16.mxu0 0
  %1547 = vmatmul.mubr.bf16.gmra.mxu0 %v1462
  %v1548 = vpop.f32.mrf.mxu0
  %v1549 = vadd.f32 %v1412, %v1548
  %v1550 = vpop.f32.mrf.mxu0
  %v1551 = vpop.f32.mrf.mxu0
  %v1552 = vadd.f32 %v1413, %v1551
  %v1553 = vpop.f32.mrf.mxu0
  %1554 = vmatprep.mubr.bf16.mxu0 0
  %1555 = vmatmul.mubr.bf16.gmra.mxu0 %v1465
  %v1556 = vpop.f32.mrf.mxu0
  %v1557 = vadd.f32 %v1414, %v1556
  %v1558 = vpop.f32.mrf.mxu0
  %v1559 = vpop.f32.mrf.mxu0
  %v1560 = vadd.f32 %v1415, %v1559
  %v1561 = vpop.f32.mrf.mxu0
  %1562 = vmatprep.mubr.bf16.mxu0 0
  %1563 = vmatmul.mubr.bf16.gmra.mxu0 %v1468
  %v1564 = vpop.f32.mrf.mxu0
  %v1565 = vadd.f32 %v1416, %v1564
  %v1566 = vpop.f32.mrf.mxu0
  %v1567 = vpop.f32.mrf.mxu0
  %v1568 = vadd.f32 %v1417, %v1567
  %v1569 = vpop.f32.mrf.mxu0
  %1570 = vmatprep.mubr.bf16.mxu0 0
  %1571 = vmatmul.mubr.bf16.gmra.mxu0 %v1471
  %v1572 = vpop.f32.mrf.mxu0
  %v1573 = vadd.f32 %v1418, %v1572
  %v1574 = vpop.f32.mrf.mxu0
  %v1575 = vpop.f32.mrf.mxu0
  %v1576 = vadd.f32 %v1419, %v1575
  %v1577 = vpop.f32.mrf.mxu0
  %1578 = vmatprep.mubr.bf16.mxu0 0
  %1579 = vmatmul.mubr.bf16.gmra.mxu0 %v1474
  %v1580 = vpop.f32.mrf.mxu0
  %v1581 = vadd.f32 %v1420, %v1580
  %v1582 = vpop.f32.mrf.mxu0
  %v1583 = vpop.f32.mrf.mxu0
  %v1584 = vadd.f32 %v1421, %v1583
  %v1585 = vpop.f32.mrf.mxu0
  %1586 = vmatprep.mubr.bf16.mxu0 0
  %1587 = vmatmul.mubr.bf16.gmra.mxu0 %v1477
  %v1588 = vpop.f32.mrf.mxu0
  %v1589 = vadd.f32 %v1422, %v1588
  %v1590 = vpop.f32.mrf.mxu0
  %v1591 = vpop.f32.mrf.mxu0
  %v1592 = vadd.f32 %v1423, %v1591
  %v1593 = vpop.f32.mrf.mxu0
  %1594 = vmatprep.mubr.bf16.mxu0 0
  %1595 = vmatmul.mubr.bf16.gmra.mxu0 %v1480
  %v1596 = vpop.f32.mrf.mxu0
  %v1597 = vadd.f32 %v1424, %v1596
  %v1598 = vpop.f32.mrf.mxu0
  %v1599 = vpop.f32.mrf.mxu0
  %v1600 = vadd.f32 %v1425, %v1599
  %v1601 = vpop.f32.mrf.mxu0
  %1602 = vdwg.mxu0
  %1603 = vmax.xlane.f32.xlu0 %v1541
  %v1604 = vpop.xlane.xlu0 %1603
  %1605 = vmax.xlane.f32.xlu0 %v1544
  %v1606 = vpop.xlane.xlu0 %1605
  %1607 = vmax.xlane.f32.xlu0 %v1549
  %v1608 = vpop.xlane.xlu0 %1607
  %1609 = vmax.xlane.f32.xlu0 %v1552
  %v1610 = vpop.xlane.xlu0 %1609
  %1611 = vmax.xlane.f32.xlu0 %v1557
  %v1612 = vpop.xlane.xlu0 %1611
  %1613 = vmax.xlane.f32.xlu0 %v1560
  %v1614 = vpop.xlane.xlu0 %1613
  %1615 = vmax.xlane.f32.xlu0 %v1565
  %v1616 = vpop.xlane.xlu0 %1615
  %1617 = vmax.xlane.f32.xlu0 %v1568
  %v1618 = vpop.xlane.xlu0 %1617
  %1619 = vmax.xlane.f32.xlu0 %v1573
  %v1620 = vpop.xlane.xlu0 %1619
  %1621 = vmax.xlane.f32.xlu0 %v1576
  %v1622 = vpop.xlane.xlu0 %1621
  %1623 = vmax.xlane.f32.xlu0 %v1581
  %v1624 = vpop.xlane.xlu0 %1623
  %1625 = vmax.xlane.f32.xlu0 %v1584
  %v1626 = vpop.xlane.xlu0 %1625
  %1627 = vmax.xlane.f32.xlu0 %v1589
  %v1628 = vpop.xlane.xlu0 %1627
  %1629 = vmax.xlane.f32.xlu0 %v1592
  %v1630 = vpop.xlane.xlu0 %1629
  %1631 = vmax.xlane.f32.xlu0 %v1597
  %v1632 = vpop.xlane.xlu0 %1631
  %1633 = vmax.xlane.f32.xlu0 %v1600
  %v1634 = vpop.xlane.xlu0 %1633
  %v1635 = vsub.f32 %v1541, %v1604
  %v1636 = vsub.f32 %v1544, %v1606
  %v1637 = vsub.f32 %v1549, %v1608
  %v1638 = vsub.f32 %v1552, %v1610
  %v1639 = vsub.f32 %v1557, %v1612
  %v1640 = vsub.f32 %v1560, %v1614
  %v1641 = vsub.f32 %v1565, %v1616
  %v1642 = vsub.f32 %v1568, %v1618
  %v1643 = vsub.f32 %v1573, %v1620
  %v1644 = vsub.f32 %v1576, %v1622
  %v1645 = vsub.f32 %v1581, %v1624
  %v1646 = vsub.f32 %v1584, %v1626
  %v1647 = vsub.f32 %v1589, %v1628
  %v1648 = vsub.f32 %v1592, %v1630
  %v1649 = vsub.f32 %v1597, %v1632
  %v1650 = vsub.f32 %v1600, %v1634
  %v1651 = vmul.f32 %v1635, 1.442695
  %v1652 = vpow.pop %v1651
  %v1653 = vmul.f32 %v1636, 1.442695
  %v1654 = vpow.pop %v1653
  %v1655 = vmul.f32 %v1637, 1.442695
  %v1656 = vpow.pop %v1655
  %v1657 = vmul.f32 %v1638, 1.442695
  %v1658 = vpow.pop %v1657
  %v1659 = vmul.f32 %v1639, 1.442695
  %v1660 = vpow.pop %v1659
  %v1661 = vmul.f32 %v1640, 1.442695
  %v1662 = vpow.pop %v1661
  %v1663 = vmul.f32 %v1641, 1.442695
  %v1664 = vpow.pop %v1663
  %v1665 = vmul.f32 %v1642, 1.442695
  %v1666 = vpow.pop %v1665
  %v1667 = vmul.f32 %v1643, 1.442695
  %v1668 = vpow.pop %v1667
  %v1669 = vmul.f32 %v1644, 1.442695
  %v1670 = vpow.pop %v1669
  %v1671 = vmul.f32 %v1645, 1.442695
  %v1672 = vpow.pop %v1671
  %v1673 = vmul.f32 %v1646, 1.442695
  %v1674 = vpow.pop %v1673
  %v1675 = vmul.f32 %v1647, 1.442695
  %v1676 = vpow.pop %v1675
  %v1677 = vmul.f32 %v1648, 1.442695
  %v1678 = vpow.pop %v1677
  %v1679 = vmul.f32 %v1649, 1.442695
  %v1680 = vpow.pop %v1679
  %v1681 = vmul.f32 %v1650, 1.442695
  %v1682 = vpow.pop %v1681
  %1683 = vadd.xlane.f32.xlu0 %v1652
  %v1684 = vpop.xlane.xlu0 %1683
  %1685 = vadd.xlane.f32.xlu0 %v1654
  %v1686 = vpop.xlane.xlu0 %1685
  %1687 = vadd.xlane.f32.xlu0 %v1656
  %v1688 = vpop.xlane.xlu0 %1687
  %1689 = vadd.xlane.f32.xlu0 %v1658
  %v1690 = vpop.xlane.xlu0 %1689
  %1691 = vadd.xlane.f32.xlu0 %v1660
  %v1692 = vpop.xlane.xlu0 %1691
  %1693 = vadd.xlane.f32.xlu0 %v1662
  %v1694 = vpop.xlane.xlu0 %1693
  %1695 = vadd.xlane.f32.xlu0 %v1664
  %v1696 = vpop.xlane.xlu0 %1695
  %1697 = vadd.xlane.f32.xlu0 %v1666
  %v1698 = vpop.xlane.xlu0 %1697
  %1699 = vadd.xlane.f32.xlu0 %v1668
  %v1700 = vpop.xlane.xlu0 %1699
  %1701 = vadd.xlane.f32.xlu0 %v1670
  %v1702 = vpop.xlane.xlu0 %1701
  %1703 = vadd.xlane.f32.xlu0 %v1672
  %v1704 = vpop.xlane.xlu0 %1703
  %1705 = vadd.xlane.f32.xlu0 %v1674
  %v1706 = vpop.xlane.xlu0 %1705
  %1707 = vadd.xlane.f32.xlu0 %v1676
  %v1708 = vpop.xlane.xlu0 %1707
  %1709 = vadd.xlane.f32.xlu0 %v1678
  %v1710 = vpop.xlane.xlu0 %1709
  %1711 = vadd.xlane.f32.xlu0 %v1680
  %v1712 = vpop.xlane.xlu0 %1711
  %1713 = vadd.xlane.f32.xlu0 %v1682
  %v1714 = vpop.xlane.xlu0 %1713
  %v1715 = vrcp.pop %v1684
  %v1716 = vrcp.pop %v1686
  %v1717 = vrcp.pop %v1688
  %v1718 = vrcp.pop %v1690
  %v1719 = vrcp.pop %v1692
  %v1720 = vrcp.pop %v1694
  %v1721 = vrcp.pop %v1696
  %v1722 = vrcp.pop %v1698
  %v1723 = vrcp.pop %v1700
  %v1724 = vrcp.pop %v1702
  %v1725 = vrcp.pop %v1704
  %v1726 = vrcp.pop %v1706
  %v1727 = vrcp.pop %v1708
  %v1728 = vrcp.pop %v1710
  %v1729 = vrcp.pop %v1712
  %v1730 = vrcp.pop %v1714
  %v1731 = vmul.f32 %v1652, %v1715
  %v1732 = vmul.f32 %v1654, %v1716
  %v1733 = vmul.f32 %v1656, %v1717
  %v1734 = vmul.f32 %v1658, %v1718
  %v1735 = vmul.f32 %v1660, %v1719
  %v1736 = vmul.f32 %v1662, %v1720
  %v1737 = vmul.f32 %v1664, %v1721
  %v1738 = vmul.f32 %v1666, %v1722
  %v1739 = vmul.f32 %v1668, %v1723
  %v1740 = vmul.f32 %v1670, %v1724
  %v1741 = vmul.f32 %v1672, %v1725
  %v1742 = vmul.f32 %v1674, %v1726
  %v1743 = vmul.f32 %v1676, %v1727
  %v1744 = vmul.f32 %v1678, %v1728
  %v1745 = vmul.f32 %v1680, %v1729
  %v1746 = vmul.f32 %v1682, %v1730
  %v1747 = vpack.c.bf16 %v1732, %v1731
  %v1748 = vpack.c.bf16 %v1734, %v1733
  %v1749 = vpack.c.bf16 %v1736, %v1735
  %v1750 = vpack.c.bf16 %v1738, %v1737
  %v1751 = vpack.c.bf16 %v1740, %v1739
  %v1752 = vpack.c.bf16 %v1742, %v1741
  %v1753 = vpack.c.bf16 %v1744, %v1743
  %v1754 = vpack.c.bf16 %v1746, %v1745
  %1755 = vrot.lane.b32.xlu0 %v475, 48
  %v1756 = vpop.permute.xlu0 %1755
  %1757 = vrot.lane.b32.xlu0 %v476, 48
  %v1758 = vpop.permute.xlu0 %1757
  %1759 = vrot.lane.b32.xlu0 %v477, 48
  %v1760 = vpop.permute.xlu0 %1759
  %1761 = vrot.lane.b32.xlu0 %v478, 48
  %v1762 = vpop.permute.xlu0 %1761
  %1763 = vrot.lane.b32.xlu0 %v479, 48
  %v1764 = vpop.permute.xlu0 %1763
  %1765 = vrot.lane.b32.xlu0 %v480, 48
  %v1766 = vpop.permute.xlu0 %1765
  %1767 = vrot.lane.b32.xlu0 %v481, 48
  %v1768 = vpop.permute.xlu0 %1767
  %1769 = vrot.lane.b32.xlu0 %v482, 48
  %v1770 = vpop.permute.xlu0 %1769
  %1779 = vmatprep.subr.bf16.mxu0 0
  %1780 = vmatpush1.bf16.msra.mxu0 %v1770
  %1781 = vmatprep.subr.bf16.mxu0 0
  %1782 = vmatpush1.bf16.msra.mxu0 %v1768
  %1783 = vmatprep.subr.bf16.mxu0 0
  %1784 = vmatpush1.bf16.msra.mxu0 %v1766
  %1785 = vmatprep.subr.bf16.mxu0 0
  %1786 = vmatpush1.bf16.msra.mxu0 %v1764
  %1787 = vmatprep.subr.bf16.mxu0 0
  %1788 = vmatpush1.bf16.msra.mxu0 %v1762
  %1789 = vmatprep.subr.bf16.mxu0 0
  %1790 = vmatpush1.bf16.msra.mxu0 %v1760
  %1791 = vmatprep.subr.bf16.mxu0 0
  %1792 = vmatpush1.bf16.msra.mxu0 %v1758
  %1793 = vmatprep.subr.bf16.mxu0 0
  %1794 = vmatpush1.bf16.msra.mxu0 %v1756
  %1795 = vmatprep.subr.bf16.mxu0 0
  %1796 = vmatpush2.bf16.msra.mxu0 0
  %1797 = vmatprep.subr.bf16.mxu0 0
  %1798 = vmatpush2.bf16.msra.mxu0 0
  %1799 = vmatprep.subr.bf16.mxu0 0
  %1800 = vmatpush2.bf16.msra.mxu0 0
  %1801 = vmatprep.subr.bf16.mxu0 0
  %1802 = vmatpush2.bf16.msra.mxu0 0
  %1803 = vmatprep.subr.bf16.mxu0 0
  %1804 = vmatpush2.bf16.msra.mxu0 0
  %1805 = vmatprep.subr.bf16.mxu0 0
  %1806 = vmatpush2.bf16.msra.mxu0 0
  %1807 = vmatprep.subr.bf16.mxu0 0
  %1808 = vmatpush2.bf16.msra.mxu0 0
  %1809 = vmatprep.subr.bf16.mxu0 0
  %1810 = vmatpush2.bf16.msra.mxu0 0
  %1811 = vmatprep.mubr.bf16.mxu0 0
  %1812 = vmatmul.mubr.bf16.gmra.mxu0 %v1747
  %v1813 = vpop.f32.mrf.mxu0
  %v1814 = vadd.f32 0.0, %v1813
  %v1815 = vpop.f32.mrf.mxu0
  %v1816 = vpop.f32.mrf.mxu0
  %v1817 = vadd.f32 0.0, %v1816
  %v1818 = vpop.f32.mrf.mxu0
  %1819 = vmatprep.mubr.bf16.mxu0 0
  %1820 = vmatmul.mubr.bf16.gmra.mxu0 %v1748
  %v1821 = vpop.f32.mrf.mxu0
  %v1822 = vadd.f32 0.0, %v1821
  %v1823 = vpop.f32.mrf.mxu0
  %v1824 = vpop.f32.mrf.mxu0
  %v1825 = vadd.f32 0.0, %v1824
  %v1826 = vpop.f32.mrf.mxu0
  %1827 = vmatprep.mubr.bf16.mxu0 0
  %1828 = vmatmul.mubr.bf16.gmra.mxu0 %v1749
  %v1829 = vpop.f32.mrf.mxu0
  %v1830 = vadd.f32 0.0, %v1829
  %v1831 = vpop.f32.mrf.mxu0
  %v1832 = vpop.f32.mrf.mxu0
  %v1833 = vadd.f32 0.0, %v1832
  %v1834 = vpop.f32.mrf.mxu0
  %1835 = vmatprep.mubr.bf16.mxu0 0
  %1836 = vmatmul.mubr.bf16.gmra.mxu0 %v1750
  %v1837 = vpop.f32.mrf.mxu0
  %v1838 = vadd.f32 0.0, %v1837
  %v1839 = vpop.f32.mrf.mxu0
  %v1840 = vpop.f32.mrf.mxu0
  %v1841 = vadd.f32 0.0, %v1840
  %v1842 = vpop.f32.mrf.mxu0
  %1843 = vmatprep.mubr.bf16.mxu0 0
  %1844 = vmatmul.mubr.bf16.gmra.mxu0 %v1751
  %v1845 = vpop.f32.mrf.mxu0
  %v1846 = vadd.f32 0.0, %v1845
  %v1847 = vpop.f32.mrf.mxu0
  %v1848 = vpop.f32.mrf.mxu0
  %v1849 = vadd.f32 0.0, %v1848
  %v1850 = vpop.f32.mrf.mxu0
  %1851 = vmatprep.mubr.bf16.mxu0 0
  %1852 = vmatmul.mubr.bf16.gmra.mxu0 %v1752
  %v1853 = vpop.f32.mrf.mxu0
  %v1854 = vadd.f32 0.0, %v1853
  %v1855 = vpop.f32.mrf.mxu0
  %v1856 = vpop.f32.mrf.mxu0
  %v1857 = vadd.f32 0.0, %v1856
  %v1858 = vpop.f32.mrf.mxu0
  %1859 = vmatprep.mubr.bf16.mxu0 0
  %1860 = vmatmul.mubr.bf16.gmra.mxu0 %v1753
  %v1861 = vpop.f32.mrf.mxu0
  %v1862 = vadd.f32 0.0, %v1861
  %v1863 = vpop.f32.mrf.mxu0
  %v1864 = vpop.f32.mrf.mxu0
  %v1865 = vadd.f32 0.0, %v1864
  %v1866 = vpop.f32.mrf.mxu0
  %1867 = vmatprep.mubr.bf16.mxu0 0
  %1868 = vmatmul.mubr.bf16.gmra.mxu0 %v1754
  %v1869 = vpop.f32.mrf.mxu0
  %v1870 = vadd.f32 0.0, %v1869
  %v1871 = vpop.f32.mrf.mxu0
  %v1872 = vpop.f32.mrf.mxu0
  %v1873 = vadd.f32 0.0, %v1872
  %v1874 = vpop.f32.mrf.mxu0
  %1875 = vdwg.mxu0
  %s1876 = scalar_lea.vmem %s1, 384
  %v1877 = vld [vmem:[%s1876] sm:$0xff]
  %v1878 = vld [vmem:[%s1876 + $0x8] sm:$0xff]
  %v1879 = vld [vmem:[%s1876 + $0x10] sm:$0xff]
  %v1880 = vld [vmem:[%s1876 + $0x18] sm:$0xff]
  %v1881 = vld [vmem:[%s1876 + $0x20] sm:$0xff]
  %v1882 = vld [vmem:[%s1876 + $0x28] sm:$0xff]
  %v1883 = vld [vmem:[%s1876 + $0x30] sm:$0xff]
  %v1884 = vld [vmem:[%s1876 + $0x38] sm:$0xff]
  %v1885 = vld [vmem:[%s1876 + $0x40] sm:$0xff]
  %v1886 = vld [vmem:[%s1876 + $0x48] sm:$0xff]
  %v1887 = vld [vmem:[%s1876 + $0x50] sm:$0xff]
  %v1888 = vld [vmem:[%s1876 + $0x58] sm:$0xff]
  %v1889 = vld [vmem:[%s1876 + $0x60] sm:$0xff]
  %v1890 = vld [vmem:[%s1876 + $0x68] sm:$0xff]
  %v1891 = vld [vmem:[%s1876 + $0x70] sm:$0xff]
  %v1892 = vld [vmem:[%s1876 + $0x78] sm:$0xff]
  %1893 = vrot.lane.b32.xlu0 %v475, 104
  %v1894 = vpop.permute.xlu0 %1893
  %1895 = vrot.lane.b32.xlu0 %v476, 104
  %v1896 = vpop.permute.xlu0 %1895
  %1897 = vrot.lane.b32.xlu0 %v477, 104
  %v1898 = vpop.permute.xlu0 %1897
  %1899 = vrot.lane.b32.xlu0 %v478, 104
  %v1900 = vpop.permute.xlu0 %1899
  %1901 = vrot.lane.b32.xlu0 %v479, 104
  %v1902 = vpop.permute.xlu0 %1901
  %1903 = vrot.lane.b32.xlu0 %v480, 104
  %v1904 = vpop.permute.xlu0 %1903
  %1905 = vrot.lane.b32.xlu0 %v481, 104
  %v1906 = vpop.permute.xlu0 %1905
  %1907 = vrot.lane.b32.xlu0 %v482, 104
  %v1908 = vpop.permute.xlu0 %1907
  %1909 = vrot.lane.b32.xlu0 %v475, 72
  %v1910 = vpop.permute.xlu0 %1909
  %1911 = vrot.lane.b32.xlu0 %v476, 72
  %v1912 = vpop.permute.xlu0 %1911
  %1913 = vrot.lane.b32.xlu0 %v477, 72
  %v1914 = vpop.permute.xlu0 %1913
  %1915 = vrot.lane.b32.xlu0 %v478, 72
  %v1916 = vpop.permute.xlu0 %1915
  %1917 = vrot.lane.b32.xlu0 %v479, 72
  %v1918 = vpop.permute.xlu0 %1917
  %1919 = vrot.lane.b32.xlu0 %v480, 72
  %v1920 = vpop.permute.xlu0 %1919
  %1921 = vrot.lane.b32.xlu0 %v481, 72
  %v1922 = vpop.permute.xlu0 %1921
  %1923 = vrot.lane.b32.xlu0 %v482, 72
  %v1924 = vpop.permute.xlu0 %1923
  %v1926 = vsel %vm523, %v1894, 0
  %v1929 = vsel %vm523, %v1896, 0
  %v1932 = vsel %vm523, %v1898, 0
  %v1935 = vsel %vm523, %v1900, 0
  %v1938 = vsel %vm523, %v1902, 0
  %v1941 = vsel %vm523, %v1904, 0
  %v1944 = vsel %vm523, %v1906, 0
  %v1947 = vsel %vm523, %v1908, 0
  %v1950 = vsel %vm523, %v1910, 0
  %v1953 = vsel %vm523, %v1912, 0
  %v1956 = vsel %vm523, %v1914, 0
  %v1959 = vsel %vm523, %v1916, 0
  %v1962 = vsel %vm523, %v1918, 0
  %v1965 = vsel %vm523, %v1920, 0
  %v1968 = vsel %vm523, %v1922, 0
  %v1971 = vsel %vm523, %v1924, 0
  %1973 = vmatprep.subr.bf16.mxu0 0
  %1974 = vmatpush1.bf16.xpose.msra.mxu0 %v1971
  %1975 = vmatprep.subr.bf16.mxu0 0
  %1976 = vmatpush1.bf16.xpose.msra.mxu0 %v1968
  %1977 = vmatprep.subr.bf16.mxu0 0
  %1978 = vmatpush1.bf16.xpose.msra.mxu0 %v1965
  %1979 = vmatprep.subr.bf16.mxu0 0
  %1980 = vmatpush1.bf16.xpose.msra.mxu0 %v1962
  %1981 = vmatprep.subr.bf16.mxu0 0
  %1982 = vmatpush1.bf16.xpose.msra.mxu0 %v1959
  %1983 = vmatprep.subr.bf16.mxu0 0
  %1984 = vmatpush1.bf16.xpose.msra.mxu0 %v1956
  %1985 = vmatprep.subr.bf16.mxu0 0
  %1986 = vmatpush1.bf16.xpose.msra.mxu0 %v1953
  %1987 = vmatprep.subr.bf16.mxu0 0
  %1988 = vmatpush1.bf16.xpose.msra.mxu0 %v1950
  %1989 = vmatprep.subr.bf16.mxu0 0
  %1990 = vmatpush2.bf16.xpose.msra.mxu0 0
  %1991 = vmatprep.subr.bf16.mxu0 0
  %1992 = vmatpush2.bf16.xpose.msra.mxu0 0
  %1993 = vmatprep.subr.bf16.mxu0 0
  %1994 = vmatpush2.bf16.xpose.msra.mxu0 0
  %1995 = vmatprep.subr.bf16.mxu0 0
  %1996 = vmatpush2.bf16.xpose.msra.mxu0 0
  %1997 = vmatprep.subr.bf16.mxu0 0
  %1998 = vmatpush2.bf16.xpose.msra.mxu0 0
  %1999 = vmatprep.subr.bf16.mxu0 0
  %2000 = vmatpush2.bf16.xpose.msra.mxu0 0
  %2001 = vmatprep.subr.bf16.mxu0 0
  %2002 = vmatpush2.bf16.xpose.msra.mxu0 0
  %2003 = vmatprep.subr.bf16.mxu0 0
  %2004 = vmatpush2.bf16.xpose.msra.mxu0 0
  %2005 = vmatprep.mubr.bf16.mxu0 0
  %2006 = vmatmul.mubr.bf16.gmra.mxu0 %v1926
  %v2007 = vpop.f32.mrf.mxu0
  %v2008 = vadd.f32 %v1877, %v2007
  %v2009 = vpop.f32.mrf.mxu0
  %v2010 = vpop.f32.mrf.mxu0
  %v2011 = vadd.f32 %v1878, %v2010
  %v2012 = vpop.f32.mrf.mxu0
  %2013 = vmatprep.mubr.bf16.mxu0 0
  %2014 = vmatmul.mubr.bf16.gmra.mxu0 %v1929
  %v2015 = vpop.f32.mrf.mxu0
  %v2016 = vadd.f32 %v1879, %v2015
  %v2017 = vpop.f32.mrf.mxu0
  %v2018 = vpop.f32.mrf.mxu0
  %v2019 = vadd.f32 %v1880, %v2018
  %v2020 = vpop.f32.mrf.mxu0
  %2021 = vmatprep.mubr.bf16.mxu0 0
  %2022 = vmatmul.mubr.bf16.gmra.mxu0 %v1932
  %v2023 = vpop.f32.mrf.mxu0
  %v2024 = vadd.f32 %v1881, %v2023
  %v2025 = vpop.f32.mrf.mxu0
  %v2026 = vpop.f32.mrf.mxu0
  %v2027 = vadd.f32 %v1882, %v2026
  %v2028 = vpop.f32.mrf.mxu0
  %2029 = vmatprep.mubr.bf16.mxu0 0
  %2030 = vmatmul.mubr.bf16.gmra.mxu0 %v1935
  %v2031 = vpop.f32.mrf.mxu0
  %v2032 = vadd.f32 %v1883, %v2031
  %v2033 = vpop.f32.mrf.mxu0
  %v2034 = vpop.f32.mrf.mxu0
  %v2035 = vadd.f32 %v1884, %v2034
  %v2036 = vpop.f32.mrf.mxu0
  %2037 = vmatprep.mubr.bf16.mxu0 0
  %2038 = vmatmul.mubr.bf16.gmra.mxu0 %v1938
  %v2039 = vpop.f32.mrf.mxu0
  %v2040 = vadd.f32 %v1885, %v2039
  %v2041 = vpop.f32.mrf.mxu0
  %v2042 = vpop.f32.mrf.mxu0
  %v2043 = vadd.f32 %v1886, %v2042
  %v2044 = vpop.f32.mrf.mxu0
  %2045 = vmatprep.mubr.bf16.mxu0 0
  %2046 = vmatmul.mubr.bf16.gmra.mxu0 %v1941
  %v2047 = vpop.f32.mrf.mxu0
  %v2048 = vadd.f32 %v1887, %v2047
  %v2049 = vpop.f32.mrf.mxu0
  %v2050 = vpop.f32.mrf.mxu0
  %v2051 = vadd.f32 %v1888, %v2050
  %v2052 = vpop.f32.mrf.mxu0
  %2053 = vmatprep.mubr.bf16.mxu0 0
  %2054 = vmatmul.mubr.bf16.gmra.mxu0 %v1944
  %v2055 = vpop.f32.mrf.mxu0
  %v2056 = vadd.f32 %v1889, %v2055
  %v2057 = vpop.f32.mrf.mxu0
  %v2058 = vpop.f32.mrf.mxu0
  %v2059 = vadd.f32 %v1890, %v2058
  %v2060 = vpop.f32.mrf.mxu0
  %2061 = vmatprep.mubr.bf16.mxu0 0
  %2062 = vmatmul.mubr.bf16.gmra.mxu0 %v1947
  %v2063 = vpop.f32.mrf.mxu0
  %v2064 = vadd.f32 %v1891, %v2063
  %v2065 = vpop.f32.mrf.mxu0
  %v2066 = vpop.f32.mrf.mxu0
  %v2067 = vadd.f32 %v1892, %v2066
  %v2068 = vpop.f32.mrf.mxu0
  %2069 = vdwg.mxu0
  %2070 = vmax.xlane.f32.xlu0 %v2008
  %v2071 = vpop.xlane.xlu0 %2070
  %2072 = vmax.xlane.f32.xlu0 %v2011
  %v2073 = vpop.xlane.xlu0 %2072
  %2074 = vmax.xlane.f32.xlu0 %v2016
  %v2075 = vpop.xlane.xlu0 %2074
  %2076 = vmax.xlane.f32.xlu0 %v2019
  %v2077 = vpop.xlane.xlu0 %2076
  %2078 = vmax.xlane.f32.xlu0 %v2024
  %v2079 = vpop.xlane.xlu0 %2078
  %2080 = vmax.xlane.f32.xlu0 %v2027
  %v2081 = vpop.xlane.xlu0 %2080
  %2082 = vmax.xlane.f32.xlu0 %v2032
  %v2083 = vpop.xlane.xlu0 %2082
  %2084 = vmax.xlane.f32.xlu0 %v2035
  %v2085 = vpop.xlane.xlu0 %2084
  %2086 = vmax.xlane.f32.xlu0 %v2040
  %v2087 = vpop.xlane.xlu0 %2086
  %2088 = vmax.xlane.f32.xlu0 %v2043
  %v2089 = vpop.xlane.xlu0 %2088
  %2090 = vmax.xlane.f32.xlu0 %v2048
  %v2091 = vpop.xlane.xlu0 %2090
  %2092 = vmax.xlane.f32.xlu0 %v2051
  %v2093 = vpop.xlane.xlu0 %2092
  %2094 = vmax.xlane.f32.xlu0 %v2056
  %v2095 = vpop.xlane.xlu0 %2094
  %2096 = vmax.xlane.f32.xlu0 %v2059
  %v2097 = vpop.xlane.xlu0 %2096
  %2098 = vmax.xlane.f32.xlu0 %v2064
  %v2099 = vpop.xlane.xlu0 %2098
  %2100 = vmax.xlane.f32.xlu0 %v2067
  %v2101 = vpop.xlane.xlu0 %2100
  %v2102 = vsub.f32 %v2008, %v2071
  %v2103 = vsub.f32 %v2011, %v2073
  %v2104 = vsub.f32 %v2016, %v2075
  %v2105 = vsub.f32 %v2019, %v2077
  %v2106 = vsub.f32 %v2024, %v2079
  %v2107 = vsub.f32 %v2027, %v2081
  %v2108 = vsub.f32 %v2032, %v2083
  %v2109 = vsub.f32 %v2035, %v2085
  %v2110 = vsub.f32 %v2040, %v2087
  %v2111 = vsub.f32 %v2043, %v2089
  %v2112 = vsub.f32 %v2048, %v2091
  %v2113 = vsub.f32 %v2051, %v2093
  %v2114 = vsub.f32 %v2056, %v2095
  %v2115 = vsub.f32 %v2059, %v2097
  %v2116 = vsub.f32 %v2064, %v2099
  %v2117 = vsub.f32 %v2067, %v2101
  %v2118 = vmul.f32 %v2102, 1.442695
  %v2119 = vpow.pop %v2118
  %v2120 = vmul.f32 %v2103, 1.442695
  %v2121 = vpow.pop %v2120
  %v2122 = vmul.f32 %v2104, 1.442695
  %v2123 = vpow.pop %v2122
  %v2124 = vmul.f32 %v2105, 1.442695
  %v2125 = vpow.pop %v2124
  %v2126 = vmul.f32 %v2106, 1.442695
  %v2127 = vpow.pop %v2126
  %v2128 = vmul.f32 %v2107, 1.442695
  %v2129 = vpow.pop %v2128
  %v2130 = vmul.f32 %v2108, 1.442695
  %v2131 = vpow.pop %v2130
  %v2132 = vmul.f32 %v2109, 1.442695
  %v2133 = vpow.pop %v2132
  %v2134 = vmul.f32 %v2110, 1.442695
  %v2135 = vpow.pop %v2134
  %v2136 = vmul.f32 %v2111, 1.442695
  %v2137 = vpow.pop %v2136
  %v2138 = vmul.f32 %v2112, 1.442695
  %v2139 = vpow.pop %v2138
  %v2140 = vmul.f32 %v2113, 1.442695
  %v2141 = vpow.pop %v2140
  %v2142 = vmul.f32 %v2114, 1.442695
  %v2143 = vpow.pop %v2142
  %v2144 = vmul.f32 %v2115, 1.442695
  %v2145 = vpow.pop %v2144
  %v2146 = vmul.f32 %v2116, 1.442695
  %v2147 = vpow.pop %v2146
  %v2148 = vmul.f32 %v2117, 1.442695
  %v2149 = vpow.pop %v2148
  %2150 = vadd.xlane.f32.xlu0 %v2119
  %v2151 = vpop.xlane.xlu0 %2150
  %2152 = vadd.xlane.f32.xlu0 %v2121
  %v2153 = vpop.xlane.xlu0 %2152
  %2154 = vadd.xlane.f32.xlu0 %v2123
  %v2155 = vpop.xlane.xlu0 %2154
  %2156 = vadd.xlane.f32.xlu0 %v2125
  %v2157 = vpop.xlane.xlu0 %2156
  %2158 = vadd.xlane.f32.xlu0 %v2127
  %v2159 = vpop.xlane.xlu0 %2158
  %2160 = vadd.xlane.f32.xlu0 %v2129
  %v2161 = vpop.xlane.xlu0 %2160
  %2162 = vadd.xlane.f32.xlu0 %v2131
  %v2163 = vpop.xlane.xlu0 %2162
  %2164 = vadd.xlane.f32.xlu0 %v2133
  %v2165 = vpop.xlane.xlu0 %2164
  %2166 = vadd.xlane.f32.xlu0 %v2135
  %v2167 = vpop.xlane.xlu0 %2166
  %2168 = vadd.xlane.f32.xlu0 %v2137
  %v2169 = vpop.xlane.xlu0 %2168
  %2170 = vadd.xlane.f32.xlu0 %v2139
  %v2171 = vpop.xlane.xlu0 %2170
  %2172 = vadd.xlane.f32.xlu0 %v2141
  %v2173 = vpop.xlane.xlu0 %2172
  %2174 = vadd.xlane.f32.xlu0 %v2143
  %v2175 = vpop.xlane.xlu0 %2174
  %2176 = vadd.xlane.f32.xlu0 %v2145
  %v2177 = vpop.xlane.xlu0 %2176
  %2178 = vadd.xlane.f32.xlu0 %v2147
  %v2179 = vpop.xlane.xlu0 %2178
  %2180 = vadd.xlane.f32.xlu0 %v2149
  %v2181 = vpop.xlane.xlu0 %2180
  %v2182 = vrcp.pop %v2151
  %v2183 = vrcp.pop %v2153
  %v2184 = vrcp.pop %v2155
  %v2185 = vrcp.pop %v2157
  %v2186 = vrcp.pop %v2159
  %v2187 = vrcp.pop %v2161
  %v2188 = vrcp.pop %v2163
  %v2189 = vrcp.pop %v2165
  %v2190 = vrcp.pop %v2167
  %v2191 = vrcp.pop %v2169
  %v2192 = vrcp.pop %v2171
  %v2193 = vrcp.pop %v2173
  %v2194 = vrcp.pop %v2175
  %v2195 = vrcp.pop %v2177
  %v2196 = vrcp.pop %v2179
  %v2197 = vrcp.pop %v2181
  %v2198 = vmul.f32 %v2119, %v2182
  %v2199 = vmul.f32 %v2121, %v2183
  %v2200 = vmul.f32 %v2123, %v2184
  %v2201 = vmul.f32 %v2125, %v2185
  %v2202 = vmul.f32 %v2127, %v2186
  %v2203 = vmul.f32 %v2129, %v2187
  %v2204 = vmul.f32 %v2131, %v2188
  %v2205 = vmul.f32 %v2133, %v2189
  %v2206 = vmul.f32 %v2135, %v2190
  %v2207 = vmul.f32 %v2137, %v2191
  %v2208 = vmul.f32 %v2139, %v2192
  %v2209 = vmul.f32 %v2141, %v2193
  %v2210 = vmul.f32 %v2143, %v2194
  %v2211 = vmul.f32 %v2145, %v2195
  %v2212 = vmul.f32 %v2147, %v2196
  %v2213 = vmul.f32 %v2149, %v2197
  %v2214 = vpack.c.bf16 %v2199, %v2198
  %v2215 = vpack.c.bf16 %v2201, %v2200
  %v2216 = vpack.c.bf16 %v2203, %v2202
  %v2217 = vpack.c.bf16 %v2205, %v2204
  %v2218 = vpack.c.bf16 %v2207, %v2206
  %v2219 = vpack.c.bf16 %v2209, %v2208
  %v2220 = vpack.c.bf16 %v2211, %v2210
  %v2221 = vpack.c.bf16 %v2213, %v2212
  %2222 = vrot.lane.b32.xlu0 %v475, 40
  %v2223 = vpop.permute.xlu0 %2222
  %2224 = vrot.lane.b32.xlu0 %v476, 40
  %v2225 = vpop.permute.xlu0 %2224
  %2226 = vrot.lane.b32.xlu0 %v477, 40
  %v2227 = vpop.permute.xlu0 %2226
  %2228 = vrot.lane.b32.xlu0 %v478, 40
  %v2229 = vpop.permute.xlu0 %2228
  %2230 = vrot.lane.b32.xlu0 %v479, 40
  %v2231 = vpop.permute.xlu0 %2230
  %2232 = vrot.lane.b32.xlu0 %v480, 40
  %v2233 = vpop.permute.xlu0 %2232
  %2234 = vrot.lane.b32.xlu0 %v481, 40
  %v2235 = vpop.permute.xlu0 %2234
  %2236 = vrot.lane.b32.xlu0 %v482, 40
  %v2237 = vpop.permute.xlu0 %2236
  %2246 = vmatprep.subr.bf16.mxu0 0
  %2247 = vmatpush1.bf16.msra.mxu0 %v2237
  %2248 = vmatprep.subr.bf16.mxu0 0
  %2249 = vmatpush1.bf16.msra.mxu0 %v2235
  %2250 = vmatprep.subr.bf16.mxu0 0
  %2251 = vmatpush1.bf16.msra.mxu0 %v2233
  %2252 = vmatprep.subr.bf16.mxu0 0
  %2253 = vmatpush1.bf16.msra.mxu0 %v2231
  %2254 = vmatprep.subr.bf16.mxu0 0
  %2255 = vmatpush1.bf16.msra.mxu0 %v2229
  %2256 = vmatprep.subr.bf16.mxu0 0
  %2257 = vmatpush1.bf16.msra.mxu0 %v2227
  %2258 = vmatprep.subr.bf16.mxu0 0
  %2259 = vmatpush1.bf16.msra.mxu0 %v2225
  %2260 = vmatprep.subr.bf16.mxu0 0
  %2261 = vmatpush1.bf16.msra.mxu0 %v2223
  %2262 = vmatprep.subr.bf16.mxu0 0
  %2263 = vmatpush2.bf16.msra.mxu0 0
  %2264 = vmatprep.subr.bf16.mxu0 0
  %2265 = vmatpush2.bf16.msra.mxu0 0
  %2266 = vmatprep.subr.bf16.mxu0 0
  %2267 = vmatpush2.bf16.msra.mxu0 0
  %2268 = vmatprep.subr.bf16.mxu0 0
  %2269 = vmatpush2.bf16.msra.mxu0 0
  %2270 = vmatprep.subr.bf16.mxu0 0
  %2271 = vmatpush2.bf16.msra.mxu0 0
  %2272 = vmatprep.subr.bf16.mxu0 0
  %2273 = vmatpush2.bf16.msra.mxu0 0
  %2274 = vmatprep.subr.bf16.mxu0 0
  %2275 = vmatpush2.bf16.msra.mxu0 0
  %2276 = vmatprep.subr.bf16.mxu0 0
  %2277 = vmatpush2.bf16.msra.mxu0 0
  %2278 = vmatprep.mubr.bf16.mxu0 0
  %2279 = vmatmul.mubr.bf16.gmra.mxu0 %v2214
  %v2280 = vpop.f32.mrf.mxu0
  %v2281 = vadd.f32 0.0, %v2280
  %v2282 = vpop.f32.mrf.mxu0
  %v2283 = vpop.f32.mrf.mxu0
  %v2284 = vadd.f32 0.0, %v2283
  %v2285 = vpop.f32.mrf.mxu0
  %2286 = vmatprep.mubr.bf16.mxu0 0
  %2287 = vmatmul.mubr.bf16.gmra.mxu0 %v2215
  %v2288 = vpop.f32.mrf.mxu0
  %v2289 = vadd.f32 0.0, %v2288
  %v2290 = vpop.f32.mrf.mxu0
  %v2291 = vpop.f32.mrf.mxu0
  %v2292 = vadd.f32 0.0, %v2291
  %v2293 = vpop.f32.mrf.mxu0
  %2294 = vmatprep.mubr.bf16.mxu0 0
  %2295 = vmatmul.mubr.bf16.gmra.mxu0 %v2216
  %v2296 = vpop.f32.mrf.mxu0
  %v2297 = vadd.f32 0.0, %v2296
  %v2298 = vpop.f32.mrf.mxu0
  %v2299 = vpop.f32.mrf.mxu0
  %v2300 = vadd.f32 0.0, %v2299
  %v2301 = vpop.f32.mrf.mxu0
  %2302 = vmatprep.mubr.bf16.mxu0 0
  %2303 = vmatmul.mubr.bf16.gmra.mxu0 %v2217
  %v2304 = vpop.f32.mrf.mxu0
  %v2305 = vadd.f32 0.0, %v2304
  %v2306 = vpop.f32.mrf.mxu0
  %v2307 = vpop.f32.mrf.mxu0
  %v2308 = vadd.f32 0.0, %v2307
  %v2309 = vpop.f32.mrf.mxu0
  %2310 = vmatprep.mubr.bf16.mxu0 0
  %2311 = vmatmul.mubr.bf16.gmra.mxu0 %v2218
  %v2312 = vpop.f32.mrf.mxu0
  %v2313 = vadd.f32 0.0, %v2312
  %v2314 = vpop.f32.mrf.mxu0
  %v2315 = vpop.f32.mrf.mxu0
  %v2316 = vadd.f32 0.0, %v2315
  %v2317 = vpop.f32.mrf.mxu0
  %2318 = vmatprep.mubr.bf16.mxu0 0
  %2319 = vmatmul.mubr.bf16.gmra.mxu0 %v2219
  %v2320 = vpop.f32.mrf.mxu0
  %v2321 = vadd.f32 0.0, %v2320
  %v2322 = vpop.f32.mrf.mxu0
  %v2323 = vpop.f32.mrf.mxu0
  %v2324 = vadd.f32 0.0, %v2323
  %v2325 = vpop.f32.mrf.mxu0
  %2326 = vmatprep.mubr.bf16.mxu0 0
  %2327 = vmatmul.mubr.bf16.gmra.mxu0 %v2220
  %v2328 = vpop.f32.mrf.mxu0
  %v2329 = vadd.f32 0.0, %v2328
  %v2330 = vpop.f32.mrf.mxu0
  %v2331 = vpop.f32.mrf.mxu0
  %v2332 = vadd.f32 0.0, %v2331
  %v2333 = vpop.f32.mrf.mxu0
  %2334 = vmatprep.mubr.bf16.mxu0 0
  %2335 = vmatmul.mubr.bf16.gmra.mxu0 %v2221
  %v2336 = vpop.f32.mrf.mxu0
  %v2337 = vadd.f32 0.0, %v2336
  %v2338 = vpop.f32.mrf.mxu0
  %v2339 = vpop.f32.mrf.mxu0
  %v2340 = vadd.f32 0.0, %v2339
  %v2341 = vpop.f32.mrf.mxu0
  %2342 = vdwg.mxu0
  %2359 = vrot.lane.b32.xlu0 %v1347, 8
  %v2360 = vpop.permute.xlu0 %2359
  %2361 = vrot.lane.b32.xlu0 %v1350, 8
  %v2362 = vpop.permute.xlu0 %2361
  %2363 = vrot.lane.b32.xlu0 %v1355, 8
  %v2364 = vpop.permute.xlu0 %2363
  %2365 = vrot.lane.b32.xlu0 %v1358, 8
  %v2366 = vpop.permute.xlu0 %2365
  %2367 = vrot.lane.b32.xlu0 %v1363, 8
  %v2368 = vpop.permute.xlu0 %2367
  %2369 = vrot.lane.b32.xlu0 %v1366, 8
  %v2370 = vpop.permute.xlu0 %2369
  %2371 = vrot.lane.b32.xlu0 %v1371, 8
  %v2372 = vpop.permute.xlu0 %2371
  %2373 = vrot.lane.b32.xlu0 %v1374, 8
  %v2374 = vpop.permute.xlu0 %2373
  %2375 = vrot.lane.b32.xlu0 %v1379, 8
  %v2376 = vpop.permute.xlu0 %2375
  %2377 = vrot.lane.b32.xlu0 %v1382, 8
  %v2378 = vpop.permute.xlu0 %2377
  %2379 = vrot.lane.b32.xlu0 %v1387, 8
  %v2380 = vpop.permute.xlu0 %2379
  %2381 = vrot.lane.b32.xlu0 %v1390, 8
  %v2382 = vpop.permute.xlu0 %2381
  %2383 = vrot.lane.b32.xlu0 %v1395, 8
  %v2384 = vpop.permute.xlu0 %2383
  %2385 = vrot.lane.b32.xlu0 %v1398, 8
  %v2386 = vpop.permute.xlu0 %2385
  %2387 = vrot.lane.b32.xlu0 %v1403, 8
  %v2388 = vpop.permute.xlu0 %2387
  %2389 = vrot.lane.b32.xlu0 %v1406, 8
  %v2390 = vpop.permute.xlu0 %2389
  %2423 = vrot.lane.b32.xlu0 %v1814, 16
  %v2424 = vpop.permute.xlu0 %2423
  %2425 = vrot.lane.b32.xlu0 %v1817, 16
  %v2426 = vpop.permute.xlu0 %2425
  %2427 = vrot.lane.b32.xlu0 %v1822, 16
  %v2428 = vpop.permute.xlu0 %2427
  %2429 = vrot.lane.b32.xlu0 %v1825, 16
  %v2430 = vpop.permute.xlu0 %2429
  %2431 = vrot.lane.b32.xlu0 %v1830, 16
  %v2432 = vpop.permute.xlu0 %2431
  %2433 = vrot.lane.b32.xlu0 %v1833, 16
  %v2434 = vpop.permute.xlu0 %2433
  %2435 = vrot.lane.b32.xlu0 %v1838, 16
  %v2436 = vpop.permute.xlu0 %2435
  %2437 = vrot.lane.b32.xlu0 %v1841, 16
  %v2438 = vpop.permute.xlu0 %2437
  %2439 = vrot.lane.b32.xlu0 %v1846, 16
  %v2440 = vpop.permute.xlu0 %2439
  %2441 = vrot.lane.b32.xlu0 %v1849, 16
  %v2442 = vpop.permute.xlu0 %2441
  %2443 = vrot.lane.b32.xlu0 %v1854, 16
  %v2444 = vpop.permute.xlu0 %2443
  %2445 = vrot.lane.b32.xlu0 %v1857, 16
  %v2446 = vpop.permute.xlu0 %2445
  %2447 = vrot.lane.b32.xlu0 %v1862, 16
  %v2448 = vpop.permute.xlu0 %2447
  %2449 = vrot.lane.b32.xlu0 %v1865, 16
  %v2450 = vpop.permute.xlu0 %2449
  %2451 = vrot.lane.b32.xlu0 %v1870, 16
  %v2452 = vpop.permute.xlu0 %2451
  %2453 = vrot.lane.b32.xlu0 %v1873, 16
  %v2454 = vpop.permute.xlu0 %2453
  %2487 = vrot.lane.b32.xlu0 %v2281, 24
  %v2488 = vpop.permute.xlu0 %2487
  %2489 = vrot.lane.b32.xlu0 %v2284, 24
  %v2490 = vpop.permute.xlu0 %2489
  %2491 = vrot.lane.b32.xlu0 %v2289, 24
  %v2492 = vpop.permute.xlu0 %2491
  %2493 = vrot.lane.b32.xlu0 %v2292, 24
  %v2494 = vpop.permute.xlu0 %2493
  %2495 = vrot.lane.b32.xlu0 %v2297, 24
  %v2496 = vpop.permute.xlu0 %2495
  %2497 = vrot.lane.b32.xlu0 %v2300, 24
  %v2498 = vpop.permute.xlu0 %2497
  %2499 = vrot.lane.b32.xlu0 %v2305, 24
  %v2500 = vpop.permute.xlu0 %2499
  %2501 = vrot.lane.b32.xlu0 %v2308, 24
  %v2502 = vpop.permute.xlu0 %2501
  %2503 = vrot.lane.b32.xlu0 %v2313, 24
  %v2504 = vpop.permute.xlu0 %2503
  %2505 = vrot.lane.b32.xlu0 %v2316, 24
  %v2506 = vpop.permute.xlu0 %2505
  %2507 = vrot.lane.b32.xlu0 %v2321, 24
  %v2508 = vpop.permute.xlu0 %2507
  %2509 = vrot.lane.b32.xlu0 %v2324, 24
  %v2510 = vpop.permute.xlu0 %2509
  %2511 = vrot.lane.b32.xlu0 %v2329, 24
  %v2512 = vpop.permute.xlu0 %2511
  %2513 = vrot.lane.b32.xlu0 %v2332, 24
  %v2514 = vpop.permute.xlu0 %2513
  %2515 = vrot.lane.b32.xlu0 %v2337, 24
  %v2516 = vpop.permute.xlu0 %2515
  %2517 = vrot.lane.b32.xlu0 %v2340, 24
  %v2518 = vpop.permute.xlu0 %2517
  %v2535 = vsel %vm523, %v880, %v2360
  %v2536 = vsel %vm523, %v883, %v2362
  %v2537 = vsel %vm523, %v888, %v2364
  %v2538 = vsel %vm523, %v891, %v2366
  %v2539 = vsel %vm523, %v896, %v2368
  %v2540 = vsel %vm523, %v899, %v2370
  %v2541 = vsel %vm523, %v904, %v2372
  %v2542 = vsel %vm523, %v907, %v2374
  %v2543 = vsel %vm523, %v912, %v2376
  %v2544 = vsel %vm523, %v915, %v2378
  %v2545 = vsel %vm523, %v920, %v2380
  %v2546 = vsel %vm523, %v923, %v2382
  %v2547 = vsel %vm523, %v928, %v2384
  %v2548 = vsel %vm523, %v931, %v2386
  %v2549 = vsel %vm523, %v936, %v2388
  %v2550 = vsel %vm523, %v939, %v2390
  %vm2551 = vcmask 130048
  %v2552 = vsel %vm2551, %v2535, %v2424
  %v2553 = vsel %vm2551, %v2536, %v2426
  %v2554 = vsel %vm2551, %v2537, %v2428
  %v2555 = vsel %vm2551, %v2538, %v2430
  %v2556 = vsel %vm2551, %v2539, %v2432
  %v2557 = vsel %vm2551, %v2540, %v2434
  %v2558 = vsel %vm2551, %v2541, %v2436
  %v2559 = vsel %vm2551, %v2542, %v2438
  %v2560 = vsel %vm2551, %v2543, %v2440
  %v2561 = vsel %vm2551, %v2544, %v2442
  %v2562 = vsel %vm2551, %v2545, %v2444
  %v2563 = vsel %vm2551, %v2546, %v2446
  %v2564 = vsel %vm2551, %v2547, %v2448
  %v2565 = vsel %vm2551, %v2548, %v2450
  %v2566 = vsel %vm2551, %v2549, %v2452
  %v2567 = vsel %vm2551, %v2550, %v2454
  %vm2568 = vcmask 195584
  %v2569 = vsel %vm2568, %v2552, %v2488
  %v2570 = vsel %vm2568, %v2553, %v2490
  %v2571 = vsel %vm2568, %v2554, %v2492
  %v2572 = vsel %vm2568, %v2555, %v2494
  %v2573 = vsel %vm2568, %v2556, %v2496
  %v2574 = vsel %vm2568, %v2557, %v2498
  %v2575 = vsel %vm2568, %v2558, %v2500
  %v2576 = vsel %vm2568, %v2559, %v2502
  %v2577 = vsel %vm2568, %v2560, %v2504
  %v2578 = vsel %vm2568, %v2561, %v2506
  %v2579 = vsel %vm2568, %v2562, %v2508
  %v2580 = vsel %vm2568, %v2563, %v2510
  %v2581 = vsel %vm2568, %v2564, %v2512
  %v2582 = vsel %vm2568, %v2565, %v2514
  %v2583 = vsel %vm2568, %v2566, %v2516
  %v2584 = vsel %vm2568, %v2567, %v2518
  %v2585 = vpack.c.bf16 %v2570, %v2569
  %v2586 = vpack.c.bf16 %v2572, %v2571
  %v2587 = vpack.c.bf16 %v2574, %v2573
  %v2588 = vpack.c.bf16 %v2576, %v2575
  %v2589 = vpack.c.bf16 %v2578, %v2577
  %v2590 = vpack.c.bf16 %v2580, %v2579
  %v2591 = vpack.c.bf16 %v2582, %v2581
  %v2592 = vpack.c.bf16 %v2584, %v2583
  %v2593 = vld [vmem:[%s4] sm:$0xf]
  %v2594 = vld [vmem:[%s4 + $0x4] sm:$0xf]
  %v2595 = vld [vmem:[%s4 + $0x8] sm:$0xf]
  %v2596 = vld [vmem:[%s4 + $0xc] sm:$0xf]
  %v2597 = vlaneseq
  %v2598 = vshrl.u32 %v2597, 7
  %v2599 = vsub.s32 4, %v2598
  %v2600 = vrot.slane %v43, %v2599
  %v2605 = vunpack.c.l.b16 %v2593
  %v2606 = vunpack.c.l.b16 %v2594
  %v2607 = vunpack.c.l.b16 %v2595
  %v2608 = vunpack.c.l.b16 %v2596
  %v2609 = vpack.c.b16 %v2606, %v2605
  %v2610 = vpack.c.b16 %v2608, %v2607
  %v2614 = vsel %vm44, %v2585, 0
  %v2617 = vsel %vm44, %v2586, 0
  %v2620 = vsel %vm44, %v2587, 0
  %v2623 = vsel %vm44, %v2588, 0
  %v2626 = vsel %vm44, %v2589, 0
  %v2629 = vsel %vm44, %v2590, 0
  %v2632 = vsel %vm44, %v2591, 0
  %v2635 = vsel %vm44, %v2592, 0
  %2637 = vmatprep.subr.bf16.mxu0 0
  %2638 = vmatpush1.bf16.msra.mxu0 0
  %2639 = vmatprep.subr.bf16.mxu0 0
  %2640 = vmatpush1.bf16.msra.mxu0 0
  %2641 = vmatprep.subr.bf16.mxu0 0
  %2642 = vmatpush1.bf16.msra.mxu0 0
  %2643 = vmatprep.subr.bf16.mxu0 0
  %2644 = vmatpush1.bf16.msra.mxu0 0
  %2645 = vmatprep.subr.bf16.mxu0 0
  %2646 = vmatpush1.bf16.msra.mxu0 0
  %2647 = vmatprep.subr.bf16.mxu0 0
  %2648 = vmatpush1.bf16.msra.mxu0 0
  %2649 = vmatprep.subr.bf16.mxu0 0
  %2650 = vmatpush1.bf16.msra.mxu0 %v2610
  %2651 = vmatprep.subr.bf16.mxu0 0
  %2652 = vmatpush1.bf16.msra.mxu0 %v2609
  %2653 = vmatprep.subr.bf16.mxu0 0
  %2654 = vmatpush2.bf16.msra.mxu0 0
  %2655 = vmatprep.subr.bf16.mxu0 0
  %2656 = vmatpush2.bf16.msra.mxu0 0
  %2657 = vmatprep.subr.bf16.mxu0 0
  %2658 = vmatpush2.bf16.msra.mxu0 0
  %2659 = vmatprep.subr.bf16.mxu0 0
  %2660 = vmatpush2.bf16.msra.mxu0 0
  %2661 = vmatprep.subr.bf16.mxu0 0
  %2662 = vmatpush2.bf16.msra.mxu0 0
  %2663 = vmatprep.subr.bf16.mxu0 0
  %2664 = vmatpush2.bf16.msra.mxu0 0
  %2665 = vmatprep.subr.bf16.mxu0 0
  %2666 = vmatpush2.bf16.msra.mxu0 0
  %2667 = vmatprep.subr.bf16.mxu0 0
  %2668 = vmatpush2.bf16.msra.mxu0 0
  %2669 = vmatprep.mubr.bf16.mxu0 0
  %2670 = vmatmul.mubr.bf16.gmra.mxu0 %v2614
  %v2671 = vpop.f32.mrf.mxu0
  %v2672 = vadd.f32 %v2600, %v2671
  %v2673 = vpop.f32.mrf.mxu0
  %v2674 = vpop.f32.mrf.mxu0
  %v2675 = vadd.f32 %v2600, %v2674
  %v2676 = vpop.f32.mrf.mxu0
  %2677 = vmatprep.mubr.bf16.mxu0 0
  %2678 = vmatmul.mubr.bf16.gmra.mxu0 %v2617
  %v2679 = vpop.f32.mrf.mxu0
  %v2680 = vadd.f32 %v2600, %v2679
  %v2681 = vpop.f32.mrf.mxu0
  %v2682 = vpop.f32.mrf.mxu0
  %v2683 = vadd.f32 %v2600, %v2682
  %v2684 = vpop.f32.mrf.mxu0
  %2685 = vmatprep.mubr.bf16.mxu0 0
  %2686 = vmatmul.mubr.bf16.gmra.mxu0 %v2620
  %v2687 = vpop.f32.mrf.mxu0
  %v2688 = vadd.f32 %v2600, %v2687
  %v2689 = vpop.f32.mrf.mxu0
  %v2690 = vpop.f32.mrf.mxu0
  %v2691 = vadd.f32 %v2600, %v2690
  %v2692 = vpop.f32.mrf.mxu0
  %2693 = vmatprep.mubr.bf16.mxu0 0
  %2694 = vmatmul.mubr.bf16.gmra.mxu0 %v2623
  %v2695 = vpop.f32.mrf.mxu0
  %v2696 = vadd.f32 %v2600, %v2695
  %v2697 = vpop.f32.mrf.mxu0
  %v2698 = vpop.f32.mrf.mxu0
  %v2699 = vadd.f32 %v2600, %v2698
  %v2700 = vpop.f32.mrf.mxu0
  %2701 = vmatprep.mubr.bf16.mxu0 0
  %2702 = vmatmul.mubr.bf16.gmra.mxu0 %v2626
  %v2703 = vpop.f32.mrf.mxu0
  %v2704 = vadd.f32 %v2600, %v2703
  %v2705 = vpop.f32.mrf.mxu0
  %v2706 = vpop.f32.mrf.mxu0
  %v2707 = vadd.f32 %v2600, %v2706
  %v2708 = vpop.f32.mrf.mxu0
  %2709 = vmatprep.mubr.bf16.mxu0 0
  %2710 = vmatmul.mubr.bf16.gmra.mxu0 %v2629
  %v2711 = vpop.f32.mrf.mxu0
  %v2712 = vadd.f32 %v2600, %v2711
  %v2713 = vpop.f32.mrf.mxu0
  %v2714 = vpop.f32.mrf.mxu0
  %v2715 = vadd.f32 %v2600, %v2714
  %v2716 = vpop.f32.mrf.mxu0
  %2717 = vmatprep.mubr.bf16.mxu0 0
  %2718 = vmatmul.mubr.bf16.gmra.mxu0 %v2632
  %v2719 = vpop.f32.mrf.mxu0
  %v2720 = vadd.f32 %v2600, %v2719
  %v2721 = vpop.f32.mrf.mxu0
  %v2722 = vpop.f32.mrf.mxu0
  %v2723 = vadd.f32 %v2600, %v2722
  %v2724 = vpop.f32.mrf.mxu0
  %2725 = vmatprep.mubr.bf16.mxu0 0
  %2726 = vmatmul.mubr.bf16.gmra.mxu0 %v2635
  %v2727 = vpop.f32.mrf.mxu0
  %v2728 = vadd.f32 %v2600, %v2727
  %v2729 = vpop.f32.mrf.mxu0
  %v2730 = vpop.f32.mrf.mxu0
  %v2731 = vadd.f32 %v2600, %v2730
  %v2732 = vpop.f32.mrf.mxu0
  %2733 = vdwg.mxu0
  %v2734 = vadd.f32 %v27, %v2672
  %v2735 = vadd.f32 %v28, %v2675
  %v2736 = vadd.f32 %v29, %v2680
  %v2737 = vadd.f32 %v30, %v2683
  %v2738 = vadd.f32 %v31, %v2688
  %v2739 = vadd.f32 %v32, %v2691
  %v2740 = vadd.f32 %v33, %v2696
  %v2741 = vadd.f32 %v34, %v2699
  %v2742 = vadd.f32 %v35, %v2704
  %v2743 = vadd.f32 %v36, %v2707
  %v2744 = vadd.f32 %v37, %v2712
  %v2745 = vadd.f32 %v38, %v2715
  %v2746 = vadd.f32 %v39, %v2720
  %v2747 = vadd.f32 %v40, %v2723
  %v2748 = vadd.f32 %v41, %v2728
  %v2749 = vadd.f32 %v42, %v2731
  %v2750 = vsel %vm44, %v2734, 0.0
  %2751 = vadd.xlane.f32.xlu0 %v2750
  %v2752 = vpop.xlane.xlu0 %2751
  %v2753 = vsel %vm44, %v2735, 0.0
  %2754 = vadd.xlane.f32.xlu0 %v2753
  %v2755 = vpop.xlane.xlu0 %2754
  %v2756 = vsel %vm44, %v2736, 0.0
  %2757 = vadd.xlane.f32.xlu0 %v2756
  %v2758 = vpop.xlane.xlu0 %2757
  %v2759 = vsel %vm44, %v2737, 0.0
  %2760 = vadd.xlane.f32.xlu0 %v2759
  %v2761 = vpop.xlane.xlu0 %2760
  %v2762 = vsel %vm44, %v2738, 0.0
  %2763 = vadd.xlane.f32.xlu0 %v2762
  %v2764 = vpop.xlane.xlu0 %2763
  %v2765 = vsel %vm44, %v2739, 0.0
  %2766 = vadd.xlane.f32.xlu0 %v2765
  %v2767 = vpop.xlane.xlu0 %2766
  %v2768 = vsel %vm44, %v2740, 0.0
  %2769 = vadd.xlane.f32.xlu0 %v2768
  %v2770 = vpop.xlane.xlu0 %2769
  %v2771 = vsel %vm44, %v2741, 0.0
  %2772 = vadd.xlane.f32.xlu0 %v2771
  %v2773 = vpop.xlane.xlu0 %2772
  %v2774 = vsel %vm44, %v2742, 0.0
  %2775 = vadd.xlane.f32.xlu0 %v2774
  %v2776 = vpop.xlane.xlu0 %2775
  %v2777 = vsel %vm44, %v2743, 0.0
  %2778 = vadd.xlane.f32.xlu0 %v2777
  %v2779 = vpop.xlane.xlu0 %2778
  %v2780 = vsel %vm44, %v2744, 0.0
  %2781 = vadd.xlane.f32.xlu0 %v2780
  %v2782 = vpop.xlane.xlu0 %2781
  %v2783 = vsel %vm44, %v2745, 0.0
  %2784 = vadd.xlane.f32.xlu0 %v2783
  %v2785 = vpop.xlane.xlu0 %2784
  %v2786 = vsel %vm44, %v2746, 0.0
  %2787 = vadd.xlane.f32.xlu0 %v2786
  %v2788 = vpop.xlane.xlu0 %2787
  %v2789 = vsel %vm44, %v2747, 0.0
  %2790 = vadd.xlane.f32.xlu0 %v2789
  %v2791 = vpop.xlane.xlu0 %2790
  %v2792 = vsel %vm44, %v2748, 0.0
  %2793 = vadd.xlane.f32.xlu0 %v2792
  %v2794 = vpop.xlane.xlu0 %2793
  %v2795 = vsel %vm44, %v2749, 0.0
  %2796 = vadd.xlane.f32.xlu0 %v2795
  %v2797 = vpop.xlane.xlu0 %2796
  %v2798 = vmul.f32 %v2752, %v93
  %v2799 = vmul.f32 %v2755, %v93
  %v2800 = vmul.f32 %v2758, %v93
  %v2801 = vmul.f32 %v2761, %v93
  %v2802 = vmul.f32 %v2764, %v93
  %v2803 = vmul.f32 %v2767, %v93
  %v2804 = vmul.f32 %v2770, %v93
  %v2805 = vmul.f32 %v2773, %v93
  %v2806 = vmul.f32 %v2776, %v93
  %v2807 = vmul.f32 %v2779, %v93
  %v2808 = vmul.f32 %v2782, %v93
  %v2809 = vmul.f32 %v2785, %v93
  %v2810 = vmul.f32 %v2788, %v93
  %v2811 = vmul.f32 %v2791, %v93
  %v2812 = vmul.f32 %v2794, %v93
  %v2813 = vmul.f32 %v2797, %v93
  %v2814 = vmul.f32 %v2734, %v2734
  %v2815 = vmul.f32 %v2735, %v2735
  %v2816 = vmul.f32 %v2736, %v2736
  %v2817 = vmul.f32 %v2737, %v2737
  %v2818 = vmul.f32 %v2738, %v2738
  %v2819 = vmul.f32 %v2739, %v2739
  %v2820 = vmul.f32 %v2740, %v2740
  %v2821 = vmul.f32 %v2741, %v2741
  %v2822 = vmul.f32 %v2742, %v2742
  %v2823 = vmul.f32 %v2743, %v2743
  %v2824 = vmul.f32 %v2744, %v2744
  %v2825 = vmul.f32 %v2745, %v2745
  %v2826 = vmul.f32 %v2746, %v2746
  %v2827 = vmul.f32 %v2747, %v2747
  %v2828 = vmul.f32 %v2748, %v2748
  %v2829 = vmul.f32 %v2749, %v2749
  %v2830 = vsel %vm44, %v2814, 0.0
  %2831 = vadd.xlane.f32.xlu0 %v2830
  %v2832 = vpop.xlane.xlu0 %2831
  %v2833 = vsel %vm44, %v2815, 0.0
  %2834 = vadd.xlane.f32.xlu0 %v2833
  %v2835 = vpop.xlane.xlu0 %2834
  %v2836 = vsel %vm44, %v2816, 0.0
  %2837 = vadd.xlane.f32.xlu0 %v2836
  %v2838 = vpop.xlane.xlu0 %2837
  %v2839 = vsel %vm44, %v2817, 0.0
  %2840 = vadd.xlane.f32.xlu0 %v2839
  %v2841 = vpop.xlane.xlu0 %2840
  %v2842 = vsel %vm44, %v2818, 0.0
  %2843 = vadd.xlane.f32.xlu0 %v2842
  %v2844 = vpop.xlane.xlu0 %2843
  %v2845 = vsel %vm44, %v2819, 0.0
  %2846 = vadd.xlane.f32.xlu0 %v2845
  %v2847 = vpop.xlane.xlu0 %2846
  %v2848 = vsel %vm44, %v2820, 0.0
  %2849 = vadd.xlane.f32.xlu0 %v2848
  %v2850 = vpop.xlane.xlu0 %2849
  %v2851 = vsel %vm44, %v2821, 0.0
  %2852 = vadd.xlane.f32.xlu0 %v2851
  %v2853 = vpop.xlane.xlu0 %2852
  %v2854 = vsel %vm44, %v2822, 0.0
  %2855 = vadd.xlane.f32.xlu0 %v2854
  %v2856 = vpop.xlane.xlu0 %2855
  %v2857 = vsel %vm44, %v2823, 0.0
  %2858 = vadd.xlane.f32.xlu0 %v2857
  %v2859 = vpop.xlane.xlu0 %2858
  %v2860 = vsel %vm44, %v2824, 0.0
  %2861 = vadd.xlane.f32.xlu0 %v2860
  %v2862 = vpop.xlane.xlu0 %2861
  %v2863 = vsel %vm44, %v2825, 0.0
  %2864 = vadd.xlane.f32.xlu0 %v2863
  %v2865 = vpop.xlane.xlu0 %2864
  %v2866 = vsel %vm44, %v2826, 0.0
  %2867 = vadd.xlane.f32.xlu0 %v2866
  %v2868 = vpop.xlane.xlu0 %2867
  %v2869 = vsel %vm44, %v2827, 0.0
  %2870 = vadd.xlane.f32.xlu0 %v2869
  %v2871 = vpop.xlane.xlu0 %2870
  %v2872 = vsel %vm44, %v2828, 0.0
  %2873 = vadd.xlane.f32.xlu0 %v2872
  %v2874 = vpop.xlane.xlu0 %2873
  %v2875 = vsel %vm44, %v2829, 0.0
  %2876 = vadd.xlane.f32.xlu0 %v2875
  %v2877 = vpop.xlane.xlu0 %2876
  %v2878 = vmul.f32 %v2832, %v93
  %v2879 = vmul.f32 %v2835, %v93
  %v2880 = vmul.f32 %v2838, %v93
  %v2881 = vmul.f32 %v2841, %v93
  %v2882 = vmul.f32 %v2844, %v93
  %v2883 = vmul.f32 %v2847, %v93
  %v2884 = vmul.f32 %v2850, %v93
  %v2885 = vmul.f32 %v2853, %v93
  %v2886 = vmul.f32 %v2856, %v93
  %v2887 = vmul.f32 %v2859, %v93
  %v2888 = vmul.f32 %v2862, %v93
  %v2889 = vmul.f32 %v2865, %v93
  %v2890 = vmul.f32 %v2868, %v93
  %v2891 = vmul.f32 %v2871, %v93
  %v2892 = vmul.f32 %v2874, %v93
  %v2893 = vmul.f32 %v2877, %v93
  %v2894 = vmul.f32 %v2798, %v2798
  %v2895 = vmul.f32 %v2799, %v2799
  %v2896 = vmul.f32 %v2800, %v2800
  %v2897 = vmul.f32 %v2801, %v2801
  %v2898 = vmul.f32 %v2802, %v2802
  %v2899 = vmul.f32 %v2803, %v2803
  %v2900 = vmul.f32 %v2804, %v2804
  %v2901 = vmul.f32 %v2805, %v2805
  %v2902 = vmul.f32 %v2806, %v2806
  %v2903 = vmul.f32 %v2807, %v2807
  %v2904 = vmul.f32 %v2808, %v2808
  %v2905 = vmul.f32 %v2809, %v2809
  %v2906 = vmul.f32 %v2810, %v2810
  %v2907 = vmul.f32 %v2811, %v2811
  %v2908 = vmul.f32 %v2812, %v2812
  %v2909 = vmul.f32 %v2813, %v2813
  %v2910 = vsub.f32 %v2878, %v2894
  %v2911 = vsub.f32 %v2879, %v2895
  %v2912 = vsub.f32 %v2880, %v2896
  %v2913 = vsub.f32 %v2881, %v2897
  %v2914 = vsub.f32 %v2882, %v2898
  %v2915 = vsub.f32 %v2883, %v2899
  %v2916 = vsub.f32 %v2884, %v2900
  %v2917 = vsub.f32 %v2885, %v2901
  %v2918 = vsub.f32 %v2886, %v2902
  %v2919 = vsub.f32 %v2887, %v2903
  %v2920 = vsub.f32 %v2888, %v2904
  %v2921 = vsub.f32 %v2889, %v2905
  %v2922 = vsub.f32 %v2890, %v2906
  %v2923 = vsub.f32 %v2891, %v2907
  %v2924 = vsub.f32 %v2892, %v2908
  %v2925 = vsub.f32 %v2893, %v2909
  %v2926 = vsub.f32 %v2734, %v2798
  %v2927 = vsub.f32 %v2735, %v2799
  %v2928 = vsub.f32 %v2736, %v2800
  %v2929 = vsub.f32 %v2737, %v2801
  %v2930 = vsub.f32 %v2738, %v2802
  %v2931 = vsub.f32 %v2739, %v2803
  %v2932 = vsub.f32 %v2740, %v2804
  %v2933 = vsub.f32 %v2741, %v2805
  %v2934 = vsub.f32 %v2742, %v2806
  %v2935 = vsub.f32 %v2743, %v2807
  %v2936 = vsub.f32 %v2744, %v2808
  %v2937 = vsub.f32 %v2745, %v2809
  %v2938 = vsub.f32 %v2746, %v2810
  %v2939 = vsub.f32 %v2747, %v2811
  %v2940 = vsub.f32 %v2748, %v2812
  %v2941 = vsub.f32 %v2749, %v2813
  %v2942 = vadd.f32 %v2910, 1e-05
  %v2943 = vadd.f32 %v2911, 1e-05
  %v2944 = vadd.f32 %v2912, 1e-05
  %v2945 = vadd.f32 %v2913, 1e-05
  %v2946 = vadd.f32 %v2914, 1e-05
  %v2947 = vadd.f32 %v2915, 1e-05
  %v2948 = vadd.f32 %v2916, 1e-05
  %v2949 = vadd.f32 %v2917, 1e-05
  %v2950 = vadd.f32 %v2918, 1e-05
  %v2951 = vadd.f32 %v2919, 1e-05
  %v2952 = vadd.f32 %v2920, 1e-05
  %v2953 = vadd.f32 %v2921, 1e-05
  %v2954 = vadd.f32 %v2922, 1e-05
  %v2955 = vadd.f32 %v2923, 1e-05
  %v2956 = vadd.f32 %v2924, 1e-05
  %v2957 = vadd.f32 %v2925, 1e-05
  %v2958 = vrsqrt.pop %v2942
  %v2959 = vrsqrt.pop %v2943
  %v2960 = vrsqrt.pop %v2944
  %v2961 = vrsqrt.pop %v2945
  %v2962 = vrsqrt.pop %v2946
  %v2963 = vrsqrt.pop %v2947
  %v2964 = vrsqrt.pop %v2948
  %v2965 = vrsqrt.pop %v2949
  %v2966 = vrsqrt.pop %v2950
  %v2967 = vrsqrt.pop %v2951
  %v2968 = vrsqrt.pop %v2952
  %v2969 = vrsqrt.pop %v2953
  %v2970 = vrsqrt.pop %v2954
  %v2971 = vrsqrt.pop %v2955
  %v2972 = vrsqrt.pop %v2956
  %v2973 = vrsqrt.pop %v2957
  %v2974 = vmul.f32 %v2926, %v2958
  %v2975 = vmul.f32 %v2927, %v2959
  %v2976 = vmul.f32 %v2928, %v2960
  %v2977 = vmul.f32 %v2929, %v2961
  %v2978 = vmul.f32 %v2930, %v2962
  %v2979 = vmul.f32 %v2931, %v2963
  %v2980 = vmul.f32 %v2932, %v2964
  %v2981 = vmul.f32 %v2933, %v2965
  %v2982 = vmul.f32 %v2934, %v2966
  %v2983 = vmul.f32 %v2935, %v2967
  %v2984 = vmul.f32 %v2936, %v2968
  %v2985 = vmul.f32 %v2937, %v2969
  %v2986 = vmul.f32 %v2938, %v2970
  %v2987 = vmul.f32 %v2939, %v2971
  %v2988 = vmul.f32 %v2940, %v2972
  %v2989 = vmul.f32 %v2941, %v2973
  %v2990 = vlaneseq
  %v2991 = vshrl.u32 %v2990, 7
  %v2992 = vsub.s32 2, %v2991
  %v2993 = vrot.slane %v43, %v2992
  %v2994 = vmul.f32 %v2974, %v2993
  %v2995 = vmul.f32 %v2975, %v2993
  %v2996 = vmul.f32 %v2976, %v2993
  %v2997 = vmul.f32 %v2977, %v2993
  %v2998 = vmul.f32 %v2978, %v2993
  %v2999 = vmul.f32 %v2979, %v2993
  %v3000 = vmul.f32 %v2980, %v2993
  %v3001 = vmul.f32 %v2981, %v2993
  %v3002 = vmul.f32 %v2982, %v2993
  %v3003 = vmul.f32 %v2983, %v2993
  %v3004 = vmul.f32 %v2984, %v2993
  %v3005 = vmul.f32 %v2985, %v2993
  %v3006 = vmul.f32 %v2986, %v2993
  %v3007 = vmul.f32 %v2987, %v2993
  %v3008 = vmul.f32 %v2988, %v2993
  %v3009 = vmul.f32 %v2989, %v2993
  %v3010 = vlaneseq
  %v3011 = vshrl.u32 %v3010, 7
  %v3012 = vsub.s32 3, %v3011
  %v3013 = vrot.slane %v43, %v3012
  %v3014 = vadd.f32 %v2994, %v3013
  %v3015 = vadd.f32 %v2995, %v3013
  %v3016 = vadd.f32 %v2996, %v3013
  %v3017 = vadd.f32 %v2997, %v3013
  %v3018 = vadd.f32 %v2998, %v3013
  %v3019 = vadd.f32 %v2999, %v3013
  %v3020 = vadd.f32 %v3000, %v3013
  %v3021 = vadd.f32 %v3001, %v3013
  %v3022 = vadd.f32 %v3002, %v3013
  %v3023 = vadd.f32 %v3003, %v3013
  %v3024 = vadd.f32 %v3004, %v3013
  %v3025 = vadd.f32 %v3005, %v3013
  %v3026 = vadd.f32 %v3006, %v3013
  %v3027 = vadd.f32 %v3007, %v3013
  %v3028 = vadd.f32 %v3008, %v3013
  %v3029 = vadd.f32 %v3009, %v3013
  %v3030 = vpack.c.bf16 %v3015, %v3014
  %v3031 = vpack.c.bf16 %v3017, %v3016
  %v3032 = vpack.c.bf16 %v3019, %v3018
  %v3033 = vpack.c.bf16 %v3021, %v3020
  %v3034 = vpack.c.bf16 %v3023, %v3022
  %v3035 = vpack.c.bf16 %v3025, %v3024
  %v3036 = vpack.c.bf16 %v3027, %v3026
  %v3037 = vpack.c.bf16 %v3029, %v3028
  %v3038 = vld [vmem:[%s5] sm:$0xf]
  %v3039 = vld [vmem:[%s5 + $0x4] sm:$0xf]
  %v3040 = vld [vmem:[%s5 + $0x8] sm:$0xf]
  %v3041 = vld [vmem:[%s5 + $0xc] sm:$0xf]
  %v3042 = vlaneseq
  %v3043 = vshrl.u32 %v3042, 7
  %v3044 = vsub.s32 6, %v3043
  %v3045 = vrot.slane %v43, %v3044
  %v3050 = vunpack.c.l.b16 %v3038
  %v3051 = vunpack.c.l.b16 %v3039
  %v3052 = vunpack.c.l.b16 %v3040
  %v3053 = vunpack.c.l.b16 %v3041
  %v3054 = vpack.c.b16 %v3051, %v3050
  %v3055 = vpack.c.b16 %v3053, %v3052
  %v3059 = vsel %vm44, %v3030, 0
  %v3062 = vsel %vm44, %v3031, 0
  %v3065 = vsel %vm44, %v3032, 0
  %v3068 = vsel %vm44, %v3033, 0
  %v3071 = vsel %vm44, %v3034, 0
  %v3074 = vsel %vm44, %v3035, 0
  %v3077 = vsel %vm44, %v3036, 0
  %v3080 = vsel %vm44, %v3037, 0
  %3082 = vmatprep.subr.bf16.mxu0 0
  %3083 = vmatpush1.bf16.msra.mxu0 0
  %3084 = vmatprep.subr.bf16.mxu0 0
  %3085 = vmatpush1.bf16.msra.mxu0 0
  %3086 = vmatprep.subr.bf16.mxu0 0
  %3087 = vmatpush1.bf16.msra.mxu0 0
  %3088 = vmatprep.subr.bf16.mxu0 0
  %3089 = vmatpush1.bf16.msra.mxu0 0
  %3090 = vmatprep.subr.bf16.mxu0 0
  %3091 = vmatpush1.bf16.msra.mxu0 0
  %3092 = vmatprep.subr.bf16.mxu0 0
  %3093 = vmatpush1.bf16.msra.mxu0 0
  %3094 = vmatprep.subr.bf16.mxu0 0
  %3095 = vmatpush1.bf16.msra.mxu0 %v3055
  %3096 = vmatprep.subr.bf16.mxu0 0
  %3097 = vmatpush1.bf16.msra.mxu0 %v3054
  %3098 = vmatprep.subr.bf16.mxu0 0
  %3099 = vmatpush2.bf16.msra.mxu0 0
  %3100 = vmatprep.subr.bf16.mxu0 0
  %3101 = vmatpush2.bf16.msra.mxu0 0
  %3102 = vmatprep.subr.bf16.mxu0 0
  %3103 = vmatpush2.bf16.msra.mxu0 0
  %3104 = vmatprep.subr.bf16.mxu0 0
  %3105 = vmatpush2.bf16.msra.mxu0 0
  %3106 = vmatprep.subr.bf16.mxu0 0
  %3107 = vmatpush2.bf16.msra.mxu0 0
  %3108 = vmatprep.subr.bf16.mxu0 0
  %3109 = vmatpush2.bf16.msra.mxu0 0
  %3110 = vmatprep.subr.bf16.mxu0 0
  %3111 = vmatpush2.bf16.msra.mxu0 0
  %3112 = vmatprep.subr.bf16.mxu0 0
  %3113 = vmatpush2.bf16.msra.mxu0 0
  %3114 = vmatprep.mubr.bf16.mxu0 0
  %3115 = vmatmul.mubr.bf16.gmra.mxu0 %v3059
  %v3116 = vpop.f32.mrf.mxu0
  %v3117 = vadd.f32 %v3045, %v3116
  %v3118 = vpop.f32.mrf.mxu0
  %v3119 = vpop.f32.mrf.mxu0
  %v3120 = vadd.f32 %v3045, %v3119
  %v3121 = vpop.f32.mrf.mxu0
  %3122 = vmatprep.mubr.bf16.mxu0 0
  %3123 = vmatmul.mubr.bf16.gmra.mxu0 %v3062
  %v3124 = vpop.f32.mrf.mxu0
  %v3125 = vadd.f32 %v3045, %v3124
  %v3126 = vpop.f32.mrf.mxu0
  %v3127 = vpop.f32.mrf.mxu0
  %v3128 = vadd.f32 %v3045, %v3127
  %v3129 = vpop.f32.mrf.mxu0
  %3130 = vmatprep.mubr.bf16.mxu0 0
  %3131 = vmatmul.mubr.bf16.gmra.mxu0 %v3065
  %v3132 = vpop.f32.mrf.mxu0
  %v3133 = vadd.f32 %v3045, %v3132
  %v3134 = vpop.f32.mrf.mxu0
  %v3135 = vpop.f32.mrf.mxu0
  %v3136 = vadd.f32 %v3045, %v3135
  %v3137 = vpop.f32.mrf.mxu0
  %3138 = vmatprep.mubr.bf16.mxu0 0
  %3139 = vmatmul.mubr.bf16.gmra.mxu0 %v3068
  %v3140 = vpop.f32.mrf.mxu0
  %v3141 = vadd.f32 %v3045, %v3140
  %v3142 = vpop.f32.mrf.mxu0
  %v3143 = vpop.f32.mrf.mxu0
  %v3144 = vadd.f32 %v3045, %v3143
  %v3145 = vpop.f32.mrf.mxu0
  %3146 = vmatprep.mubr.bf16.mxu0 0
  %3147 = vmatmul.mubr.bf16.gmra.mxu0 %v3071
  %v3148 = vpop.f32.mrf.mxu0
  %v3149 = vadd.f32 %v3045, %v3148
  %v3150 = vpop.f32.mrf.mxu0
  %v3151 = vpop.f32.mrf.mxu0
  %v3152 = vadd.f32 %v3045, %v3151
  %v3153 = vpop.f32.mrf.mxu0
  %3154 = vmatprep.mubr.bf16.mxu0 0
  %3155 = vmatmul.mubr.bf16.gmra.mxu0 %v3074
  %v3156 = vpop.f32.mrf.mxu0
  %v3157 = vadd.f32 %v3045, %v3156
  %v3158 = vpop.f32.mrf.mxu0
  %v3159 = vpop.f32.mrf.mxu0
  %v3160 = vadd.f32 %v3045, %v3159
  %v3161 = vpop.f32.mrf.mxu0
  %3162 = vmatprep.mubr.bf16.mxu0 0
  %3163 = vmatmul.mubr.bf16.gmra.mxu0 %v3077
  %v3164 = vpop.f32.mrf.mxu0
  %v3165 = vadd.f32 %v3045, %v3164
  %v3166 = vpop.f32.mrf.mxu0
  %v3167 = vpop.f32.mrf.mxu0
  %v3168 = vadd.f32 %v3045, %v3167
  %v3169 = vpop.f32.mrf.mxu0
  %3170 = vmatprep.mubr.bf16.mxu0 0
  %3171 = vmatmul.mubr.bf16.gmra.mxu0 %v3080
  %v3172 = vpop.f32.mrf.mxu0
  %v3173 = vadd.f32 %v3045, %v3172
  %v3174 = vpop.f32.mrf.mxu0
  %v3175 = vpop.f32.mrf.mxu0
  %v3176 = vadd.f32 %v3045, %v3175
  %v3177 = vpop.f32.mrf.mxu0
  %3178 = vdwg.mxu0
  %v3179 = vmul.f32 %v3117, 0.5
  %v3180 = vmul.f32 %v3120, 0.5
  %v3181 = vmul.f32 %v3125, 0.5
  %v3182 = vmul.f32 %v3128, 0.5
  %v3183 = vmul.f32 %v3133, 0.5
  %v3184 = vmul.f32 %v3136, 0.5
  %v3185 = vmul.f32 %v3141, 0.5
  %v3186 = vmul.f32 %v3144, 0.5
  %v3187 = vmul.f32 %v3149, 0.5
  %v3188 = vmul.f32 %v3152, 0.5
  %v3189 = vmul.f32 %v3157, 0.5
  %v3190 = vmul.f32 %v3160, 0.5
  %v3191 = vmul.f32 %v3165, 0.5
  %v3192 = vmul.f32 %v3168, 0.5
  %v3193 = vmul.f32 %v3173, 0.5
  %v3194 = vmul.f32 %v3176, 0.5
  %v3195 = vmul.f32 %v3117, 0.044715
  %v3196 = vmul.f32 %v3120, 0.044715
  %v3197 = vmul.f32 %v3125, 0.044715
  %v3198 = vmul.f32 %v3128, 0.044715
  %v3199 = vmul.f32 %v3133, 0.044715
  %v3200 = vmul.f32 %v3136, 0.044715
  %v3201 = vmul.f32 %v3141, 0.044715
  %v3202 = vmul.f32 %v3144, 0.044715
  %v3203 = vmul.f32 %v3149, 0.044715
  %v3204 = vmul.f32 %v3152, 0.044715
  %v3205 = vmul.f32 %v3157, 0.044715
  %v3206 = vmul.f32 %v3160, 0.044715
  %v3207 = vmul.f32 %v3165, 0.044715
  %v3208 = vmul.f32 %v3168, 0.044715
  %v3209 = vmul.f32 %v3173, 0.044715
  %v3210 = vmul.f32 %v3176, 0.044715
  %v3211 = vmul.f32 %v3195, %v3117
  %v3212 = vmul.f32 %v3196, %v3120
  %v3213 = vmul.f32 %v3197, %v3125
  %v3214 = vmul.f32 %v3198, %v3128
  %v3215 = vmul.f32 %v3199, %v3133
  %v3216 = vmul.f32 %v3200, %v3136
  %v3217 = vmul.f32 %v3201, %v3141
  %v3218 = vmul.f32 %v3202, %v3144
  %v3219 = vmul.f32 %v3203, %v3149
  %v3220 = vmul.f32 %v3204, %v3152
  %v3221 = vmul.f32 %v3205, %v3157
  %v3222 = vmul.f32 %v3206, %v3160
  %v3223 = vmul.f32 %v3207, %v3165
  %v3224 = vmul.f32 %v3208, %v3168
  %v3225 = vmul.f32 %v3209, %v3173
  %v3226 = vmul.f32 %v3210, %v3176
  %v3227 = vmul.f32 %v3211, %v3117
  %v3228 = vmul.f32 %v3212, %v3120
  %v3229 = vmul.f32 %v3213, %v3125
  %v3230 = vmul.f32 %v3214, %v3128
  %v3231 = vmul.f32 %v3215, %v3133
  %v3232 = vmul.f32 %v3216, %v3136
  %v3233 = vmul.f32 %v3217, %v3141
  %v3234 = vmul.f32 %v3218, %v3144
  %v3235 = vmul.f32 %v3219, %v3149
  %v3236 = vmul.f32 %v3220, %v3152
  %v3237 = vmul.f32 %v3221, %v3157
  %v3238 = vmul.f32 %v3222, %v3160
  %v3239 = vmul.f32 %v3223, %v3165
  %v3240 = vmul.f32 %v3224, %v3168
  %v3241 = vmul.f32 %v3225, %v3173
  %v3242 = vmul.f32 %v3226, %v3176
  %v3243 = vadd.f32 %v3117, %v3227
  %v3244 = vadd.f32 %v3120, %v3228
  %v3245 = vadd.f32 %v3125, %v3229
  %v3246 = vadd.f32 %v3128, %v3230
  %v3247 = vadd.f32 %v3133, %v3231
  %v3248 = vadd.f32 %v3136, %v3232
  %v3249 = vadd.f32 %v3141, %v3233
  %v3250 = vadd.f32 %v3144, %v3234
  %v3251 = vadd.f32 %v3149, %v3235
  %v3252 = vadd.f32 %v3152, %v3236
  %v3253 = vadd.f32 %v3157, %v3237
  %v3254 = vadd.f32 %v3160, %v3238
  %v3255 = vadd.f32 %v3165, %v3239
  %v3256 = vadd.f32 %v3168, %v3240
  %v3257 = vadd.f32 %v3173, %v3241
  %v3258 = vadd.f32 %v3176, %v3242
  %v3259 = vmul.f32 %v3243, 0.7978846
  %v3260 = vmul.f32 %v3244, 0.7978846
  %v3261 = vmul.f32 %v3245, 0.7978846
  %v3262 = vmul.f32 %v3246, 0.7978846
  %v3263 = vmul.f32 %v3247, 0.7978846
  %v3264 = vmul.f32 %v3248, 0.7978846
  %v3265 = vmul.f32 %v3249, 0.7978846
  %v3266 = vmul.f32 %v3250, 0.7978846
  %v3267 = vmul.f32 %v3251, 0.7978846
  %v3268 = vmul.f32 %v3252, 0.7978846
  %v3269 = vmul.f32 %v3253, 0.7978846
  %v3270 = vmul.f32 %v3254, 0.7978846
  %v3271 = vmul.f32 %v3255, 0.7978846
  %v3272 = vmul.f32 %v3256, 0.7978846
  %v3273 = vmul.f32 %v3257, 0.7978846
  %v3274 = vmul.f32 %v3258, 0.7978846
  %v3275 = vtanh.pop %v3259
  %v3276 = vtanh.pop %v3260
  %v3277 = vtanh.pop %v3261
  %v3278 = vtanh.pop %v3262
  %v3279 = vtanh.pop %v3263
  %v3280 = vtanh.pop %v3264
  %v3281 = vtanh.pop %v3265
  %v3282 = vtanh.pop %v3266
  %v3283 = vtanh.pop %v3267
  %v3284 = vtanh.pop %v3268
  %v3285 = vtanh.pop %v3269
  %v3286 = vtanh.pop %v3270
  %v3287 = vtanh.pop %v3271
  %v3288 = vtanh.pop %v3272
  %v3289 = vtanh.pop %v3273
  %v3290 = vtanh.pop %v3274
  %v3291 = vadd.f32 %v3275, 1.0
  %v3292 = vadd.f32 %v3276, 1.0
  %v3293 = vadd.f32 %v3277, 1.0
  %v3294 = vadd.f32 %v3278, 1.0
  %v3295 = vadd.f32 %v3279, 1.0
  %v3296 = vadd.f32 %v3280, 1.0
  %v3297 = vadd.f32 %v3281, 1.0
  %v3298 = vadd.f32 %v3282, 1.0
  %v3299 = vadd.f32 %v3283, 1.0
  %v3300 = vadd.f32 %v3284, 1.0
  %v3301 = vadd.f32 %v3285, 1.0
  %v3302 = vadd.f32 %v3286, 1.0
  %v3303 = vadd.f32 %v3287, 1.0
  %v3304 = vadd.f32 %v3288, 1.0
  %v3305 = vadd.f32 %v3289, 1.0
  %v3306 = vadd.f32 %v3290, 1.0
  %v3307 = vmul.f32 %v3179, %v3291
  %v3308 = vmul.f32 %v3180, %v3292
  %v3309 = vmul.f32 %v3181, %v3293
  %v3310 = vmul.f32 %v3182, %v3294
  %v3311 = vmul.f32 %v3183, %v3295
  %v3312 = vmul.f32 %v3184, %v3296
  %v3313 = vmul.f32 %v3185, %v3297
  %v3314 = vmul.f32 %v3186, %v3298
  %v3315 = vmul.f32 %v3187, %v3299
  %v3316 = vmul.f32 %v3188, %v3300
  %v3317 = vmul.f32 %v3189, %v3301
  %v3318 = vmul.f32 %v3190, %v3302
  %v3319 = vmul.f32 %v3191, %v3303
  %v3320 = vmul.f32 %v3192, %v3304
  %v3321 = vmul.f32 %v3193, %v3305
  %v3322 = vmul.f32 %v3194, %v3306
  %v3323 = vpack.c.bf16 %v3308, %v3307
  %v3324 = vpack.c.bf16 %v3310, %v3309
  %v3325 = vpack.c.bf16 %v3312, %v3311
  %v3326 = vpack.c.bf16 %v3314, %v3313
  %v3327 = vpack.c.bf16 %v3316, %v3315
  %v3328 = vpack.c.bf16 %v3318, %v3317
  %v3329 = vpack.c.bf16 %v3320, %v3319
  %v3330 = vpack.c.bf16 %v3322, %v3321
  %v3331 = vld [vmem:[%s6] sm:$0xf]
  %v3332 = vld [vmem:[%s6 + $0x4] sm:$0xf]
  %v3333 = vld [vmem:[%s6 + $0x8] sm:$0xf]
  %v3334 = vld [vmem:[%s6 + $0xc] sm:$0xf]
  %v3335 = vld [vmem:[%s6 + $0x10] sm:$0xf]
  %v3336 = vld [vmem:[%s6 + $0x14] sm:$0xf]
  %v3337 = vld [vmem:[%s6 + $0x18] sm:$0xf]
  %v3338 = vld [vmem:[%s6 + $0x1c] sm:$0xf]
  %v3339 = vld [vmem:[%s6 + $0x20] sm:$0xf]
  %v3340 = vld [vmem:[%s6 + $0x24] sm:$0xf]
  %v3341 = vld [vmem:[%s6 + $0x28] sm:$0xf]
  %v3342 = vld [vmem:[%s6 + $0x2c] sm:$0xf]
  %v3343 = vld [vmem:[%s6 + $0x30] sm:$0xf]
  %v3344 = vld [vmem:[%s6 + $0x34] sm:$0xf]
  %v3345 = vld [vmem:[%s6 + $0x38] sm:$0xf]
  %v3346 = vld [vmem:[%s6 + $0x3c] sm:$0xf]
  %v3347 = vlaneseq
  %v3348 = vshrl.u32 %v3347, 7
  %v3349 = vsub.s32 5, %v3348
  %v3350 = vrot.slane %v43, %v3349
  %v3367 = vunpack.c.l.b16 %v3331
  %v3368 = vunpack.c.l.b16 %v3332
  %v3369 = vunpack.c.l.b16 %v3333
  %v3370 = vunpack.c.l.b16 %v3334
  %v3371 = vunpack.c.l.b16 %v3335
  %v3372 = vunpack.c.l.b16 %v3336
  %v3373 = vunpack.c.l.b16 %v3337
  %v3374 = vunpack.c.l.b16 %v3338
  %v3375 = vunpack.c.l.b16 %v3339
  %v3376 = vunpack.c.l.b16 %v3340
  %v3377 = vunpack.c.l.b16 %v3341
  %v3378 = vunpack.c.l.b16 %v3342
  %v3379 = vunpack.c.l.b16 %v3343
  %v3380 = vunpack.c.l.b16 %v3344
  %v3381 = vunpack.c.l.b16 %v3345
  %v3382 = vunpack.c.l.b16 %v3346
  %v3383 = vpack.c.b16 %v3368, %v3367
  %v3384 = vpack.c.b16 %v3370, %v3369
  %v3385 = vpack.c.b16 %v3372, %v3371
  %v3386 = vpack.c.b16 %v3374, %v3373
  %v3387 = vpack.c.b16 %v3376, %v3375
  %v3388 = vpack.c.b16 %v3378, %v3377
  %v3389 = vpack.c.b16 %v3380, %v3379
  %v3390 = vpack.c.b16 %v3382, %v3381
  %3399 = vmatprep.subr.bf16.mxu0 0
  %3400 = vmatpush1.bf16.msra.mxu0 %v3390
  %3401 = vmatprep.subr.bf16.mxu0 0
  %3402 = vmatpush1.bf16.msra.mxu0 %v3389
  %3403 = vmatprep.subr.bf16.mxu0 0
  %3404 = vmatpush1.bf16.msra.mxu0 %v3388
  %3405 = vmatprep.subr.bf16.mxu0 0
  %3406 = vmatpush1.bf16.msra.mxu0 %v3387
  %3407 = vmatprep.subr.bf16.mxu0 0
  %3408 = vmatpush1.bf16.msra.mxu0 %v3386
  %3409 = vmatprep.subr.bf16.mxu0 0
  %3410 = vmatpush1.bf16.msra.mxu0 %v3385
  %3411 = vmatprep.subr.bf16.mxu0 0
  %3412 = vmatpush1.bf16.msra.mxu0 %v3384
  %3413 = vmatprep.subr.bf16.mxu0 0
  %3414 = vmatpush1.bf16.msra.mxu0 %v3383
  %3415 = vmatprep.subr.bf16.mxu0 0
  %3416 = vmatpush2.bf16.msra.mxu0 0
  %3417 = vmatprep.subr.bf16.mxu0 0
  %3418 = vmatpush2.bf16.msra.mxu0 0
  %3419 = vmatprep.subr.bf16.mxu0 0
  %3420 = vmatpush2.bf16.msra.mxu0 0
  %3421 = vmatprep.subr.bf16.mxu0 0
  %3422 = vmatpush2.bf16.msra.mxu0 0
  %3423 = vmatprep.subr.bf16.mxu0 0
  %3424 = vmatpush2.bf16.msra.mxu0 0
  %3425 = vmatprep.subr.bf16.mxu0 0
  %3426 = vmatpush2.bf16.msra.mxu0 0
  %3427 = vmatprep.subr.bf16.mxu0 0
  %3428 = vmatpush2.bf16.msra.mxu0 0
  %3429 = vmatprep.subr.bf16.mxu0 0
  %3430 = vmatpush2.bf16.msra.mxu0 0
  %3431 = vmatprep.mubr.bf16.mxu0 0
  %3432 = vmatmul.mubr.bf16.gmra.mxu0 %v3323
  %v3433 = vpop.f32.mrf.mxu0
  %v3434 = vadd.f32 %v3350, %v3433
  %v3435 = vpop.f32.mrf.mxu0
  %v3436 = vpop.f32.mrf.mxu0
  %v3437 = vadd.f32 %v3350, %v3436
  %v3438 = vpop.f32.mrf.mxu0
  %3439 = vmatprep.mubr.bf16.mxu0 0
  %3440 = vmatmul.mubr.bf16.gmra.mxu0 %v3324
  %v3441 = vpop.f32.mrf.mxu0
  %v3442 = vadd.f32 %v3350, %v3441
  %v3443 = vpop.f32.mrf.mxu0
  %v3444 = vpop.f32.mrf.mxu0
  %v3445 = vadd.f32 %v3350, %v3444
  %v3446 = vpop.f32.mrf.mxu0
  %3447 = vmatprep.mubr.bf16.mxu0 0
  %3448 = vmatmul.mubr.bf16.gmra.mxu0 %v3325
  %v3449 = vpop.f32.mrf.mxu0
  %v3450 = vadd.f32 %v3350, %v3449
  %v3451 = vpop.f32.mrf.mxu0
  %v3452 = vpop.f32.mrf.mxu0
  %v3453 = vadd.f32 %v3350, %v3452
  %v3454 = vpop.f32.mrf.mxu0
  %3455 = vmatprep.mubr.bf16.mxu0 0
  %3456 = vmatmul.mubr.bf16.gmra.mxu0 %v3326
  %v3457 = vpop.f32.mrf.mxu0
  %v3458 = vadd.f32 %v3350, %v3457
  %v3459 = vpop.f32.mrf.mxu0
  %v3460 = vpop.f32.mrf.mxu0
  %v3461 = vadd.f32 %v3350, %v3460
  %v3462 = vpop.f32.mrf.mxu0
  %3463 = vmatprep.mubr.bf16.mxu0 0
  %3464 = vmatmul.mubr.bf16.gmra.mxu0 %v3327
  %v3465 = vpop.f32.mrf.mxu0
  %v3466 = vadd.f32 %v3350, %v3465
  %v3467 = vpop.f32.mrf.mxu0
  %v3468 = vpop.f32.mrf.mxu0
  %v3469 = vadd.f32 %v3350, %v3468
  %v3470 = vpop.f32.mrf.mxu0
  %3471 = vmatprep.mubr.bf16.mxu0 0
  %3472 = vmatmul.mubr.bf16.gmra.mxu0 %v3328
  %v3473 = vpop.f32.mrf.mxu0
  %v3474 = vadd.f32 %v3350, %v3473
  %v3475 = vpop.f32.mrf.mxu0
  %v3476 = vpop.f32.mrf.mxu0
  %v3477 = vadd.f32 %v3350, %v3476
  %v3478 = vpop.f32.mrf.mxu0
  %3479 = vmatprep.mubr.bf16.mxu0 0
  %3480 = vmatmul.mubr.bf16.gmra.mxu0 %v3329
  %v3481 = vpop.f32.mrf.mxu0
  %v3482 = vadd.f32 %v3350, %v3481
  %v3483 = vpop.f32.mrf.mxu0
  %v3484 = vpop.f32.mrf.mxu0
  %v3485 = vadd.f32 %v3350, %v3484
  %v3486 = vpop.f32.mrf.mxu0
  %3487 = vmatprep.mubr.bf16.mxu0 0
  %3488 = vmatmul.mubr.bf16.gmra.mxu0 %v3330
  %v3489 = vpop.f32.mrf.mxu0
  %v3490 = vadd.f32 %v3350, %v3489
  %v3491 = vpop.f32.mrf.mxu0
  %v3492 = vpop.f32.mrf.mxu0
  %v3493 = vadd.f32 %v3350, %v3492
  %v3494 = vpop.f32.mrf.mxu0
  %3495 = vdwg.mxu0
  %v3496 = vadd.f32 %v2734, %v3434
  %v3497 = vadd.f32 %v2735, %v3437
  %v3498 = vadd.f32 %v2736, %v3442
  %v3499 = vadd.f32 %v2737, %v3445
  %v3500 = vadd.f32 %v2738, %v3450
  %v3501 = vadd.f32 %v2739, %v3453
  %v3502 = vadd.f32 %v2740, %v3458
  %v3503 = vadd.f32 %v2741, %v3461
  %v3504 = vadd.f32 %v2742, %v3466
  %v3505 = vadd.f32 %v2743, %v3469
  %v3506 = vadd.f32 %v2744, %v3474
  %v3507 = vadd.f32 %v2745, %v3477
  %v3508 = vadd.f32 %v2746, %v3482
  %v3509 = vadd.f32 %v2747, %v3485
  %v3510 = vadd.f32 %v2748, %v3490
  %v3511 = vadd.f32 %v2749, %v3493
  %3512 = vst.msk [vmem:[%s7] sm:$0xff] %vm44, %v3496
  %3513 = vst.msk [vmem:[%s7 + $0x8] sm:$0xff] %vm44, %v3497
  %3514 = vst.msk [vmem:[%s7 + $0x10] sm:$0xff] %vm44, %v3498
  %3515 = vst.msk [vmem:[%s7 + $0x18] sm:$0xff] %vm44, %v3499
  %3516 = vst.msk [vmem:[%s7 + $0x20] sm:$0xff] %vm44, %v3500
  %3517 = vst.msk [vmem:[%s7 + $0x28] sm:$0xff] %vm44, %v3501
  %3518 = vst.msk [vmem:[%s7 + $0x30] sm:$0xff] %vm44, %v3502
  %3519 = vst.msk [vmem:[%s7 + $0x38] sm:$0xff] %vm44, %v3503
  %3520 = vst.msk [vmem:[%s7 + $0x40] sm:$0xff] %vm44, %v3504
  %3521 = vst.msk [vmem:[%s7 + $0x48] sm:$0xff] %vm44, %v3505
  %3522 = vst.msk [vmem:[%s7 + $0x50] sm:$0xff] %vm44, %v3506
  %3523 = vst.msk [vmem:[%s7 + $0x58] sm:$0xff] %vm44, %v3507
  %3524 = vst.msk [vmem:[%s7 + $0x60] sm:$0xff] %vm44, %v3508
  %3525 = vst.msk [vmem:[%s7 + $0x68] sm:$0xff] %vm44, %v3509
  %3526 = vst.msk [vmem:[%s7 + $0x70] sm:$0xff] %vm44, %v3510
  %3527 = vst.msk [vmem:[%s7 + $0x78] sm:$0xff] %vm44, %v3511
  // Predicated region
  $region30: #{swin_block_forward.1} parent=0 // pred_check
    _
  $region31: #{swin_block_forward.1} parent=0 // pred_check_branch
    %3529 = sbr.rel (0) target = $region33
  $region32: #{swin_block_forward.1} parent=0 // pred_region
    _
  $region33: #{swin_block_forward.1} parent=0 // pred_fallthru
    _
  // Predicated region
  $region34: #{swin_block_forward.1} parent=0 // pred_check
    _
  $region35: #{swin_block_forward.1} parent=0 // pred_check_branch
    %3531 = sbr.rel (0) target = $region37
  $region36: #{swin_block_forward.1} parent=0 // pred_region
    _
  $region37: #{swin_block_forward.1} parent=0 // pred_fallthru
    _

</llo_original>
